<compile_context>
chip_gen: v7x
topology: tpu7x:2x2x1
jax: 0.10.0
libtpu: 0.0.40
codegen_flags: <defaults>
</compile_context>

<pallas_src>
import functools

import jax
import jax.numpy as jnp
from jax import lax
from jax.experimental import pallas as pl
from jax.experimental.pallas import tpu as pltpu

_K_ALIGN = 16                       # bf16 sublane packing for the contraction dim
_VMEM_LIMIT = 32 * 1024 * 1024      # explicit scoped-VMEM limit (safe on v5e/v6e/v7x)
_TILE_VMEM_BUDGET = 8 * 1024 * 1024  # target footprint of the double-buffered tiles


def _rup(x, m):
    return (x + m - 1) // m * m


def _pick_tile(m, bytes_per_col, max_tile_m):
    """Pick an M tile: multiple of 128, under the VMEM budget, <= max_tile_m."""
    cap = _TILE_VMEM_BUDGET // max(int(bytes_per_col), 1)
    t = min(int(max_tile_m), max(cap, 128))
    t = max(128, (t // 128) * 128)
    if m <= t:
        return m, m, 1                       # single full-extent block, no padding
    mp = _rup(m, t)
    return mp, t, mp // t


def _cparams():
    return pltpu.CompilerParams(dimension_semantics=("parallel",),
                                vmem_limit_bytes=_VMEM_LIMIT)


def _patches_spec(kp, tm, nm):
    if nm >= 3:
        # deeper buffering to hide HBM latency when the pipeline is long enough
        return pl.BlockSpec((kp, tm), lambda i: (0, i), pipeline_mode=pl.Buffered(3))
    return pl.BlockSpec((kp, tm), lambda i: (0, i))


# ---------------------------------------------------------------------------
# Pallas kernels
# ---------------------------------------------------------------------------

def _gemm_stats_kernel(a_ref, b_ref, raw_ref, sum_ref, sq_ref):
    """One M-tile: raw = A @ B (bf16 out) + per-tile per-channel sum / sum-of-squares."""
    o = jnp.dot(a_ref[...], b_ref[...], preferred_element_type=jnp.float32)
    raw_ref[...] = o.astype(raw_ref.dtype)
    sum_ref[...] = jnp.sum(o, axis=1, keepdims=True)[None]
    sq_ref[...] = jnp.sum(o * o, axis=1, keepdims=True)[None]


def _affine_kernel(*refs, relu, has_res):
    """One M-tile: y = x * scale + shift, optional ReLU, optional residual add."""
    if has_res:
        x_ref, scale_ref, shift_ref, res_ref, o_ref = refs
    else:
        x_ref, scale_ref, shift_ref, o_ref = refs
    y = x_ref[...].astype(jnp.float32) * scale_ref[...] + shift_ref[...]
    if relu:
        y = jnp.maximum(y, 0.0)
    if has_res:
        y = y + res_ref[...].astype(jnp.float32)
    o_ref[...] = y.astype(o_ref.dtype)


def _gemm_epilogue_kernel(a_ref, b_ref, bias_ref, res_ref, o_ref):
    """One M-tile: final conv = A @ B + bias + learn-residual input (f32 out)."""
    o = jnp.dot(a_ref[...], b_ref[...], preferred_element_type=jnp.float32)
    o = o + bias_ref[...] + res_ref[...].astype(jnp.float32)
    o_ref[...] = o.astype(o_ref.dtype)


# ---------------------------------------------------------------------------
# Layer wrappers (tiled pallas_calls)
# ---------------------------------------------------------------------------

def gemm_bn_act(a, patches, gamma, beta, *, relu, residual=None, eps=1e-5,
                max_tile_m=4096, phase_groups=1, out_dtype=jnp.bfloat16):
    """conv-as-GEMM + training-mode BatchNorm + optional ReLU + optional residual.

    a:        [C, Kp] bf16 weight matrix (Kp padded to 16).
    patches:  [Kp, M] bf16 im2col matrix (padded rows are zero).
    gamma/beta: [C/phase_groups] BN parameters.
    residual: optional [C, M] tensor added after BN (+ReLU) in the second pass.
    phase_groups: >1 for the sub-pixel up-path (stats merged over phase row groups).
    """
    c, kp = a.shape
    kb, m = patches.shape
    assert kb == kp
    bytes_per_col = 4 * kp + 6 * c               # double-buffered patches + raw tiles
    mp, tm, nm = _pick_tile(m, bytes_per_col, max_tile_m)
    if mp > m:                                   # only when M is not tile-divisible
        patches = jnp.pad(patches, ((0, 0), (0, mp - m)))
        if residual is not None:
            residual = jnp.pad(residual, ((0, 0), (0, mp - m)))

    # ---- pass 1: tiled GEMM + per-tile partial BN statistics -------------------
    raw, psum, psq = pl.pallas_call(
        _gemm_stats_kernel,
        grid=(nm,),
        in_specs=[pl.BlockSpec((c, kp), lambda i: (0, 0)),
                  _patches_spec(kp, tm, nm)],
        out_specs=[pl.BlockSpec((c, tm), lambda i: (0, i)),
                   pl.BlockSpec((1, c, 1), lambda i: (i, 0, 0)),
                   pl.BlockSpec((1, c, 1), lambda i: (i, 0, 0))],
        out_shape=[jax.ShapeDtypeStruct((c, mp), jnp.bfloat16),
                   jax.ShapeDtypeStruct((nm, c, 1), jnp.float32),
                   jax.ShapeDtypeStruct((nm, c, 1), jnp.float32)],
        compiler_params=_cparams(),
    )(a, patches)

    # ---- tiny per-channel scale/shift math (bytes of HBM, stays in XLA) --------
    s = jnp.sum(psum[:, :, 0], axis=0)
    q = jnp.sum(psq[:, :, 0], axis=0)
    if phase_groups > 1:
        cg = c // phase_groups
        s = s.reshape(phase_groups, cg).sum(axis=0)
        q = q.reshape(phase_groups, cg).sum(axis=0)
    count = float(m * phase_groups)
    mean = s / count
    var = jnp.maximum(q / count - mean * mean, 0.0)   # clamp -> no rsqrt NaN
    scale = gamma.astype(jnp.float32) * lax.rsqrt(var + eps)
    shift = beta.astype(jnp.float32) - mean * scale
    if phase_groups > 1:
        scale = jnp.tile(scale, phase_groups)         # rows ordered (phase, cout)
        shift = jnp.tile(shift, phase_groups)
    scale_col = scale.reshape(c, 1)
    shift_col = shift.reshape(c, 1)

    # ---- pass 2: tiled affine + ReLU + residual, bf16 out ----------------------
    has_res = residual is not None
    ops = [raw, scale_col, shift_col] + ([residual] if has_res else [])
    in_specs = [pl.BlockSpec((c, tm), lambda i: (0, i)),
                pl.BlockSpec((c, 1), lambda i: (0, 0)),
                pl.BlockSpec((c, 1), lambda i: (0, 0))]
    if has_res:
        in_specs.append(pl.BlockSpec((c, tm), lambda i: (0, i)))
    out = pl.pallas_call(
        functools.partial(_affine_kernel, relu=relu, has_res=has_res),
        grid=(nm,),
        in_specs=in_specs,
        out_specs=pl.BlockSpec((c, tm), lambda i: (0, i)),
        out_shape=jax.ShapeDtypeStruct((c, mp), out_dtype),
        compiler_params=_cparams(),
    )(*ops)
    return out[:, :m] if mp > m else out


def gemm_bias_res(a, patches, bias_col, residual, *, max_tile_m=4096):
    """Final conv: tiled GEMM + conv bias + learn-residual input add, f32 out."""
    c, kp = a.shape
    _, m = patches.shape
    bytes_per_col = 4 * kp + 16 * c
    mp, tm, nm = _pick_tile(m, bytes_per_col, max_tile_m)
    if mp > m:
        patches = jnp.pad(patches, ((0, 0), (0, mp - m)))
        residual = jnp.pad(residual, ((0, 0), (0, mp - m)))
    out = pl.pallas_call(
        _gemm_epilogue_kernel,
        grid=(nm,),
        in_specs=[pl.BlockSpec((c, kp), lambda i: (0, 0)),
                  _patches_spec(kp, tm, nm),
                  pl.BlockSpec((c, 1), lambda i: (0, 0)),
                  pl.BlockSpec((c, tm), lambda i: (0, i))],
        out_specs=pl.BlockSpec((c, tm), lambda i: (0, i)),
        out_shape=jax.ShapeDtypeStruct((c, mp), jnp.float32),
        compiler_params=_cparams(),
    )(a, patches, bias_col, residual)
    return out[:, :m] if mp > m else out


# ---------------------------------------------------------------------------
# JAX-side glue: im2col (channel-major) and one-time weight preparation
# ---------------------------------------------------------------------------

def _im2col_cm(x, kh, kw, stride=1):
    """x: [Cin, N, H, W] (spatially padded) -> ([Kp, N*oh*ow], oh, ow), Kp = rup(kh*kw*Cin, 16).

    Row order (ky, kx, cin); column order (n, oy, ox); zero rows appended for K alignment.
    """
    cin, n, h, w = x.shape
    oh = (h - kh) // stride + 1
    ow = (w - kw) // stride + 1
    m = n * oh * ow
    rows = []
    for i in range(kh):
        for j in range(kw):
            sl = x[:, :, i:i + (oh - 1) * stride + 1:stride,
                         j:j + (ow - 1) * stride + 1:stride]
            rows.append(sl.reshape(cin, m))
    k = kh * kw * cin
    kp = _rup(k, _K_ALIGN)
    if kp > k:
        rows.append(jnp.zeros((kp - k, m), x.dtype))
    # TODO(synk): replace with in-kernel im2col (manual halo DMA + tap-loop of lane-offset
    # slices) to remove the kh*kw HBM amplification on the stride-1 convs.
    return jnp.concatenate(rows, axis=0), oh, ow


def _prep_conv_w(w):
    """PyTorch Conv2d weight [Cout, Cin, kh, kw] -> bf16 GEMM LHS [Cout, Kp]."""
    cout, cin, kh, kw = w.shape
    k = kh * kw * cin
    wm = jnp.transpose(w, (0, 2, 3, 1)).reshape(cout, k)
    kp = _rup(k, _K_ALIGN)
    if kp > k:
        wm = jnp.pad(wm, ((0, 0), (0, kp - k)))
    return wm.astype(jnp.bfloat16)


def _prep_convT_w(w):
    """ConvTranspose2d weight [Cin, Cout, 3, 3] (s2, p1, op1) -> sub-pixel GEMM LHS.

    Rows = (phase = py*2+px, cout); cols = (tap = ty*2+tx, cin), from the 1-D identity
    out[2q + p] = sum_t x[q + t] * w1d[k(p, t)] with k(0,0)=1, k(1,0)=2, k(1,1)=0.
    """
    cin, cout, kh, kw = w.shape
    assert kh == 3 and kw == 3

    def k_of(p, t):
        if p == 0:
            return 1 if t == 0 else None
        return 2 if t == 0 else 0

    wall = jnp.zeros((4 * cout, 4 * cin), jnp.float32)
    for py in range(2):
        for px in range(2):
            for ty in range(2):
                for tx in range(2):
                    ky, kx = k_of(py, ty), k_of(px, tx)
                    if ky is None or kx is None:
                        continue
                    ph, tp = py * 2 + px, ty * 2 + tx
                    wall = wall.at[ph * cout:(ph + 1) * cout,
                                   tp * cin:(tp + 1) * cin].set(w[:, :, ky, kx].T)
    k4 = 4 * cin
    kp = _rup(k4, _K_ALIGN)
    if kp > k4:
        wall = jnp.pad(wall, ((0, 0), (0, kp - k4)))
    return wall.astype(jnp.bfloat16)


def prepare_params(params, n_blocks=2):
    """One-time (outside jit) weight prep: GEMM-ready bf16 matrices, raw BN vectors."""
    gp = {}
    gp['conv0_a'] = _prep_conv_w(params['conv0_w'])
    gp['bn0_g'], gp['bn0_b'] = params['bn0_g'], params['bn0_b']
    for i in range(2):
        gp[f'down{i}_a'] = _prep_conv_w(params[f'down{i}_w'])
        gp[f'down{i}_g'], gp[f'down{i}_b'] = params[f'down{i}_g'], params[f'down{i}_b']
    for b in range(n_blocks):
        for j in (1, 2):
            gp[f'res{b}_a{j}'] = _prep_conv_w(params[f'res{b}_w{j}'])
            gp[f'res{b}_g{j}'] = params[f'res{b}_g{j}']
            gp[f'res{b}_b{j}'] = params[f'res{b}_b{j}']
    for i in range(2):
        gp[f'up{i}_a'] = _prep_convT_w(params[f'up{i}_w'])
        gp[f'up{i}_g'], gp[f'up{i}_b'] = params[f'up{i}_g'], params[f'up{i}_b']
    gp['convL_a'] = _prep_conv_w(params['convL_w'])
    gp['convL_bias'] = params['convL_b'].reshape(-1, 1).astype(jnp.float32)
    return gp


# ---------------------------------------------------------------------------
# Parameter init (deterministic, synthetic — no checkpoint loading)
# ---------------------------------------------------------------------------

def init_params(key, input_nc=3, output_nc=3, ngf=8, n_blocks=2):
    params = {}

    def conv_w(k, cout, cin, ksz):
        fan_in = cin * ksz * ksz
        return jax.random.normal(k, (cout, cin, ksz, ksz), jnp.float32) * (fan_in ** -0.5)

    def convT_w(k, cin, cout, ksz):
        fan_in = cin * ksz * ksz
        return jax.random.normal(k, (cin, cout, ksz, ksz), jnp.float32) * (fan_in ** -0.5)

    keys = iter(jax.random.split(key, 64))

    params['conv0_w'] = conv_w(next(keys), ngf, input_nc, 7)
    params['bn0_g'] = jnp.ones((ngf,), jnp.float32)
    params['bn0_b'] = jnp.zeros((ngf,), jnp.float32)

    for i in range(2):
        mult = 2 ** i
        cin, cout = ngf * mult, ngf * mult * 2
        params[f'down{i}_w'] = conv_w(next(keys), cout, cin, 3)
        params[f'down{i}_g'] = jnp.ones((cout,), jnp.float32)
        params[f'down{i}_b'] = jnp.zeros((cout,), jnp.float32)

    dim = ngf * 4
    for b in range(n_blocks):
        for j in (1, 2):
            params[f'res{b}_w{j}'] = conv_w(next(keys), dim, dim, 3)
            params[f'res{b}_g{j}'] = jnp.ones((dim,), jnp.float32)
            params[f'res{b}_b{j}'] = jnp.zeros((dim,), jnp.float32)

    for i in range(2):
        mult = 2 ** (2 - i)
        cin, cout = ngf * mult, ngf * mult // 2
        params[f'up{i}_w'] = convT_w(next(keys), cin, cout, 3)
        params[f'up{i}_g'] = jnp.ones((cout,), jnp.float32)
        params[f'up{i}_b'] = jnp.zeros((cout,), jnp.float32)

    params['convL_w'] = conv_w(next(keys), output_nc, ngf, 7)
    params['convL_b'] = jax.random.normal(next(keys), (output_nc,), jnp.float32) * 0.01
    return params


# ---------------------------------------------------------------------------
# Full forward pass
# ---------------------------------------------------------------------------

def resnet_generator_forward(gp, x_nchw, *, n_blocks=2, eps=1e-5, max_tile_m=4096):
    x_f32 = jnp.transpose(x_nchw, (1, 0, 2, 3)).astype(jnp.float32)     # [C, N, H, W]
    c_in, n, h0, w0 = x_f32.shape
    x = x_f32.astype(jnp.bfloat16)

    def conv_bn(h, name_a, name_g, name_b, ksz, stride, pad_mode, pad, *, relu,
                residual2d=None):
        cin, nb, hh, ww = h.shape
        if pad:
            h = jnp.pad(h, ((0, 0), (0, 0), (pad, pad), (pad, pad)), mode=pad_mode)
        patches, oh, ow = _im2col_cm(h, ksz, ksz, stride)
        a = gp[name_a]
        out2d = gemm_bn_act(a, patches, gp[name_g], gp[name_b], relu=relu,
                            residual=residual2d, eps=eps, max_tile_m=max_tile_m)
        return out2d.reshape(a.shape[0], nb, oh, ow)

    # head: ReflectionPad(3) + Conv7x7 + BN + ReLU
    h = conv_bn(x, 'conv0_a', 'bn0_g', 'bn0_b', 7, 1, 'reflect', 3, relu=True)

    # downsampling: ZeroPad(1) + Conv3x3 s2 + BN + ReLU
    for i in range(2):
        h = conv_bn(h, f'down{i}_a', f'down{i}_g', f'down{i}_b', 3, 2, 'constant', 1,
                    relu=True)

    # resnet blocks (reflect padding, no dropout); 2nd conv's affine pass adds the skip
    for b in range(n_blocks):
        c = h.shape[0]
        skip = h.reshape(c, -1)
        r = conv_bn(h, f'res{b}_a1', f'res{b}_g1', f'res{b}_b1', 3, 1, 'reflect', 1,
                    relu=True)
        h = conv_bn(r, f'res{b}_a2', f'res{b}_g2', f'res{b}_b2', 3, 1, 'reflect', 1,
                    relu=False, residual2d=skip)

    # upsampling: ConvTranspose(3, s2, p1, op1) + BN + ReLU via sub-pixel decomposition.
    # BN + ReLU are fused into the tiled affine pass on the pre-interleave [4*Cout, M]
    # layout (batch stats are invariant to the later phase interleave).
    for i in range(2):
        a = gp[f'up{i}_a']
        c, nb, hh, ww = h.shape
        cout = a.shape[0] // 4
        hp = jnp.pad(h, ((0, 0), (0, 0), (0, 1), (0, 1)))
        taps = [hp[:, :, ty:ty + hh, tx:tx + ww].reshape(c, -1)
                for ty in range(2) for tx in range(2)]
        if a.shape[1] > 4 * c:
            taps.append(jnp.zeros((a.shape[1] - 4 * c, taps[0].shape[1]), h.dtype))
        patches = jnp.concatenate(taps, axis=0)                 # [4*Cin (padded), M]
        o2d = gemm_bn_act(a, patches, gp[f'up{i}_g'], gp[f'up{i}_b'], relu=True,
                          eps=eps, max_tile_m=max_tile_m, phase_groups=4)
        o = o2d.reshape(2, 2, cout, nb, hh, ww)
        h = jnp.transpose(o, (2, 3, 4, 0, 5, 1)).reshape(cout, nb, 2 * hh, 2 * ww)

    # tail: ReflectionPad(3) + Conv7x7 (+bias, no norm) + learn-residual input add
    hp = jnp.pad(h, ((0, 0), (0, 0), (3, 3), (3, 3)), mode='reflect')
    patches, oh, ow = _im2col_cm(hp, 7, 7, 1)
    out2d = gemm_bias_res(gp['convL_a'], patches, gp['convL_bias'],
                          x_f32.reshape(c_in, -1), max_tile_m=max_tile_m)
    out = out2d.reshape(-1, n, oh, ow)
    return jnp.transpose(out, (1, 0, 2, 3))                      # back to NCHW


# ---------------------------------------------------------------------------

if __name__ == "__main__":
    key = jax.random.PRNGKey(0)
    k_p, k_x = jax.random.split(key)

    input_nc, output_nc, ngf, n_blocks = 3, 3, 8, 2
    params = init_params(k_p, input_nc=input_nc, output_nc=output_nc,
                         ngf=ngf, n_blocks=n_blocks)
    gp = prepare_params(params, n_blocks=n_blocks)      # one-time weight prep

    x = jax.random.normal(k_x, (2, input_nc, 16, 16), jnp.float32)   # NCHW like PyTorch

    # max_tile_m=256 so the multi-tile grid / partial-stats path is exercised even at
    # this toy size (real deployments would use the 2048-8192 default).
    fwd = jax.jit(functools.partial(resnet_generator_forward, n_blocks=n_blocks,
                                    max_tile_m=256))
    y = fwd(gp, x)
    jax.block_until_ready(y)

    assert y.shape == (2, output_nc, 16, 16)
    assert bool(jnp.all(jnp.isfinite(y)))
    print("KERNEL_OK")
</pallas_src>

<mosaic_0001>
module attributes {stable_mosaic.version = 11 : i64} {
  func.func @_gemm_stats_kernel(%arg0: i32, %arg1: memref<8x160xbf16, #tpu.memory_space<vmem>>, %arg2: memref<160x256xbf16, #tpu.memory_space<vmem>>, %arg3: memref<8x256xbf16, #tpu.memory_space<vmem>>, %arg4: memref<1x8x1xf32, #tpu.memory_space<vmem>>, %arg5: memref<1x8x1xf32, #tpu.memory_space<vmem>>) attributes {dimension_semantics = [#tpu.dimension_semantics<parallel>], iteration_bounds = array<i64: 2>, scalar_prefetch = 0 : i64, scratch_operands = 0 : i64, tpu.core_type = #tpu.core_type<tc>, window_params = [{pipeline_mode = #tpu.pipeline_mode<synchronous>, transform_indices = @transform_0, window_bounds = array<i64: 8, 160>}, {transform_indices = @transform_1, window_bounds = array<i64: 160, 256>}, {transform_indices = @transform_2, window_bounds = array<i64: 8, 256>}, {transform_indices = @transform_3, window_bounds = array<i64: 1, 8, 1>}, {transform_indices = @transform_4, window_bounds = array<i64: 1, 8, 1>}]} {
    %c0 = arith.constant 0 : index
    %c0_0 = arith.constant 0 : index
    %0 = vector.load %arg1[%c0, %c0_0] : memref<8x160xbf16, #tpu.memory_space<vmem>>, vector<8x160xbf16>
    %c0_1 = arith.constant 0 : index
    %c0_2 = arith.constant 0 : index
    %1 = vector.load %arg2[%c0_1, %c0_2] : memref<160x256xbf16, #tpu.memory_space<vmem>>, vector<160x256xbf16>
    %cst = arith.constant dense<0.000000e+00> : vector<8x256xf32>
    %2 = tpu.matmul %0, %1, %cst {dimension_numbers = #tpu.dot_dimension_numbers<[1], [0], [0], [1], [0, 0, 1, 1], [], []>} : vector<8x160xbf16>, vector<160x256xbf16>, vector<8x256xf32> -> vector<8x256xf32>
    %3 = arith.truncf %2 : vector<8x256xf32> to vector<8x256xbf16>
    %c0_3 = arith.constant 0 : index
    %c0_4 = arith.constant 0 : index
    %4 = vector.load %arg3[%c0_3, %c0_4] : memref<8x256xbf16, #tpu.memory_space<vmem>>, vector<8x256xbf16>
    tpu.vector_store %arg3[%c0_3, %c0_4], %3 {strides = array<i32>} : memref<8x256xbf16, #tpu.memory_space<vmem>>, vector<8x256xbf16>,
    %cst_5 = arith.constant dense<0.000000e+00> : vector<8xf32>
    %5 = vector.multi_reduction <add>, %2, %cst_5 [1] : vector<8x256xf32> to vector<8xf32>
    %6 = vector.shape_cast %5 : vector<8xf32> to vector<8x1xf32>
    %7 = vector.shape_cast %6 : vector<8x1xf32> to vector<1x8x1xf32>
    %c0_6 = arith.constant 0 : index
    %c0_7 = arith.constant 0 : index
    %c0_8 = arith.constant 0 : index
    %8 = vector.load %arg4[%c0_6, %c0_7, %c0_8] : memref<1x8x1xf32, #tpu.memory_space<vmem>>, vector<1x8x1xf32>
    tpu.vector_store %arg4[%c0_6, %c0_7, %c0_8], %7 {strides = array<i32>} : memref<1x8x1xf32, #tpu.memory_space<vmem>>, vector<1x8x1xf32>,
    %9 = arith.mulf %2, %2 : vector<8x256xf32>
    %cst_9 = arith.constant dense<0.000000e+00> : vector<8xf32>
    %10 = vector.multi_reduction <add>, %9, %cst_9 [1] : vector<8x256xf32> to vector<8xf32>
    %11 = vector.shape_cast %10 : vector<8xf32> to vector<8x1xf32>
    %12 = vector.shape_cast %11 : vector<8x1xf32> to vector<1x8x1xf32>
    %c0_10 = arith.constant 0 : index
    %c0_11 = arith.constant 0 : index
    %c0_12 = arith.constant 0 : index
    %13 = vector.load %arg5[%c0_10, %c0_11, %c0_12] : memref<1x8x1xf32, #tpu.memory_space<vmem>>, vector<1x8x1xf32>
    tpu.vector_store %arg5[%c0_10, %c0_11, %c0_12], %12 {strides = array<i32>} : memref<1x8x1xf32, #tpu.memory_space<vmem>>, vector<1x8x1xf32>,
    return
  }
  func.func @transform_0(%arg0: i32) -> (i32, i32) {
    %c0_i32 = arith.constant 0 : i32
    %c0_i32_0 = arith.constant 0 : i32
    %c0_i32_1 = arith.constant 0 : i32
    return %c0_i32, %c0_i32_0 : i32, i32
  }
  func.func @transform_1(%arg0: i32) -> (i32, i32) {
    %c0_i32 = arith.constant 0 : i32
    %c0_i32_0 = arith.constant 0 : i32
    return %c0_i32, %arg0 : i32, i32
  }
  func.func @transform_2(%arg0: i32) -> (i32, i32) {
    %c0_i32 = arith.constant 0 : i32
    %c0_i32_0 = arith.constant 0 : i32
    return %c0_i32, %arg0 : i32, i32
  }
  func.func @transform_3(%arg0: i32) -> (i32, i32, i32) {
    %c0_i32 = arith.constant 0 : i32
    %c0_i32_0 = arith.constant 0 : i32
    %c0_i32_1 = arith.constant 0 : i32
    return %arg0, %c0_i32, %c0_i32_0 : i32, i32, i32
  }
  func.func @transform_4(%arg0: i32) -> (i32, i32, i32) {
    %c0_i32 = arith.constant 0 : i32
    %c0_i32_0 = arith.constant 0 : i32
    %c0_i32_1 = arith.constant 0 : i32
    return %arg0, %c0_i32, %c0_i32_0 : i32, i32, i32
  }
}

module attributes {stable_mosaic.version = 11 : i64} {
  func.func @_affine_kernel(%arg0: i32, %arg1: memref<8x256xbf16, #tpu.memory_space<vmem>>, %arg2: memref<8x1xf32, #tpu.memory_space<vmem>>, %arg3: memref<8x1xf32, #tpu.memory_space<vmem>>, %arg4: memref<8x256xbf16, #tpu.memory_space<vmem>>) attributes {dimension_semantics = [#tpu.dimension_semantics<parallel>], iteration_bounds = array<i64: 2>, scalar_prefetch = 0 : i64, scratch_operands = 0 : i64, tpu.core_type = #tpu.core_type<tc>, window_params = [{transform_indices = @transform_0, window_bounds = array<i64: 8, 256>}, {pipeline_mode = #tpu.pipeline_mode<synchronous>, transform_indices = @transform_1, window_bounds = array<i64: 8, 1>}, {pipeline_mode = #tpu.pipeline_mode<synchronous>, transform_indices = @transform_2, window_bounds = array<i64: 8, 1>}, {transform_indices = @transform_3, window_bounds = array<i64: 8, 256>}]} {
    %c0 = arith.constant 0 : index
    %c0_0 = arith.constant 0 : index
    %0 = vector.load %arg1[%c0, %c0_0] : memref<8x256xbf16, #tpu.memory_space<vmem>>, vector<8x256xbf16>
    %1 = arith.extf %0 : vector<8x256xbf16> to vector<8x256xf32>
    %c0_1 = arith.constant 0 : index
    %c0_2 = arith.constant 0 : index
    %2 = vector.load %arg2[%c0_1, %c0_2] : memref<8x1xf32, #tpu.memory_space<vmem>>, vector<8x1xf32>
    %3 = vector.broadcast %2 : vector<8x1xf32> to vector<8x256xf32>
    %4 = arith.mulf %1, %3 : vector<8x256xf32>
    %c0_3 = arith.constant 0 : index
    %c0_4 = arith.constant 0 : index
    %5 = vector.load %arg3[%c0_3, %c0_4] : memref<8x1xf32, #tpu.memory_space<vmem>>, vector<8x1xf32>
    %6 = vector.broadcast %5 : vector<8x1xf32> to vector<8x256xf32>
    %7 = arith.addf %4, %6 : vector<8x256xf32>
    %cst = arith.constant 0.000000e+00 : f32
    %8 = vector.broadcast %cst : f32 to vector<8x256xf32>
    %9 = arith.maximumf %7, %8 : vector<8x256xf32>
    %10 = arith.truncf %9 : vector<8x256xf32> to vector<8x256xbf16>
    %c0_5 = arith.constant 0 : index
    %c0_6 = arith.constant 0 : index
    %11 = vector.load %arg4[%c0_5, %c0_6] : memref<8x256xbf16, #tpu.memory_space<vmem>>, vector<8x256xbf16>
    tpu.vector_store %arg4[%c0_5, %c0_6], %10 {strides = array<i32>} : memref<8x256xbf16, #tpu.memory_space<vmem>>, vector<8x256xbf16>,
    return
  }
  func.func @transform_0(%arg0: i32) -> (i32, i32) {
    %c0_i32 = arith.constant 0 : i32
    %c0_i32_0 = arith.constant 0 : i32
    return %c0_i32, %arg0 : i32, i32
  }
  func.func @transform_1(%arg0: i32) -> (i32, i32) {
    %c0_i32 = arith.constant 0 : i32
    %c0_i32_0 = arith.constant 0 : i32
    %c0_i32_1 = arith.constant 0 : i32
    return %c0_i32, %c0_i32_0 : i32, i32
  }
  func.func @transform_2(%arg0: i32) -> (i32, i32) {
    %c0_i32 = arith.constant 0 : i32
    %c0_i32_0 = arith.constant 0 : i32
    %c0_i32_1 = arith.constant 0 : i32
    return %c0_i32, %c0_i32_0 : i32, i32
  }
  func.func @transform_3(%arg0: i32) -> (i32, i32) {
    %c0_i32 = arith.constant 0 : i32
    %c0_i32_0 = arith.constant 0 : i32
    return %c0_i32, %arg0 : i32, i32
  }
}

module attributes {stable_mosaic.version = 11 : i64} {
  func.func @_gemm_stats_kernel(%arg0: i32, %arg1: memref<16x80xbf16, #tpu.memory_space<vmem>>, %arg2: memref<80x128xbf16, #tpu.memory_space<vmem>>, %arg3: memref<16x128xbf16, #tpu.memory_space<vmem>>, %arg4: memref<1x16x1xf32, #tpu.memory_space<vmem>>, %arg5: memref<1x16x1xf32, #tpu.memory_space<vmem>>) attributes {dimension_semantics = [#tpu.dimension_semantics<parallel>], iteration_bounds = array<i64: 1>, scalar_prefetch = 0 : i64, scratch_operands = 0 : i64, tpu.core_type = #tpu.core_type<tc>, window_params = [{pipeline_mode = #tpu.pipeline_mode<synchronous>, transform_indices = @transform_0, window_bounds = array<i64: 16, 80>}, {transform_indices = @transform_1, window_bounds = array<i64: 80, 128>}, {transform_indices = @transform_2, window_bounds = array<i64: 16, 128>}, {transform_indices = @transform_3, window_bounds = array<i64: 1, 16, 1>}, {transform_indices = @transform_4, window_bounds = array<i64: 1, 16, 1>}]} {
    %c0 = arith.constant 0 : index
    %c0_0 = arith.constant 0 : index
    %0 = vector.load %arg1[%c0, %c0_0] : memref<16x80xbf16, #tpu.memory_space<vmem>>, vector<16x80xbf16>
    %c0_1 = arith.constant 0 : index
    %c0_2 = arith.constant 0 : index
    %1 = vector.load %arg2[%c0_1, %c0_2] : memref<80x128xbf16, #tpu.memory_space<vmem>>, vector<80x128xbf16>
    %cst = arith.constant dense<0.000000e+00> : vector<16x128xf32>
    %2 = tpu.matmul %0, %1, %cst {dimension_numbers = #tpu.dot_dimension_numbers<[1], [0], [0], [1], [0, 0, 1, 1], [], []>} : vector<16x80xbf16>, vector<80x128xbf16>, vector<16x128xf32> -> vector<16x128xf32>
    %3 = arith.truncf %2 : vector<16x128xf32> to vector<16x128xbf16>
    %c0_3 = arith.constant 0 : index
    %c0_4 = arith.constant 0 : index
    %4 = vector.load %arg3[%c0_3, %c0_4] : memref<16x128xbf16, #tpu.memory_space<vmem>>, vector<16x128xbf16>
    tpu.vector_store %arg3[%c0_3, %c0_4], %3 {strides = array<i32>} : memref<16x128xbf16, #tpu.memory_space<vmem>>, vector<16x128xbf16>,
    %cst_5 = arith.constant dense<0.000000e+00> : vector<16xf32>
    %5 = vector.multi_reduction <add>, %2, %cst_5 [1] : vector<16x128xf32> to vector<16xf32>
    %6 = vector.shape_cast %5 : vector<16xf32> to vector<16x1xf32>
    %7 = vector.shape_cast %6 : vector<16x1xf32> to vector<1x16x1xf32>
    %c0_6 = arith.constant 0 : index
    %c0_7 = arith.constant 0 : index
    %c0_8 = arith.constant 0 : index
    %8 = vector.load %arg4[%c0_6, %c0_7, %c0_8] : memref<1x16x1xf32, #tpu.memory_space<vmem>>, vector<1x16x1xf32>
    tpu.vector_store %arg4[%c0_6, %c0_7, %c0_8], %7 {strides = array<i32>} : memref<1x16x1xf32, #tpu.memory_space<vmem>>, vector<1x16x1xf32>,
    %9 = arith.mulf %2, %2 : vector<16x128xf32>
    %cst_9 = arith.constant dense<0.000000e+00> : vector<16xf32>
    %10 = vector.multi_reduction <add>, %9, %cst_9 [1] : vector<16x128xf32> to vector<16xf32>
    %11 = vector.shape_cast %10 : vector<16xf32> to vector<16x1xf32>
    %12 = vector.shape_cast %11 : vector<16x1xf32> to vector<1x16x1xf32>
    %c0_10 = arith.constant 0 : index
    %c0_11 = arith.constant 0 : index
    %c0_12 = arith.constant 0 : index
    %13 = vector.load %arg5[%c0_10, %c0_11, %c0_12] : memref<1x16x1xf32, #tpu.memory_space<vmem>>, vector<1x16x1xf32>
    tpu.vector_store %arg5[%c0_10, %c0_11, %c0_12], %12 {strides = array<i32>} : memref<1x16x1xf32, #tpu.memory_space<vmem>>, vector<1x16x1xf32>,
    return
  }
  func.func @transform_0(%arg0: i32) -> (i32, i32) {
    %c0_i32 = arith.constant 0 : i32
    %c0_i32_0 = arith.constant 0 : i32
    %c0_i32_1 = arith.constant 0 : i32
    return %c0_i32, %c0_i32_0 : i32, i32
  }
  func.func @transform_1(%arg0: i32) -> (i32, i32) {
    %c0_i32 = arith.constant 0 : i32
    %c0_i32_0 = arith.constant 0 : i32
    return %c0_i32, %arg0 : i32, i32
  }
  func.func @transform_2(%arg0: i32) -> (i32, i32) {
    %c0_i32 = arith.constant 0 : i32
    %c0_i32_0 = arith.constant 0 : i32
    return %c0_i32, %arg0 : i32, i32
  }
  func.func @transform_3(%arg0: i32) -> (i32, i32, i32) {
    %c0_i32 = arith.constant 0 : i32
    %c0_i32_0 = arith.constant 0 : i32
    %c0_i32_1 = arith.constant 0 : i32
    return %arg0, %c0_i32, %c0_i32_0 : i32, i32, i32
  }
  func.func @transform_4(%arg0: i32) -> (i32, i32, i32) {
    %c0_i32 = arith.constant 0 : i32
    %c0_i32_0 = arith.constant 0 : i32
    %c0_i32_1 = arith.constant 0 : i32
    return %arg0, %c0_i32, %c0_i32_0 : i32, i32, i32
  }
}

module attributes {stable_mosaic.version = 11 : i64} {
  func.func @_affine_kernel(%arg0: i32, %arg1: memref<16x128xbf16, #tpu.memory_space<vmem>>, %arg2: memref<16x1xf32, #tpu.memory_space<vmem>>, %arg3: memref<16x1xf32, #tpu.memory_space<vmem>>, %arg4: memref<16x128xbf16, #tpu.memory_space<vmem>>) attributes {dimension_semantics = [#tpu.dimension_semantics<parallel>], iteration_bounds = array<i64: 1>, scalar_prefetch = 0 : i64, scratch_operands = 0 : i64, tpu.core_type = #tpu.core_type<tc>, window_params = [{transform_indices = @transform_0, window_bounds = array<i64: 16, 128>}, {pipeline_mode = #tpu.pipeline_mode<synchronous>, transform_indices = @transform_1, window_bounds = array<i64: 16, 1>}, {pipeline_mode = #tpu.pipeline_mode<synchronous>, transform_indices = @transform_2, window_bounds = array<i64: 16, 1>}, {transform_indices = @transform_3, window_bounds = array<i64: 16, 128>}]} {
    %c0 = arith.constant 0 : index
    %c0_0 = arith.constant 0 : index
    %0 = vector.load %arg1[%c0, %c0_0] : memref<16x128xbf16, #tpu.memory_space<vmem>>, vector<16x128xbf16>
    %1 = arith.extf %0 : vector<16x128xbf16> to vector<16x128xf32>
    %c0_1 = arith.constant 0 : index
    %c0_2 = arith.constant 0 : index
    %2 = vector.load %arg2[%c0_1, %c0_2] : memref<16x1xf32, #tpu.memory_space<vmem>>, vector<16x1xf32>
    %3 = vector.broadcast %2 : vector<16x1xf32> to vector<16x128xf32>
    %4 = arith.mulf %1, %3 : vector<16x128xf32>
    %c0_3 = arith.constant 0 : index
    %c0_4 = arith.constant 0 : index
    %5 = vector.load %arg3[%c0_3, %c0_4] : memref<16x1xf32, #tpu.memory_space<vmem>>, vector<16x1xf32>
    %6 = vector.broadcast %5 : vector<16x1xf32> to vector<16x128xf32>
    %7 = arith.addf %4, %6 : vector<16x128xf32>
    %cst = arith.constant 0.000000e+00 : f32
    %8 = vector.broadcast %cst : f32 to vector<16x128xf32>
    %9 = arith.maximumf %7, %8 : vector<16x128xf32>
    %10 = arith.truncf %9 : vector<16x128xf32> to vector<16x128xbf16>
    %c0_5 = arith.constant 0 : index
    %c0_6 = arith.constant 0 : index
    %11 = vector.load %arg4[%c0_5, %c0_6] : memref<16x128xbf16, #tpu.memory_space<vmem>>, vector<16x128xbf16>
    tpu.vector_store %arg4[%c0_5, %c0_6], %10 {strides = array<i32>} : memref<16x128xbf16, #tpu.memory_space<vmem>>, vector<16x128xbf16>,
    return
  }
  func.func @transform_0(%arg0: i32) -> (i32, i32) {
    %c0_i32 = arith.constant 0 : i32
    %c0_i32_0 = arith.constant 0 : i32
    return %c0_i32, %arg0 : i32, i32
  }
  func.func @transform_1(%arg0: i32) -> (i32, i32) {
    %c0_i32 = arith.constant 0 : i32
    %c0_i32_0 = arith.constant 0 : i32
    %c0_i32_1 = arith.constant 0 : i32
    return %c0_i32, %c0_i32_0 : i32, i32
  }
  func.func @transform_2(%arg0: i32) -> (i32, i32) {
    %c0_i32 = arith.constant 0 : i32
    %c0_i32_0 = arith.constant 0 : i32
    %c0_i32_1 = arith.constant 0 : i32
    return %c0_i32, %c0_i32_0 : i32, i32
  }
  func.func @transform_3(%arg0: i32) -> (i32, i32) {
    %c0_i32 = arith.constant 0 : i32
    %c0_i32_0 = arith.constant 0 : i32
    return %c0_i32, %arg0 : i32, i32
  }
}

module attributes {stable_mosaic.version = 11 : i64} {
  func.func @_gemm_stats_kernel(%arg0: i32, %arg1: memref<32x144xbf16, #tpu.memory_space<vmem>>, %arg2: memref<144x32xbf16, #tpu.memory_space<vmem>>, %arg3: memref<32x32xbf16, #tpu.memory_space<vmem>>, %arg4: memref<1x32x1xf32, #tpu.memory_space<vmem>>, %arg5: memref<1x32x1xf32, #tpu.memory_space<vmem>>) attributes {dimension_semantics = [#tpu.dimension_semantics<parallel>], iteration_bounds = array<i64: 1>, scalar_prefetch = 0 : i64, scratch_operands = 0 : i64, tpu.core_type = #tpu.core_type<tc>, window_params = [{pipeline_mode = #tpu.pipeline_mode<synchronous>, transform_indices = @transform_0, window_bounds = array<i64: 32, 144>}, {transform_indices = @transform_1, window_bounds = array<i64: 144, 32>}, {transform_indices = @transform_2, window_bounds = array<i64: 32, 32>}, {transform_indices = @transform_3, window_bounds = array<i64: 1, 32, 1>}, {transform_indices = @transform_4, window_bounds = array<i64: 1, 32, 1>}]} {
    %c0 = arith.constant 0 : index
    %c0_0 = arith.constant 0 : index
    %0 = vector.load %arg1[%c0, %c0_0] : memref<32x144xbf16, #tpu.memory_space<vmem>>, vector<32x144xbf16>
    %c0_1 = arith.constant 0 : index
    %c0_2 = arith.constant 0 : index
    %1 = vector.load %arg2[%c0_1, %c0_2] : memref<144x32xbf16, #tpu.memory_space<vmem>>, vector<144x32xbf16>
    %cst = arith.constant dense<0.000000e+00> : vector<32x32xf32>
    %2 = tpu.matmul %0, %1, %cst {dimension_numbers = #tpu.dot_dimension_numbers<[1], [0], [0], [1], [0, 0, 1, 1], [], []>} : vector<32x144xbf16>, vector<144x32xbf16>, vector<32x32xf32> -> vector<32x32xf32>
    %3 = arith.truncf %2 : vector<32x32xf32> to vector<32x32xbf16>
    %c0_3 = arith.constant 0 : index
    %c0_4 = arith.constant 0 : index
    %4 = vector.load %arg3[%c0_3, %c0_4] : memref<32x32xbf16, #tpu.memory_space<vmem>>, vector<32x32xbf16>
    tpu.vector_store %arg3[%c0_3, %c0_4], %3 {strides = array<i32>} : memref<32x32xbf16, #tpu.memory_space<vmem>>, vector<32x32xbf16>,
    %cst_5 = arith.constant dense<0.000000e+00> : vector<32xf32>
    %5 = vector.multi_reduction <add>, %2, %cst_5 [1] : vector<32x32xf32> to vector<32xf32>
    %6 = vector.shape_cast %5 : vector<32xf32> to vector<32x1xf32>
    %7 = vector.shape_cast %6 : vector<32x1xf32> to vector<1x32x1xf32>
    %c0_6 = arith.constant 0 : index
    %c0_7 = arith.constant 0 : index
    %c0_8 = arith.constant 0 : index
    %8 = vector.load %arg4[%c0_6, %c0_7, %c0_8] : memref<1x32x1xf32, #tpu.memory_space<vmem>>, vector<1x32x1xf32>
    tpu.vector_store %arg4[%c0_6, %c0_7, %c0_8], %7 {strides = array<i32>} : memref<1x32x1xf32, #tpu.memory_space<vmem>>, vector<1x32x1xf32>,
    %9 = arith.mulf %2, %2 : vector<32x32xf32>
    %cst_9 = arith.constant dense<0.000000e+00> : vector<32xf32>
    %10 = vector.multi_reduction <add>, %9, %cst_9 [1] : vector<32x32xf32> to vector<32xf32>
    %11 = vector.shape_cast %10 : vector<32xf32> to vector<32x1xf32>
    %12 = vector.shape_cast %11 : vector<32x1xf32> to vector<1x32x1xf32>
    %c0_10 = arith.constant 0 : index
    %c0_11 = arith.constant 0 : index
    %c0_12 = arith.constant 0 : index
    %13 = vector.load %arg5[%c0_10, %c0_11, %c0_12] : memref<1x32x1xf32, #tpu.memory_space<vmem>>, vector<1x32x1xf32>
    tpu.vector_store %arg5[%c0_10, %c0_11, %c0_12], %12 {strides = array<i32>} : memref<1x32x1xf32, #tpu.memory_space<vmem>>, vector<1x32x1xf32>,
    return
  }
  func.func @transform_0(%arg0: i32) -> (i32, i32) {
    %c0_i32 = arith.constant 0 : i32
    %c0_i32_0 = arith.constant 0 : i32
    %c0_i32_1 = arith.constant 0 : i32
    return %c0_i32, %c0_i32_0 : i32, i32
  }
  func.func @transform_1(%arg0: i32) -> (i32, i32) {
    %c0_i32 = arith.constant 0 : i32
    %c0_i32_0 = arith.constant 0 : i32
    return %c0_i32, %arg0 : i32, i32
  }
  func.func @transform_2(%arg0: i32) -> (i32, i32) {
    %c0_i32 = arith.constant 0 : i32
    %c0_i32_0 = arith.constant 0 : i32
    return %c0_i32, %arg0 : i32, i32
  }
  func.func @transform_3(%arg0: i32) -> (i32, i32, i32) {
    %c0_i32 = arith.constant 0 : i32
    %c0_i32_0 = arith.constant 0 : i32
    %c0_i32_1 = arith.constant 0 : i32
    return %arg0, %c0_i32, %c0_i32_0 : i32, i32, i32
  }
  func.func @transform_4(%arg0: i32) -> (i32, i32, i32) {
    %c0_i32 = arith.constant 0 : i32
    %c0_i32_0 = arith.constant 0 : i32
    %c0_i32_1 = arith.constant 0 : i32
    return %arg0, %c0_i32, %c0_i32_0 : i32, i32, i32
  }
}

module attributes {stable_mosaic.version = 11 : i64} {
  func.func @_affine_kernel(%arg0: i32, %arg1: memref<32x32xbf16, #tpu.memory_space<vmem>>, %arg2: memref<32x1xf32, #tpu.memory_space<vmem>>, %arg3: memref<32x1xf32, #tpu.memory_space<vmem>>, %arg4: memref<32x32xbf16, #tpu.memory_space<vmem>>) attributes {dimension_semantics = [#tpu.dimension_semantics<parallel>], iteration_bounds = array<i64: 1>, scalar_prefetch = 0 : i64, scratch_operands = 0 : i64, tpu.core_type = #tpu.core_type<tc>, window_params = [{transform_indices = @transform_0, window_bounds = array<i64: 32, 32>}, {pipeline_mode = #tpu.pipeline_mode<synchronous>, transform_indices = @transform_1, window_bounds = array<i64: 32, 1>}, {pipeline_mode = #tpu.pipeline_mode<synchronous>, transform_indices = @transform_2, window_bounds = array<i64: 32, 1>}, {transform_indices = @transform_3, window_bounds = array<i64: 32, 32>}]} {
    %c0 = arith.constant 0 : index
    %c0_0 = arith.constant 0 : index
    %0 = vector.load %arg1[%c0, %c0_0] : memref<32x32xbf16, #tpu.memory_space<vmem>>, vector<32x32xbf16>
    %1 = arith.extf %0 : vector<32x32xbf16> to vector<32x32xf32>
    %c0_1 = arith.constant 0 : index
    %c0_2 = arith.constant 0 : index
    %2 = vector.load %arg2[%c0_1, %c0_2] : memref<32x1xf32, #tpu.memory_space<vmem>>, vector<32x1xf32>
    %3 = vector.broadcast %2 : vector<32x1xf32> to vector<32x32xf32>
    %4 = arith.mulf %1, %3 : vector<32x32xf32>
    %c0_3 = arith.constant 0 : index
    %c0_4 = arith.constant 0 : index
    %5 = vector.load %arg3[%c0_3, %c0_4] : memref<32x1xf32, #tpu.memory_space<vmem>>, vector<32x1xf32>
    %6 = vector.broadcast %5 : vector<32x1xf32> to vector<32x32xf32>
    %7 = arith.addf %4, %6 : vector<32x32xf32>
    %cst = arith.constant 0.000000e+00 : f32
    %8 = vector.broadcast %cst : f32 to vector<32x32xf32>
    %9 = arith.maximumf %7, %8 : vector<32x32xf32>
    %10 = arith.truncf %9 : vector<32x32xf32> to vector<32x32xbf16>
    %c0_5 = arith.constant 0 : index
    %c0_6 = arith.constant 0 : index
    %11 = vector.load %arg4[%c0_5, %c0_6] : memref<32x32xbf16, #tpu.memory_space<vmem>>, vector<32x32xbf16>
    tpu.vector_store %arg4[%c0_5, %c0_6], %10 {strides = array<i32>} : memref<32x32xbf16, #tpu.memory_space<vmem>>, vector<32x32xbf16>,
    return
  }
  func.func @transform_0(%arg0: i32) -> (i32, i32) {
    %c0_i32 = arith.constant 0 : i32
    %c0_i32_0 = arith.constant 0 : i32
    return %c0_i32, %arg0 : i32, i32
  }
  func.func @transform_1(%arg0: i32) -> (i32, i32) {
    %c0_i32 = arith.constant 0 : i32
    %c0_i32_0 = arith.constant 0 : i32
    %c0_i32_1 = arith.constant 0 : i32
    return %c0_i32, %c0_i32_0 : i32, i32
  }
  func.func @transform_2(%arg0: i32) -> (i32, i32) {
    %c0_i32 = arith.constant 0 : i32
    %c0_i32_0 = arith.constant 0 : i32
    %c0_i32_1 = arith.constant 0 : i32
    return %c0_i32, %c0_i32_0 : i32, i32
  }
  func.func @transform_3(%arg0: i32) -> (i32, i32) {
    %c0_i32 = arith.constant 0 : i32
    %c0_i32_0 = arith.constant 0 : i32
    return %c0_i32, %arg0 : i32, i32
  }
}

module attributes {stable_mosaic.version = 11 : i64} {
  func.func @_gemm_stats_kernel(%arg0: i32, %arg1: memref<32x288xbf16, #tpu.memory_space<vmem>>, %arg2: memref<288x32xbf16, #tpu.memory_space<vmem>>, %arg3: memref<32x32xbf16, #tpu.memory_space<vmem>>, %arg4: memref<1x32x1xf32, #tpu.memory_space<vmem>>, %arg5: memref<1x32x1xf32, #tpu.memory_space<vmem>>) attributes {dimension_semantics = [#tpu.dimension_semantics<parallel>], iteration_bounds = array<i64: 1>, scalar_prefetch = 0 : i64, scratch_operands = 0 : i64, tpu.core_type = #tpu.core_type<tc>, window_params = [{pipeline_mode = #tpu.pipeline_mode<synchronous>, transform_indices = @transform_0, window_bounds = array<i64: 32, 288>}, {transform_indices = @transform_1, window_bounds = array<i64: 288, 32>}, {transform_indices = @transform_2, window_bounds = array<i64: 32, 32>}, {transform_indices = @transform_3, window_bounds = array<i64: 1, 32, 1>}, {transform_indices = @transform_4, window_bounds = array<i64: 1, 32, 1>}]} {
    %c0 = arith.constant 0 : index
    %c0_0 = arith.constant 0 : index
    %0 = vector.load %arg1[%c0, %c0_0] : memref<32x288xbf16, #tpu.memory_space<vmem>>, vector<32x288xbf16>
    %c0_1 = arith.constant 0 : index
    %c0_2 = arith.constant 0 : index
    %1 = vector.load %arg2[%c0_1, %c0_2] : memref<288x32xbf16, #tpu.memory_space<vmem>>, vector<288x32xbf16>
    %cst = arith.constant dense<0.000000e+00> : vector<32x32xf32>
    %2 = tpu.matmul %0, %1, %cst {dimension_numbers = #tpu.dot_dimension_numbers<[1], [0], [0], [1], [0, 0, 1, 1], [], []>} : vector<32x288xbf16>, vector<288x32xbf16>, vector<32x32xf32> -> vector<32x32xf32>
    %3 = arith.truncf %2 : vector<32x32xf32> to vector<32x32xbf16>
    %c0_3 = arith.constant 0 : index
    %c0_4 = arith.constant 0 : index
    %4 = vector.load %arg3[%c0_3, %c0_4] : memref<32x32xbf16, #tpu.memory_space<vmem>>, vector<32x32xbf16>
    tpu.vector_store %arg3[%c0_3, %c0_4], %3 {strides = array<i32>} : memref<32x32xbf16, #tpu.memory_space<vmem>>, vector<32x32xbf16>,
    %cst_5 = arith.constant dense<0.000000e+00> : vector<32xf32>
    %5 = vector.multi_reduction <add>, %2, %cst_5 [1] : vector<32x32xf32> to vector<32xf32>
    %6 = vector.shape_cast %5 : vector<32xf32> to vector<32x1xf32>
    %7 = vector.shape_cast %6 : vector<32x1xf32> to vector<1x32x1xf32>
    %c0_6 = arith.constant 0 : index
    %c0_7 = arith.constant 0 : index
    %c0_8 = arith.constant 0 : index
    %8 = vector.load %arg4[%c0_6, %c0_7, %c0_8] : memref<1x32x1xf32, #tpu.memory_space<vmem>>, vector<1x32x1xf32>
    tpu.vector_store %arg4[%c0_6, %c0_7, %c0_8], %7 {strides = array<i32>} : memref<1x32x1xf32, #tpu.memory_space<vmem>>, vector<1x32x1xf32>,
    %9 = arith.mulf %2, %2 : vector<32x32xf32>
    %cst_9 = arith.constant dense<0.000000e+00> : vector<32xf32>
    %10 = vector.multi_reduction <add>, %9, %cst_9 [1] : vector<32x32xf32> to vector<32xf32>
    %11 = vector.shape_cast %10 : vector<32xf32> to vector<32x1xf32>
    %12 = vector.shape_cast %11 : vector<32x1xf32> to vector<1x32x1xf32>
    %c0_10 = arith.constant 0 : index
    %c0_11 = arith.constant 0 : index
    %c0_12 = arith.constant 0 : index
    %13 = vector.load %arg5[%c0_10, %c0_11, %c0_12] : memref<1x32x1xf32, #tpu.memory_space<vmem>>, vector<1x32x1xf32>
    tpu.vector_store %arg5[%c0_10, %c0_11, %c0_12], %12 {strides = array<i32>} : memref<1x32x1xf32, #tpu.memory_space<vmem>>, vector<1x32x1xf32>,
    return
  }
  func.func @transform_0(%arg0: i32) -> (i32, i32) {
    %c0_i32 = arith.constant 0 : i32
    %c0_i32_0 = arith.constant 0 : i32
    %c0_i32_1 = arith.constant 0 : i32
    return %c0_i32, %c0_i32_0 : i32, i32
  }
  func.func @transform_1(%arg0: i32) -> (i32, i32) {
    %c0_i32 = arith.constant 0 : i32
    %c0_i32_0 = arith.constant 0 : i32
    return %c0_i32, %arg0 : i32, i32
  }
  func.func @transform_2(%arg0: i32) -> (i32, i32) {
    %c0_i32 = arith.constant 0 : i32
    %c0_i32_0 = arith.constant 0 : i32
    return %c0_i32, %arg0 : i32, i32
  }
  func.func @transform_3(%arg0: i32) -> (i32, i32, i32) {
    %c0_i32 = arith.constant 0 : i32
    %c0_i32_0 = arith.constant 0 : i32
    %c0_i32_1 = arith.constant 0 : i32
    return %arg0, %c0_i32, %c0_i32_0 : i32, i32, i32
  }
  func.func @transform_4(%arg0: i32) -> (i32, i32, i32) {
    %c0_i32 = arith.constant 0 : i32
    %c0_i32_0 = arith.constant 0 : i32
    %c0_i32_1 = arith.constant 0 : i32
    return %arg0, %c0_i32, %c0_i32_0 : i32, i32, i32
  }
}

module attributes {stable_mosaic.version = 11 : i64} {
  func.func @_affine_kernel(%arg0: i32, %arg1: memref<32x32xbf16, #tpu.memory_space<vmem>>, %arg2: memref<32x1xf32, #tpu.memory_space<vmem>>, %arg3: memref<32x1xf32, #tpu.memory_space<vmem>>, %arg4: memref<32x32xbf16, #tpu.memory_space<vmem>>, %arg5: memref<32x32xbf16, #tpu.memory_space<vmem>>) attributes {dimension_semantics = [#tpu.dimension_semantics<parallel>], iteration_bounds = array<i64: 1>, scalar_prefetch = 0 : i64, scratch_operands = 0 : i64, tpu.core_type = #tpu.core_type<tc>, window_params = [{transform_indices = @transform_0, window_bounds = array<i64: 32, 32>}, {pipeline_mode = #tpu.pipeline_mode<synchronous>, transform_indices = @transform_1, window_bounds = array<i64: 32, 1>}, {pipeline_mode = #tpu.pipeline_mode<synchronous>, transform_indices = @transform_2, window_bounds = array<i64: 32, 1>}, {transform_indices = @transform_3, window_bounds = array<i64: 32, 32>}, {transform_indices = @transform_4, window_bounds = array<i64: 32, 32>}]} {
    %c0 = arith.constant 0 : index
    %c0_0 = arith.constant 0 : index
    %0 = vector.load %arg1[%c0, %c0_0] : memref<32x32xbf16, #tpu.memory_space<vmem>>, vector<32x32xbf16>
    %1 = arith.extf %0 : vector<32x32xbf16> to vector<32x32xf32>
    %c0_1 = arith.constant 0 : index
    %c0_2 = arith.constant 0 : index
    %2 = vector.load %arg2[%c0_1, %c0_2] : memref<32x1xf32, #tpu.memory_space<vmem>>, vector<32x1xf32>
    %3 = vector.broadcast %2 : vector<32x1xf32> to vector<32x32xf32>
    %4 = arith.mulf %1, %3 : vector<32x32xf32>
    %c0_3 = arith.constant 0 : index
    %c0_4 = arith.constant 0 : index
    %5 = vector.load %arg3[%c0_3, %c0_4] : memref<32x1xf32, #tpu.memory_space<vmem>>, vector<32x1xf32>
    %6 = vector.broadcast %5 : vector<32x1xf32> to vector<32x32xf32>
    %7 = arith.addf %4, %6 : vector<32x32xf32>
    %c0_5 = arith.constant 0 : index
    %c0_6 = arith.constant 0 : index
    %8 = vector.load %arg4[%c0_5, %c0_6] : memref<32x32xbf16, #tpu.memory_space<vmem>>, vector<32x32xbf16>
    %9 = arith.extf %8 : vector<32x32xbf16> to vector<32x32xf32>
    %10 = arith.addf %7, %9 : vector<32x32xf32>
    %11 = arith.truncf %10 : vector<32x32xf32> to vector<32x32xbf16>
    %c0_7 = arith.constant 0 : index
    %c0_8 = arith.constant 0 : index
    %12 = vector.load %arg5[%c0_7, %c0_8] : memref<32x32xbf16, #tpu.memory_space<vmem>>, vector<32x32xbf16>
    tpu.vector_store %arg5[%c0_7, %c0_8], %11 {strides = array<i32>} : memref<32x32xbf16, #tpu.memory_space<vmem>>, vector<32x32xbf16>,
    return
  }
  func.func @transform_0(%arg0: i32) -> (i32, i32) {
    %c0_i32 = arith.constant 0 : i32
    %c0_i32_0 = arith.constant 0 : i32
    return %c0_i32, %arg0 : i32, i32
  }
  func.func @transform_1(%arg0: i32) -> (i32, i32) {
    %c0_i32 = arith.constant 0 : i32
    %c0_i32_0 = arith.constant 0 : i32
    %c0_i32_1 = arith.constant 0 : i32
    return %c0_i32, %c0_i32_0 : i32, i32
  }
  func.func @transform_2(%arg0: i32) -> (i32, i32) {
    %c0_i32 = arith.constant 0 : i32
    %c0_i32_0 = arith.constant 0 : i32
    %c0_i32_1 = arith.constant 0 : i32
    return %c0_i32, %c0_i32_0 : i32, i32
  }
  func.func @transform_3(%arg0: i32) -> (i32, i32) {
    %c0_i32 = arith.constant 0 : i32
    %c0_i32_0 = arith.constant 0 : i32
    return %c0_i32, %arg0 : i32, i32
  }
  func.func @transform_4(%arg0: i32) -> (i32, i32) {
    %c0_i32 = arith.constant 0 : i32
    %c0_i32_0 = arith.constant 0 : i32
    return %c0_i32, %arg0 : i32, i32
  }
}

module attributes {stable_mosaic.version = 11 : i64} {
  func.func @_gemm_stats_kernel(%arg0: i32, %arg1: memref<64x128xbf16, #tpu.memory_space<vmem>>, %arg2: memref<128x32xbf16, #tpu.memory_space<vmem>>, %arg3: memref<64x32xbf16, #tpu.memory_space<vmem>>, %arg4: memref<1x64x1xf32, #tpu.memory_space<vmem>>, %arg5: memref<1x64x1xf32, #tpu.memory_space<vmem>>) attributes {dimension_semantics = [#tpu.dimension_semantics<parallel>], iteration_bounds = array<i64: 1>, scalar_prefetch = 0 : i64, scratch_operands = 0 : i64, tpu.core_type = #tpu.core_type<tc>, window_params = [{pipeline_mode = #tpu.pipeline_mode<synchronous>, transform_indices = @transform_0, window_bounds = array<i64: 64, 128>}, {transform_indices = @transform_1, window_bounds = array<i64: 128, 32>}, {transform_indices = @transform_2, window_bounds = array<i64: 64, 32>}, {transform_indices = @transform_3, window_bounds = array<i64: 1, 64, 1>}, {transform_indices = @transform_4, window_bounds = array<i64: 1, 64, 1>}]} {
    %c0 = arith.constant 0 : index
    %c0_0 = arith.constant 0 : index
    %0 = vector.load %arg1[%c0, %c0_0] : memref<64x128xbf16, #tpu.memory_space<vmem>>, vector<64x128xbf16>
    %c0_1 = arith.constant 0 : index
    %c0_2 = arith.constant 0 : index
    %1 = vector.load %arg2[%c0_1, %c0_2] : memref<128x32xbf16, #tpu.memory_space<vmem>>, vector<128x32xbf16>
    %cst = arith.constant dense<0.000000e+00> : vector<64x32xf32>
    %2 = tpu.matmul %0, %1, %cst {dimension_numbers = #tpu.dot_dimension_numbers<[1], [0], [0], [1], [0, 0, 1, 1], [], []>} : vector<64x128xbf16>, vector<128x32xbf16>, vector<64x32xf32> -> vector<64x32xf32>
    %3 = arith.truncf %2 : vector<64x32xf32> to vector<64x32xbf16>
    %c0_3 = arith.constant 0 : index
    %c0_4 = arith.constant 0 : index
    %4 = vector.load %arg3[%c0_3, %c0_4] : memref<64x32xbf16, #tpu.memory_space<vmem>>, vector<64x32xbf16>
    tpu.vector_store %arg3[%c0_3, %c0_4], %3 {strides = array<i32>} : memref<64x32xbf16, #tpu.memory_space<vmem>>, vector<64x32xbf16>,
    %cst_5 = arith.constant dense<0.000000e+00> : vector<64xf32>
    %5 = vector.multi_reduction <add>, %2, %cst_5 [1] : vector<64x32xf32> to vector<64xf32>
    %6 = vector.shape_cast %5 : vector<64xf32> to vector<64x1xf32>
    %7 = vector.shape_cast %6 : vector<64x1xf32> to vector<1x64x1xf32>
    %c0_6 = arith.constant 0 : index
    %c0_7 = arith.constant 0 : index
    %c0_8 = arith.constant 0 : index
    %8 = vector.load %arg4[%c0_6, %c0_7, %c0_8] : memref<1x64x1xf32, #tpu.memory_space<vmem>>, vector<1x64x1xf32>
    tpu.vector_store %arg4[%c0_6, %c0_7, %c0_8], %7 {strides = array<i32>} : memref<1x64x1xf32, #tpu.memory_space<vmem>>, vector<1x64x1xf32>,
    %9 = arith.mulf %2, %2 : vector<64x32xf32>
    %cst_9 = arith.constant dense<0.000000e+00> : vector<64xf32>
    %10 = vector.multi_reduction <add>, %9, %cst_9 [1] : vector<64x32xf32> to vector<64xf32>
    %11 = vector.shape_cast %10 : vector<64xf32> to vector<64x1xf32>
    %12 = vector.shape_cast %11 : vector<64x1xf32> to vector<1x64x1xf32>
    %c0_10 = arith.constant 0 : index
    %c0_11 = arith.constant 0 : index
    %c0_12 = arith.constant 0 : index
    %13 = vector.load %arg5[%c0_10, %c0_11, %c0_12] : memref<1x64x1xf32, #tpu.memory_space<vmem>>, vector<1x64x1xf32>
    tpu.vector_store %arg5[%c0_10, %c0_11, %c0_12], %12 {strides = array<i32>} : memref<1x64x1xf32, #tpu.memory_space<vmem>>, vector<1x64x1xf32>,
    return
  }
  func.func @transform_0(%arg0: i32) -> (i32, i32) {
    %c0_i32 = arith.constant 0 : i32
    %c0_i32_0 = arith.constant 0 : i32
    %c0_i32_1 = arith.constant 0 : i32
    return %c0_i32, %c0_i32_0 : i32, i32
  }
  func.func @transform_1(%arg0: i32) -> (i32, i32) {
    %c0_i32 = arith.constant 0 : i32
    %c0_i32_0 = arith.constant 0 : i32
    return %c0_i32, %arg0 : i32, i32
  }
  func.func @transform_2(%arg0: i32) -> (i32, i32) {
    %c0_i32 = arith.constant 0 : i32
    %c0_i32_0 = arith.constant 0 : i32
    return %c0_i32, %arg0 : i32, i32
  }
  func.func @transform_3(%arg0: i32) -> (i32, i32, i32) {
    %c0_i32 = arith.constant 0 : i32
    %c0_i32_0 = arith.constant 0 : i32
    %c0_i32_1 = arith.constant 0 : i32
    return %arg0, %c0_i32, %c0_i32_0 : i32, i32, i32
  }
  func.func @transform_4(%arg0: i32) -> (i32, i32, i32) {
    %c0_i32 = arith.constant 0 : i32
    %c0_i32_0 = arith.constant 0 : i32
    %c0_i32_1 = arith.constant 0 : i32
    return %arg0, %c0_i32, %c0_i32_0 : i32, i32, i32
  }
}

module attributes {stable_mosaic.version = 11 : i64} {
  func.func @_affine_kernel(%arg0: i32, %arg1: memref<64x32xbf16, #tpu.memory_space<vmem>>, %arg2: memref<64x1xf32, #tpu.memory_space<vmem>>, %arg3: memref<64x1xf32, #tpu.memory_space<vmem>>, %arg4: memref<64x32xbf16, #tpu.memory_space<vmem>>) attributes {dimension_semantics = [#tpu.dimension_semantics<parallel>], iteration_bounds = array<i64: 1>, scalar_prefetch = 0 : i64, scratch_operands = 0 : i64, tpu.core_type = #tpu.core_type<tc>, window_params = [{transform_indices = @transform_0, window_bounds = array<i64: 64, 32>}, {pipeline_mode = #tpu.pipeline_mode<synchronous>, transform_indices = @transform_1, window_bounds = array<i64: 64, 1>}, {pipeline_mode = #tpu.pipeline_mode<synchronous>, transform_indices = @transform_2, window_bounds = array<i64: 64, 1>}, {transform_indices = @transform_3, window_bounds = array<i64: 64, 32>}]} {
    %c0 = arith.constant 0 : index
    %c0_0 = arith.constant 0 : index
    %0 = vector.load %arg1[%c0, %c0_0] : memref<64x32xbf16, #tpu.memory_space<vmem>>, vector<64x32xbf16>
    %1 = arith.extf %0 : vector<64x32xbf16> to vector<64x32xf32>
    %c0_1 = arith.constant 0 : index
    %c0_2 = arith.constant 0 : index
    %2 = vector.load %arg2[%c0_1, %c0_2] : memref<64x1xf32, #tpu.memory_space<vmem>>, vector<64x1xf32>
    %3 = vector.broadcast %2 : vector<64x1xf32> to vector<64x32xf32>
    %4 = arith.mulf %1, %3 : vector<64x32xf32>
    %c0_3 = arith.constant 0 : index
    %c0_4 = arith.constant 0 : index
    %5 = vector.load %arg3[%c0_3, %c0_4] : memref<64x1xf32, #tpu.memory_space<vmem>>, vector<64x1xf32>
    %6 = vector.broadcast %5 : vector<64x1xf32> to vector<64x32xf32>
    %7 = arith.addf %4, %6 : vector<64x32xf32>
    %cst = arith.constant 0.000000e+00 : f32
    %8 = vector.broadcast %cst : f32 to vector<64x32xf32>
    %9 = arith.maximumf %7, %8 : vector<64x32xf32>
    %10 = arith.truncf %9 : vector<64x32xf32> to vector<64x32xbf16>
    %c0_5 = arith.constant 0 : index
    %c0_6 = arith.constant 0 : index
    %11 = vector.load %arg4[%c0_5, %c0_6] : memref<64x32xbf16, #tpu.memory_space<vmem>>, vector<64x32xbf16>
    tpu.vector_store %arg4[%c0_5, %c0_6], %10 {strides = array<i32>} : memref<64x32xbf16, #tpu.memory_space<vmem>>, vector<64x32xbf16>,
    return
  }
  func.func @transform_0(%arg0: i32) -> (i32, i32) {
    %c0_i32 = arith.constant 0 : i32
    %c0_i32_0 = arith.constant 0 : i32
    return %c0_i32, %arg0 : i32, i32
  }
  func.func @transform_1(%arg0: i32) -> (i32, i32) {
    %c0_i32 = arith.constant 0 : i32
    %c0_i32_0 = arith.constant 0 : i32
    %c0_i32_1 = arith.constant 0 : i32
    return %c0_i32, %c0_i32_0 : i32, i32
  }
  func.func @transform_2(%arg0: i32) -> (i32, i32) {
    %c0_i32 = arith.constant 0 : i32
    %c0_i32_0 = arith.constant 0 : i32
    %c0_i32_1 = arith.constant 0 : i32
    return %c0_i32, %c0_i32_0 : i32, i32
  }
  func.func @transform_3(%arg0: i32) -> (i32, i32) {
    %c0_i32 = arith.constant 0 : i32
    %c0_i32_0 = arith.constant 0 : i32
    return %c0_i32, %arg0 : i32, i32
  }
}

module attributes {stable_mosaic.version = 11 : i64} {
  func.func @_gemm_stats_kernel(%arg0: i32, %arg1: memref<32x64xbf16, #tpu.memory_space<vmem>>, %arg2: memref<64x128xbf16, #tpu.memory_space<vmem>>, %arg3: memref<32x128xbf16, #tpu.memory_space<vmem>>, %arg4: memref<1x32x1xf32, #tpu.memory_space<vmem>>, %arg5: memref<1x32x1xf32, #tpu.memory_space<vmem>>) attributes {dimension_semantics = [#tpu.dimension_semantics<parallel>], iteration_bounds = array<i64: 1>, scalar_prefetch = 0 : i64, scratch_operands = 0 : i64, tpu.core_type = #tpu.core_type<tc>, window_params = [{pipeline_mode = #tpu.pipeline_mode<synchronous>, transform_indices = @transform_0, window_bounds = array<i64: 32, 64>}, {transform_indices = @transform_1, window_bounds = array<i64: 64, 128>}, {transform_indices = @transform_2, window_bounds = array<i64: 32, 128>}, {transform_indices = @transform_3, window_bounds = array<i64: 1, 32, 1>}, {transform_indices = @transform_4, window_bounds = array<i64: 1, 32, 1>}]} {
    %c0 = arith.constant 0 : index
    %c0_0 = arith.constant 0 : index
    %0 = vector.load %arg1[%c0, %c0_0] : memref<32x64xbf16, #tpu.memory_space<vmem>>, vector<32x64xbf16>
    %c0_1 = arith.constant 0 : index
    %c0_2 = arith.constant 0 : index
    %1 = vector.load %arg2[%c0_1, %c0_2] : memref<64x128xbf16, #tpu.memory_space<vmem>>, vector<64x128xbf16>
    %cst = arith.constant dense<0.000000e+00> : vector<32x128xf32>
    %2 = tpu.matmul %0, %1, %cst {dimension_numbers = #tpu.dot_dimension_numbers<[1], [0], [0], [1], [0, 0, 1, 1], [], []>} : vector<32x64xbf16>, vector<64x128xbf16>, vector<32x128xf32> -> vector<32x128xf32>
    %3 = arith.truncf %2 : vector<32x128xf32> to vector<32x128xbf16>
    %c0_3 = arith.constant 0 : index
    %c0_4 = arith.constant 0 : index
    %4 = vector.load %arg3[%c0_3, %c0_4] : memref<32x128xbf16, #tpu.memory_space<vmem>>, vector<32x128xbf16>
    tpu.vector_store %arg3[%c0_3, %c0_4], %3 {strides = array<i32>} : memref<32x128xbf16, #tpu.memory_space<vmem>>, vector<32x128xbf16>,
    %cst_5 = arith.constant dense<0.000000e+00> : vector<32xf32>
    %5 = vector.multi_reduction <add>, %2, %cst_5 [1] : vector<32x128xf32> to vector<32xf32>
    %6 = vector.shape_cast %5 : vector<32xf32> to vector<32x1xf32>
    %7 = vector.shape_cast %6 : vector<32x1xf32> to vector<1x32x1xf32>
    %c0_6 = arith.constant 0 : index
    %c0_7 = arith.constant 0 : index
    %c0_8 = arith.constant 0 : index
    %8 = vector.load %arg4[%c0_6, %c0_7, %c0_8] : memref<1x32x1xf32, #tpu.memory_space<vmem>>, vector<1x32x1xf32>
    tpu.vector_store %arg4[%c0_6, %c0_7, %c0_8], %7 {strides = array<i32>} : memref<1x32x1xf32, #tpu.memory_space<vmem>>, vector<1x32x1xf32>,
    %9 = arith.mulf %2, %2 : vector<32x128xf32>
    %cst_9 = arith.constant dense<0.000000e+00> : vector<32xf32>
    %10 = vector.multi_reduction <add>, %9, %cst_9 [1] : vector<32x128xf32> to vector<32xf32>
    %11 = vector.shape_cast %10 : vector<32xf32> to vector<32x1xf32>
    %12 = vector.shape_cast %11 : vector<32x1xf32> to vector<1x32x1xf32>
    %c0_10 = arith.constant 0 : index
    %c0_11 = arith.constant 0 : index
    %c0_12 = arith.constant 0 : index
    %13 = vector.load %arg5[%c0_10, %c0_11, %c0_12] : memref<1x32x1xf32, #tpu.memory_space<vmem>>, vector<1x32x1xf32>
    tpu.vector_store %arg5[%c0_10, %c0_11, %c0_12], %12 {strides = array<i32>} : memref<1x32x1xf32, #tpu.memory_space<vmem>>, vector<1x32x1xf32>,
    return
  }
  func.func @transform_0(%arg0: i32) -> (i32, i32) {
    %c0_i32 = arith.constant 0 : i32
    %c0_i32_0 = arith.constant 0 : i32
    %c0_i32_1 = arith.constant 0 : i32
    return %c0_i32, %c0_i32_0 : i32, i32
  }
  func.func @transform_1(%arg0: i32) -> (i32, i32) {
    %c0_i32 = arith.constant 0 : i32
    %c0_i32_0 = arith.constant 0 : i32
    return %c0_i32, %arg0 : i32, i32
  }
  func.func @transform_2(%arg0: i32) -> (i32, i32) {
    %c0_i32 = arith.constant 0 : i32
    %c0_i32_0 = arith.constant 0 : i32
    return %c0_i32, %arg0 : i32, i32
  }
  func.func @transform_3(%arg0: i32) -> (i32, i32, i32) {
    %c0_i32 = arith.constant 0 : i32
    %c0_i32_0 = arith.constant 0 : i32
    %c0_i32_1 = arith.constant 0 : i32
    return %arg0, %c0_i32, %c0_i32_0 : i32, i32, i32
  }
  func.func @transform_4(%arg0: i32) -> (i32, i32, i32) {
    %c0_i32 = arith.constant 0 : i32
    %c0_i32_0 = arith.constant 0 : i32
    %c0_i32_1 = arith.constant 0 : i32
    return %arg0, %c0_i32, %c0_i32_0 : i32, i32, i32
  }
}

module attributes {stable_mosaic.version = 11 : i64} {
  func.func @_affine_kernel(%arg0: i32, %arg1: memref<32x128xbf16, #tpu.memory_space<vmem>>, %arg2: memref<32x1xf32, #tpu.memory_space<vmem>>, %arg3: memref<32x1xf32, #tpu.memory_space<vmem>>, %arg4: memref<32x128xbf16, #tpu.memory_space<vmem>>) attributes {dimension_semantics = [#tpu.dimension_semantics<parallel>], iteration_bounds = array<i64: 1>, scalar_prefetch = 0 : i64, scratch_operands = 0 : i64, tpu.core_type = #tpu.core_type<tc>, window_params = [{transform_indices = @transform_0, window_bounds = array<i64: 32, 128>}, {pipeline_mode = #tpu.pipeline_mode<synchronous>, transform_indices = @transform_1, window_bounds = array<i64: 32, 1>}, {pipeline_mode = #tpu.pipeline_mode<synchronous>, transform_indices = @transform_2, window_bounds = array<i64: 32, 1>}, {transform_indices = @transform_3, window_bounds = array<i64: 32, 128>}]} {
    %c0 = arith.constant 0 : index
    %c0_0 = arith.constant 0 : index
    %0 = vector.load %arg1[%c0, %c0_0] : memref<32x128xbf16, #tpu.memory_space<vmem>>, vector<32x128xbf16>
    %1 = arith.extf %0 : vector<32x128xbf16> to vector<32x128xf32>
    %c0_1 = arith.constant 0 : index
    %c0_2 = arith.constant 0 : index
    %2 = vector.load %arg2[%c0_1, %c0_2] : memref<32x1xf32, #tpu.memory_space<vmem>>, vector<32x1xf32>
    %3 = vector.broadcast %2 : vector<32x1xf32> to vector<32x128xf32>
    %4 = arith.mulf %1, %3 : vector<32x128xf32>
    %c0_3 = arith.constant 0 : index
    %c0_4 = arith.constant 0 : index
    %5 = vector.load %arg3[%c0_3, %c0_4] : memref<32x1xf32, #tpu.memory_space<vmem>>, vector<32x1xf32>
    %6 = vector.broadcast %5 : vector<32x1xf32> to vector<32x128xf32>
    %7 = arith.addf %4, %6 : vector<32x128xf32>
    %cst = arith.constant 0.000000e+00 : f32
    %8 = vector.broadcast %cst : f32 to vector<32x128xf32>
    %9 = arith.maximumf %7, %8 : vector<32x128xf32>
    %10 = arith.truncf %9 : vector<32x128xf32> to vector<32x128xbf16>
    %c0_5 = arith.constant 0 : index
    %c0_6 = arith.constant 0 : index
    %11 = vector.load %arg4[%c0_5, %c0_6] : memref<32x128xbf16, #tpu.memory_space<vmem>>, vector<32x128xbf16>
    tpu.vector_store %arg4[%c0_5, %c0_6], %10 {strides = array<i32>} : memref<32x128xbf16, #tpu.memory_space<vmem>>, vector<32x128xbf16>,
    return
  }
  func.func @transform_0(%arg0: i32) -> (i32, i32) {
    %c0_i32 = arith.constant 0 : i32
    %c0_i32_0 = arith.constant 0 : i32
    return %c0_i32, %arg0 : i32, i32
  }
  func.func @transform_1(%arg0: i32) -> (i32, i32) {
    %c0_i32 = arith.constant 0 : i32
    %c0_i32_0 = arith.constant 0 : i32
    %c0_i32_1 = arith.constant 0 : i32
    return %c0_i32, %c0_i32_0 : i32, i32
  }
  func.func @transform_2(%arg0: i32) -> (i32, i32) {
    %c0_i32 = arith.constant 0 : i32
    %c0_i32_0 = arith.constant 0 : i32
    %c0_i32_1 = arith.constant 0 : i32
    return %c0_i32, %c0_i32_0 : i32, i32
  }
  func.func @transform_3(%arg0: i32) -> (i32, i32) {
    %c0_i32 = arith.constant 0 : i32
    %c0_i32_0 = arith.constant 0 : i32
    return %c0_i32, %arg0 : i32, i32
  }
}

module attributes {stable_mosaic.version = 11 : i64} {
  func.func @_gemm_epilogue_kernel(%arg0: i32, %arg1: memref<3x400xbf16, #tpu.memory_space<vmem>>, %arg2: memref<400x256xbf16, #tpu.memory_space<vmem>>, %arg3: memref<3x1xf32, #tpu.memory_space<vmem>>, %arg4: memref<3x256xf32, #tpu.memory_space<vmem>>, %arg5: memref<3x256xf32, #tpu.memory_space<vmem>>) attributes {dimension_semantics = [#tpu.dimension_semantics<parallel>], iteration_bounds = array<i64: 2>, scalar_prefetch = 0 : i64, scratch_operands = 0 : i64, tpu.core_type = #tpu.core_type<tc>, window_params = [{pipeline_mode = #tpu.pipeline_mode<synchronous>, transform_indices = @transform_0, window_bounds = array<i64: 3, 400>}, {transform_indices = @transform_1, window_bounds = array<i64: 400, 256>}, {pipeline_mode = #tpu.pipeline_mode<synchronous>, transform_indices = @transform_2, window_bounds = array<i64: 3, 1>}, {transform_indices = @transform_3, window_bounds = array<i64: 3, 256>}, {transform_indices = @transform_4, window_bounds = array<i64: 3, 256>}]} {
    %c0 = arith.constant 0 : index
    %c0_0 = arith.constant 0 : index
    %0 = vector.load %arg1[%c0, %c0_0] : memref<3x400xbf16, #tpu.memory_space<vmem>>, vector<3x400xbf16>
    %c0_1 = arith.constant 0 : index
    %c0_2 = arith.constant 0 : index
    %1 = vector.load %arg2[%c0_1, %c0_2] : memref<400x256xbf16, #tpu.memory_space<vmem>>, vector<400x256xbf16>
    %cst = arith.constant dense<0.000000e+00> : vector<3x256xf32>
    %2 = tpu.matmul %0, %1, %cst {dimension_numbers = #tpu.dot_dimension_numbers<[1], [0], [0], [1], [0, 0, 1, 1], [], []>} : vector<3x400xbf16>, vector<400x256xbf16>, vector<3x256xf32> -> vector<3x256xf32>
    %c0_3 = arith.constant 0 : index
    %c0_4 = arith.constant 0 : index
    %3 = vector.load %arg3[%c0_3, %c0_4] : memref<3x1xf32, #tpu.memory_space<vmem>>, vector<3x1xf32>
    %4 = vector.broadcast %3 : vector<3x1xf32> to vector<3x256xf32>
    %5 = arith.addf %2, %4 : vector<3x256xf32>
    %c0_5 = arith.constant 0 : index
    %c0_6 = arith.constant 0 : index
    %6 = vector.load %arg4[%c0_5, %c0_6] : memref<3x256xf32, #tpu.memory_space<vmem>>, vector<3x256xf32>
    %7 = arith.addf %5, %6 : vector<3x256xf32>
    %c0_7 = arith.constant 0 : index
    %c0_8 = arith.constant 0 : index
    %8 = vector.load %arg5[%c0_7, %c0_8] : memref<3x256xf32, #tpu.memory_space<vmem>>, vector<3x256xf32>
    tpu.vector_store %arg5[%c0_7, %c0_8], %7 {strides = array<i32>} : memref<3x256xf32, #tpu.memory_space<vmem>>, vector<3x256xf32>,
    return
  }
  func.func @transform_0(%arg0: i32) -> (i32, i32) {
    %c0_i32 = arith.constant 0 : i32
    %c0_i32_0 = arith.constant 0 : i32
    %c0_i32_1 = arith.constant 0 : i32
    return %c0_i32, %c0_i32_0 : i32, i32
  }
  func.func @transform_1(%arg0: i32) -> (i32, i32) {
    %c0_i32 = arith.constant 0 : i32
    %c0_i32_0 = arith.constant 0 : i32
    return %c0_i32, %arg0 : i32, i32
  }
  func.func @transform_2(%arg0: i32) -> (i32, i32) {
    %c0_i32 = arith.constant 0 : i32
    %c0_i32_0 = arith.constant 0 : i32
    %c0_i32_1 = arith.constant 0 : i32
    return %c0_i32, %c0_i32_0 : i32, i32
  }
  func.func @transform_3(%arg0: i32) -> (i32, i32) {
    %c0_i32 = arith.constant 0 : i32
    %c0_i32_0 = arith.constant 0 : i32
    return %c0_i32, %arg0 : i32, i32
  }
  func.func @transform_4(%arg0: i32) -> (i32, i32) {
    %c0_i32 = arith.constant 0 : i32
    %c0_i32_0 = arith.constant 0 : i32
    return %c0_i32, %arg0 : i32, i32
  }
}

</mosaic_0001>

<llo_original>
// kernel: resnet_generator_forward.20
$region0: #{resnet_generator_forward.20}
  #allocation0 [shape = 'u32[]', space=smem, size = 0x4, offset = 0x4, fixed_abs, tag = 'smem constant byte address 0x4 - core index']
  #allocation1 [shape = 'u32[144,128]{1,0:T(1,128)}', space=vmem, size = 0x12000, scoped, tag = 'internal scratch']
  %s0 = inlined_call_operand.vmem [shape: bf16[8,512], index: 0, kind: input, shape index: {}]
  %s1 = inlined_call_operand.vmem [shape: f32[8,1], index: 1, kind: input, shape index: {}]
  %s2 = inlined_call_operand.vmem [shape: f32[8,1], index: 2, kind: input, shape index: {}]
  %s3 = inlined_call_operand.vmem [shape: bf16[8,512], index: 3, kind: output, shape index: {}]
  %s4 = sld [smem:[#allocation0]]
  $region45: #{resnet_generator_forward.20} parent=0
    _
  %s6 = ssub.s32 1, %s4
  %s7 = scalar_select 0, %s6, %s4
  loop: start=0, step=1, limit=4
  $region2: #{resnet_generator_forward.20} parent=0 // loop_pre_header
    _
  $region3: #{resnet_generator_forward.20} parent=0 // loop_header
    %s9 = sphi 0, %s13
    %p10 = scmp.ge.s32.totalorder %s9, 4
    %s19 = sphi 0, %s21
    %s22 = sphi 0, %s19
    %s23 = sphi 0, %s22
    %s39 = sphi 0, %s23
    %s43 = sphi 0, %s43
    %s45 = sphi 0, %s43
    %s46 = sphi 0, %s45
    %s60 = sphi 0, %s46
    %s64 = sphi 0, %s64
    %s66 = sphi 0, %s64
    %s67 = sphi 0, %s66
    %s81 = sphi 0, %s67
    %s87 = sphi 0, %s89
    %s90 = sphi 0, %s87
    %s91 = sphi 0, %s90
    %s107 = sphi 0, %s91
  $region4: #{resnet_generator_forward.20} parent=0 // loop_header_branch
    %12 = sbr.rel (%p10) target = $region8
  $region5: #{resnet_generator_forward.20} parent=0 // loop_body
    %s14 = ssub.s32 %s9, 1
    %s15 = ssub.s32 %s9, 2
    %s16 = sadd.s32 %s9, 1
    %s17 = ssub.s32 %s9, %s16
    %p18 = scmp.eq.s32.totalorder %s17, 0
    %s20 = sadd.s32 %s19, 1
    %s21 = scalar_select %p18, %s19, %s20
    %p24 = pneg %p18
    %p25 = scmp.eq.s32.totalorder %s9, 1
    %p26 = por %p24, %p25
    %p27 = scmp.ne.s32.totalorder %s19, %s22
    %p28 = scmp.eq.s32.totalorder %s9, 0
    %p29 = por %p27, %p28
    %p30 = scmp.ne.s32.totalorder %s19, %s22
    %p31 = scmp.eq.s32.totalorder %s14, 1
    %p32 = por %p30, %p31
    %p33 = scmp.ne.s32.totalorder %s22, %s23
    %p34 = scmp.eq.s32.totalorder %s14, 0
    %p35 = por %p33, %p34
    %p36 = scmp.ne.s32.totalorder %s22, %s23
    %p37 = scmp.eq.s32.totalorder %s15, 1
    %p38 = por %p36, %p37
    %p40 = scmp.ne.s32.totalorder %s23, %s39
    %p41 = scmp.eq.s32.totalorder %s15, 0
    %p42 = por %p40, %p41
    %s44 = sadd.s32 %s43, 1
    %p47 = scmp.eq.s32.totalorder %s9, 1
    %p48 = scmp.ne.s32.totalorder %s43, %s45
    %p49 = scmp.eq.s32.totalorder %s9, 0
    %p50 = por %p48, %p49
    %p51 = scmp.ne.s32.totalorder %s43, %s45
    %p52 = scmp.eq.s32.totalorder %s14, 1
    %p53 = por %p51, %p52
    %p54 = scmp.ne.s32.totalorder %s45, %s46
    %p55 = scmp.eq.s32.totalorder %s14, 0
    %p56 = por %p54, %p55
    %p57 = scmp.ne.s32.totalorder %s45, %s46
    %p58 = scmp.eq.s32.totalorder %s15, 1
    %p59 = por %p57, %p58
    %p61 = scmp.ne.s32.totalorder %s46, %s60
    %p62 = scmp.eq.s32.totalorder %s15, 0
    %p63 = por %p61, %p62
    %s65 = sadd.s32 %s64, 1
    %p68 = scmp.eq.s32.totalorder %s9, 1
    %p69 = scmp.ne.s32.totalorder %s64, %s66
    %p70 = scmp.eq.s32.totalorder %s9, 0
    %p71 = por %p69, %p70
    %p72 = scmp.ne.s32.totalorder %s64, %s66
    %p73 = scmp.eq.s32.totalorder %s14, 1
    %p74 = por %p72, %p73
    %p75 = scmp.ne.s32.totalorder %s66, %s67
    %p76 = scmp.eq.s32.totalorder %s14, 0
    %p77 = por %p75, %p76
    %p78 = scmp.ne.s32.totalorder %s66, %s67
    %p79 = scmp.eq.s32.totalorder %s15, 1
    %p80 = por %p78, %p79
    %p82 = scmp.ne.s32.totalorder %s67, %s81
    %p83 = scmp.eq.s32.totalorder %s15, 0
    %p84 = por %p82, %p83
    %s85 = ssub.s32 %s9, %s16
    %p86 = scmp.eq.s32.totalorder %s85, 0
    %s88 = sadd.s32 %s87, 1
    %s89 = scalar_select %p86, %s87, %s88
    %p92 = pneg %p86
    %p93 = scmp.eq.s32.totalorder %s9, 1
    %p94 = por %p92, %p93
    %p95 = scmp.ne.s32.totalorder %s87, %s90
    %p96 = scmp.eq.s32.totalorder %s9, 0
    %p97 = por %p95, %p96
    %p98 = scmp.ne.s32.totalorder %s87, %s90
    %p99 = scmp.eq.s32.totalorder %s14, 1
    %p100 = por %p98, %p99
    %p101 = scmp.ne.s32.totalorder %s90, %s91
    %p102 = scmp.eq.s32.totalorder %s14, 0
    %p103 = por %p101, %p102
    %p104 = scmp.ne.s32.totalorder %s90, %s91
    %p105 = scmp.eq.s32.totalorder %s15, 1
    %p106 = por %p104, %p105
    %p108 = scmp.ne.s32.totalorder %s91, %s107
    %p109 = scmp.eq.s32.totalorder %s15, 0
    %p110 = por %p108, %p109
    %p111 = scmp.le.s32.totalorder 1, %s9
    %p112 = scmp.lt.s32.totalorder %s9, 3
    %p113 = pnand %p111, %p112
    %p114 = pneg %p113
    // Predicated region
    $region9: #{resnet_generator_forward.20} parent=5 // pred_check
      _
    $region10: #{resnet_generator_forward.20} parent=5 // pred_check_branch
      %116 = sbr.rel (%p113) target = $region12
    $region11: #{resnet_generator_forward.20} parent=5 // pred_region
      %s117 = ssub.s32 %s9, 1
      // Predicated region
      $region13: #{resnet_generator_forward.20} parent=11 // pred_check
        %p118 = pneg %p56
      $region14: #{resnet_generator_forward.20} parent=11 // pred_check_branch
        %120 = sbr.rel (%p118) target = $region16
      $region15: #{resnet_generator_forward.20} parent=11 // pred_region
        _
      $region16: #{resnet_generator_forward.20} parent=11 // pred_fallthru
        _
      // Predicated region
      $region17: #{resnet_generator_forward.20} parent=11 // pred_check
        %p121 = pneg %p77
      $region18: #{resnet_generator_forward.20} parent=11 // pred_check_branch
        %123 = sbr.rel (%p121) target = $region20
      $region19: #{resnet_generator_forward.20} parent=11 // pred_region
        _
      $region20: #{resnet_generator_forward.20} parent=11 // pred_fallthru
        _
    $region12: #{resnet_generator_forward.20} parent=5 // pred_fallthru
      _
    %p124 = scmp.lt.s32.totalorder %s9, 2
    // Predicated region
    $region21: #{resnet_generator_forward.20} parent=5 // pred_check
      %p125 = pneg %p124
    $region22: #{resnet_generator_forward.20} parent=5 // pred_check_branch
      %127 = sbr.rel (%p125) target = $region24
    $region23: #{resnet_generator_forward.20} parent=5 // pred_region
      // Predicated region
      $region25: #{resnet_generator_forward.20} parent=23 // pred_check
        %p128 = pneg %p29
      $region26: #{resnet_generator_forward.20} parent=23 // pred_check_branch
        %130 = sbr.rel (%p128) target = $region28
      $region27: #{resnet_generator_forward.20} parent=23 // pred_region
        %s131 = smul.u32 2, %s9
        %p132 = scmp.lt.s32.totalorder %s131, 3
        %s133 = scalar_select %p132, %s131, 3
        %s134 = smul.addr %s133, 4
        %s135 = scalar_lea.vmem %s0, %s134
        %s136 = smul.u32 2, %s9
      $region28: #{resnet_generator_forward.20} parent=23 // pred_fallthru
        _
    $region24: #{resnet_generator_forward.20} parent=5 // pred_fallthru
      _
    %p137 = scmp.le.s32.totalorder 1, %s9
    %p138 = scmp.lt.s32.totalorder %s9, 3
    %p139 = pnand %p137, %p138
    %p140 = pneg %p139
    // Predicated region
    $region29: #{resnet_generator_forward.20} parent=5 // pred_check
      _
    $region30: #{resnet_generator_forward.20} parent=5 // pred_check_branch
      %142 = sbr.rel (%p139) target = $region32
    $region31: #{resnet_generator_forward.20} parent=5 // pred_region
      %s143 = ssub.s32 %s9, 1
      %s144 = smul.u32 2, %s14
      %p145 = scmp.lt.s32.totalorder %s144, 3
      %s146 = scalar_select %p145, %s144, 3
      %s147 = smul.addr %s146, 4
      %s148 = scalar_lea.vmem %s0, %s147
      %p149 = pneg %p35
      %p150 = pneg %p32
      %p151 = pneg %p56
      %p152 = pneg %p53
      %p153 = pneg %p77
      %p154 = pneg %p74
      %p155 = pneg %p103
      %p156 = pneg %p100
      %s157 = smul.u32 2, %s14
      %p158 = scmp.lt.s32.totalorder %s157, 3
      %s159 = scalar_select %p158, %s157, 3
      %s160 = smul.addr %s159, 4
      %s161 = scalar_lea.vmem %s3, %s160
      %s162 = smul.u32 2, %s14
      %p163 = scmp.lt.s32.totalorder %s162, 3
      %s164 = scalar_select %p163, %s162, 3
      %s165 = smul.addr %s164, 4
      %s166 = scalar_lea.vmem %s0, %s165
      %s167 = smul.u32 2, %s14
      %s168 = smul.u32 2, %s14
      %p169 = scmp.lt.s32.totalorder %s168, 3
      %s170 = scalar_select %p169, %s168, 3
      %s171 = smul.addr %s170, 4
      %s172 = scalar_lea.vmem %s3, %s171
      %s173 = smul.u32 2, %s14
      %v174 = vld [vmem:[%s166] sm:$0xff]
      %v175 = vunpack.c.l.bf16 %v174
      %v176 = vunpack.c.h.bf16 %v174
      %v177 = vld [vmem:[%s1] sm:$0xff]
      %179 = vset.pattern.permute.xlu0 0
      %180 = vperm.xlu0 %179, %v177
      %v181 = vpop.permute.xlu0 %180
      %v183 = vmul.f32 %v175, %v181
      %v184 = vmul.f32 %v176, %v181
      %v185 = vld [vmem:[%s2] sm:$0xff]
      %187 = vset.pattern.permute.xlu0 0
      %188 = vperm.xlu0 %187, %v185
      %v189 = vpop.permute.xlu0 %188
      %v191 = vadd.f32 %v183, %v189
      %v192 = vadd.f32 %v184, %v189
      %v193 = vmax.f32 %v191, 0.0
      %v194 = vmax.f32 %v192, 0.0
      %v195 = vpack.c.bf16 %v193, %v193
      %v196 = vpack.c.bf16 %v194, %v194
      %v199 = vunpack.c.l.b16 %v195
      %v200 = vunpack.c.l.b16 %v196
      %v201 = vpack.c.b16 %v200, %v199
      %203 = vst [vmem:[%s172] sm:$0xff] %v201
      %s204 = smul.u32 2, %s14
      %p205 = scmp.lt.s32.totalorder %s204, 3
      %s206 = scalar_select %p205, %s204, 3
      %s207 = smul.addr %s206, 4
      %s208 = scalar_lea.vmem %s3, %s207
      // Predicated region
      $region33: #{resnet_generator_forward.20} parent=31 // pred_check
        %p209 = pneg %p100
      $region34: #{resnet_generator_forward.20} parent=31 // pred_check_branch
        %211 = sbr.rel (%p209) target = $region36
      $region35: #{resnet_generator_forward.20} parent=31 // pred_region
        %s212 = smul.u32 2, %s14
      $region36: #{resnet_generator_forward.20} parent=31 // pred_fallthru
        _
    $region32: #{resnet_generator_forward.20} parent=5 // pred_fallthru
      _
    %p213 = scmp.le.s32.totalorder 2, %s9
    // Predicated region
    $region37: #{resnet_generator_forward.20} parent=5 // pred_check
      %p214 = pneg %p213
    $region38: #{resnet_generator_forward.20} parent=5 // pred_check_branch
      %216 = sbr.rel (%p214) target = $region40
    $region39: #{resnet_generator_forward.20} parent=5 // pred_region
      %s217 = ssub.s32 %s9, 2
      // Predicated region
      $region41: #{resnet_generator_forward.20} parent=39 // pred_check
        %p218 = pneg %p106
      $region42: #{resnet_generator_forward.20} parent=39 // pred_check_branch
        %220 = sbr.rel (%p218) target = $region44
      $region43: #{resnet_generator_forward.20} parent=39 // pred_region
        %s221 = smul.u32 2, %s15
        %p222 = scmp.lt.s32.totalorder %s221, 3
        %s223 = scalar_select %p222, %s221, 3
        %s224 = smul.addr %s223, 4
        %s225 = scalar_lea.vmem %s3, %s224
      $region44: #{resnet_generator_forward.20} parent=39 // pred_fallthru
        _
    $region40: #{resnet_generator_forward.20} parent=5 // pred_fallthru
      _
  $region6: #{resnet_generator_forward.20} parent=0 // loop_footer
    %s13 = sadd.s32 1, %s9
  $region7: #{resnet_generator_forward.20} parent=0 // loop_footer_branch
    %8 = sbr.rel target = $region3
  $region8: #{resnet_generator_forward.20} parent=0 // loop_exit
    _

// kernel: resnet_generator_forward.19
$region0: #{resnet_generator_forward.19}
  #allocation0 [shape = 'u32[]', space=smem, size = 0x4, offset = 0x4, fixed_abs, tag = 'smem constant byte address 0x4 - core index']
  #allocation1 [shape = 'u32[144,128]{1,0:T(1,128)}', space=vmem, size = 0x12000, scoped, tag = 'internal scratch']
  %s0 = inlined_call_operand.vmem [shape: bf16[8,160], index: 0, kind: input, shape index: {}]
  %s1 = inlined_call_operand.vmem [shape: bf16[160,512], index: 1, kind: input, shape index: {}]
  %s2 = inlined_call_operand.vmem [shape: bf16[8,512], index: 2, kind: output, shape index: {0}]
  %s3 = inlined_call_operand.vmem [shape: f32[2,8,1], index: 3, kind: output, shape index: {1}]
  %s4 = inlined_call_operand.vmem [shape: f32[2,8,1], index: 4, kind: output, shape index: {2}]
  %5 = xla_tuple %s2, %s3, %s4
  %s6 = sld [smem:[#allocation0]]
  $region95: #{resnet_generator_forward.19} parent=0
    _
  %s8 = ssub.s32 1, %s6
  %s9 = scalar_select 0, %s8, %s6
  $region1: #{resnet_generator_forward.19} parent=0
    #allocation2 [shape = 'u8[163840]{0}', space=vmem, size = 0x28000, scoped, tag = 'input window, operand 1']
    loop: start=0, step=1, limit=4
    $region2: #{resnet_generator_forward.19} parent=1 // loop_pre_header
      _
    $region3: #{resnet_generator_forward.19} parent=1 // loop_header
      %s11 = sphi 0, %s15
      %p12 = scmp.ge.s32.totalorder %s11, 4
      %s19 = sphi 0, %s19
      %s21 = sphi 0, %s19
      %s22 = sphi 0, %s21
      %s36 = sphi 0, %s22
      %s42 = sphi 0, %s44
      %s45 = sphi 0, %s42
      %s46 = sphi 0, %s45
      %s62 = sphi 0, %s46
      %s68 = sphi 0, %s70
      %s71 = sphi 0, %s68
      %s72 = sphi 0, %s71
      %s88 = sphi 0, %s72
      %s94 = sphi 0, %s96
      %s97 = sphi 0, %s94
      %s98 = sphi 0, %s97
      %s114 = sphi 0, %s98
      %s120 = sphi 0, %s122
      %s123 = sphi 0, %s120
      %s124 = sphi 0, %s123
      %s140 = sphi 0, %s124
    $region4: #{resnet_generator_forward.19} parent=1 // loop_header_branch
      %14 = sbr.rel (%p12) target = $region8
    $region5: #{resnet_generator_forward.19} parent=1 // loop_body
      %s16 = ssub.s32 %s11, 1
      %s17 = ssub.s32 %s11, 2
      %s18 = sadd.s32 %s11, 1
      %s20 = sadd.s32 %s19, 1
      %p23 = scmp.eq.s32.totalorder %s11, 1
      %p24 = scmp.ne.s32.totalorder %s19, %s21
      %p25 = scmp.eq.s32.totalorder %s11, 0
      %p26 = por %p24, %p25
      %p27 = scmp.ne.s32.totalorder %s19, %s21
      %p28 = scmp.eq.s32.totalorder %s16, 1
      %p29 = por %p27, %p28
      %p30 = scmp.ne.s32.totalorder %s21, %s22
      %p31 = scmp.eq.s32.totalorder %s16, 0
      %p32 = por %p30, %p31
      %p33 = scmp.ne.s32.totalorder %s21, %s22
      %p34 = scmp.eq.s32.totalorder %s17, 1
      %p35 = por %p33, %p34
      %p37 = scmp.ne.s32.totalorder %s22, %s36
      %p38 = scmp.eq.s32.totalorder %s17, 0
      %p39 = por %p37, %p38
      %s40 = ssub.s32 %s11, %s18
      %p41 = scmp.eq.s32.totalorder %s40, 0
      %s43 = sadd.s32 %s42, 1
      %s44 = scalar_select %p41, %s42, %s43
      %p47 = pneg %p41
      %p48 = scmp.eq.s32.totalorder %s11, 1
      %p49 = por %p47, %p48
      %p50 = scmp.ne.s32.totalorder %s42, %s45
      %p51 = scmp.eq.s32.totalorder %s11, 0
      %p52 = por %p50, %p51
      %p53 = scmp.ne.s32.totalorder %s42, %s45
      %p54 = scmp.eq.s32.totalorder %s16, 1
      %p55 = por %p53, %p54
      %p56 = scmp.ne.s32.totalorder %s45, %s46
      %p57 = scmp.eq.s32.totalorder %s16, 0
      %p58 = por %p56, %p57
      %p59 = scmp.ne.s32.totalorder %s45, %s46
      %p60 = scmp.eq.s32.totalorder %s17, 1
      %p61 = por %p59, %p60
      %p63 = scmp.ne.s32.totalorder %s46, %s62
      %p64 = scmp.eq.s32.totalorder %s17, 0
      %p65 = por %p63, %p64
      %s66 = ssub.s32 %s11, %s18
      %p67 = scmp.eq.s32.totalorder %s66, 0
      %s69 = sadd.s32 %s68, 1
      %s70 = scalar_select %p67, %s68, %s69
      %p73 = pneg %p67
      %p74 = scmp.eq.s32.totalorder %s11, 1
      %p75 = por %p73, %p74
      %p76 = scmp.ne.s32.totalorder %s68, %s71
      %p77 = scmp.eq.s32.totalorder %s11, 0
      %p78 = por %p76, %p77
      %p79 = scmp.ne.s32.totalorder %s68, %s71
      %p80 = scmp.eq.s32.totalorder %s16, 1
      %p81 = por %p79, %p80
      %p82 = scmp.ne.s32.totalorder %s71, %s72
      %p83 = scmp.eq.s32.totalorder %s16, 0
      %p84 = por %p82, %p83
      %p85 = scmp.ne.s32.totalorder %s71, %s72
      %p86 = scmp.eq.s32.totalorder %s17, 1
      %p87 = por %p85, %p86
      %p89 = scmp.ne.s32.totalorder %s72, %s88
      %p90 = scmp.eq.s32.totalorder %s17, 0
      %p91 = por %p89, %p90
      %s92 = ssub.s32 %s11, %s18
      %p93 = scmp.eq.s32.totalorder %s92, 0
      %s95 = sadd.s32 %s94, 1
      %s96 = scalar_select %p93, %s94, %s95
      %p99 = pneg %p93
      %p100 = scmp.eq.s32.totalorder %s11, 1
      %p101 = por %p99, %p100
      %p102 = scmp.ne.s32.totalorder %s94, %s97
      %p103 = scmp.eq.s32.totalorder %s11, 0
      %p104 = por %p102, %p103
      %p105 = scmp.ne.s32.totalorder %s94, %s97
      %p106 = scmp.eq.s32.totalorder %s16, 1
      %p107 = por %p105, %p106
      %p108 = scmp.ne.s32.totalorder %s97, %s98
      %p109 = scmp.eq.s32.totalorder %s16, 0
      %p110 = por %p108, %p109
      %p111 = scmp.ne.s32.totalorder %s97, %s98
      %p112 = scmp.eq.s32.totalorder %s17, 1
      %p113 = por %p111, %p112
      %p115 = scmp.ne.s32.totalorder %s98, %s114
      %p116 = scmp.eq.s32.totalorder %s17, 0
      %p117 = por %p115, %p116
      %s118 = ssub.s32 %s11, %s18
      %p119 = scmp.eq.s32.totalorder %s118, 0
      %s121 = sadd.s32 %s120, 1
      %s122 = scalar_select %p119, %s120, %s121
      %p125 = pneg %p119
      %p126 = scmp.eq.s32.totalorder %s11, 1
      %p127 = por %p125, %p126
      %p128 = scmp.ne.s32.totalorder %s120, %s123
      %p129 = scmp.eq.s32.totalorder %s11, 0
      %p130 = por %p128, %p129
      %p131 = scmp.ne.s32.totalorder %s120, %s123
      %p132 = scmp.eq.s32.totalorder %s16, 1
      %p133 = por %p131, %p132
      %p134 = scmp.ne.s32.totalorder %s123, %s124
      %p135 = scmp.eq.s32.totalorder %s16, 0
      %p136 = por %p134, %p135
      %p137 = scmp.ne.s32.totalorder %s123, %s124
      %p138 = scmp.eq.s32.totalorder %s17, 1
      %p139 = por %p137, %p138
      %p141 = scmp.ne.s32.totalorder %s124, %s140
      %p142 = scmp.eq.s32.totalorder %s17, 0
      %p143 = por %p141, %p142
      %p144 = scmp.le.s32.totalorder 1, %s11
      %p145 = scmp.lt.s32.totalorder %s11, 3
      %p146 = pnand %p144, %p145
      %p147 = pneg %p146
      // Predicated region
      $region9: #{resnet_generator_forward.19} parent=5 // pred_check
        _
      $region10: #{resnet_generator_forward.19} parent=5 // pred_check_branch
        %149 = sbr.rel (%p146) target = $region12
      $region11: #{resnet_generator_forward.19} parent=5 // pred_region
        %s150 = ssub.s32 %s11, 1
        // Predicated region
        $region13: #{resnet_generator_forward.19} parent=11 // pred_check
          %p151 = pneg %p32
        $region14: #{resnet_generator_forward.19} parent=11 // pred_check_branch
          %153 = sbr.rel (%p151) target = $region16
        $region15: #{resnet_generator_forward.19} parent=11 // pred_region
          _
        $region16: #{resnet_generator_forward.19} parent=11 // pred_fallthru
          _
      $region12: #{resnet_generator_forward.19} parent=5 // pred_fallthru
        _
      %p154 = scmp.lt.s32.totalorder %s11, 2
      // Predicated region
      $region17: #{resnet_generator_forward.19} parent=5 // pred_check
        %p155 = pneg %p154
      $region18: #{resnet_generator_forward.19} parent=5 // pred_check_branch
        %157 = sbr.rel (%p155) target = $region20
      $region19: #{resnet_generator_forward.19} parent=5 // pred_region
        // Predicated region
        $region21: #{resnet_generator_forward.19} parent=19 // pred_check
          %p158 = pneg %p52
        $region22: #{resnet_generator_forward.19} parent=19 // pred_check_branch
          %160 = sbr.rel (%p158) target = $region24
        $region23: #{resnet_generator_forward.19} parent=19 // pred_region
          %s161 = sand.u32 %s42, 1
          %s162 = sand.u32 %s42, 1
          %s163 = smul.addr %s162, 160
          %s164 = scalar_lea.vmem [#allocation2], %s163
          %s165 = smul.u32 2, %s11
          %s166 = smul.addr %s165, 4
          %s167 = scalar_lea.vmem %s1, %s166
          // Predicated region
          $region25: #{resnet_generator_forward.19} parent=23 // pred_check
            _
          $region26: #{resnet_generator_forward.19} parent=23 // pred_check_branch
            %169 = sbr.rel (0) target = $region28
          $region27: #{resnet_generator_forward.19} parent=23 // pred_region
            // Predicated region
            $region29: #{resnet_generator_forward.19} parent=27 // pred_check
              _
            $region30: #{resnet_generator_forward.19} parent=27 // pred_check_branch
              %171 = sbr.rel (0) target = $region32
            $region31: #{resnet_generator_forward.19} parent=27 // pred_region
              // Predicated region
              $region44: #{resnet_generator_forward.19} parent=31 // pred_check
                _
              $region45: #{resnet_generator_forward.19} parent=31 // pred_check_branch
                %224 = sbr.rel (0) target = $region47
              $region46: #{resnet_generator_forward.19} parent=31 // pred_region
                loop: start=0, step=1, limit=1
                $region48: #{resnet_generator_forward.19} parent=46 // loop_pre_header
                  _
                $region49: #{resnet_generator_forward.19} parent=46 // loop_header
                  %s226 = sphi 0, %s230
                  %p227 = scmp.ge.s32.totalorder %s226, 1
                  %s231 = sphi %s167, %s167
                  %s232 = sphi %s164, %s164
                $region50: #{resnet_generator_forward.19} parent=46 // loop_header_branch
                  %229 = sbr.rel (%p227) target = $region54
                $region51: #{resnet_generator_forward.19} parent=46 // loop_body
                  %v233 = vld [vmem:[%s231] sm:$0xff]
                  %234 = vst [vmem:[%s232] sm:$0xff] %v233
                  %v235 = vld [vmem:[%s231 + $0x10] sm:$0xff]
                  %236 = vst [vmem:[%s232 + $0x8] sm:$0xff] %v235
                  %v237 = vld [vmem:[%s231 + $0x20] sm:$0xff]
                  %238 = vst [vmem:[%s232 + $0x10] sm:$0xff] %v237
                  %v239 = vld [vmem:[%s231 + $0x30] sm:$0xff]
                  %240 = vst [vmem:[%s232 + $0x18] sm:$0xff] %v239
                  %v241 = vld [vmem:[%s231 + $0x40] sm:$0xff]
                  %242 = vst [vmem:[%s232 + $0x20] sm:$0xff] %v241
                  %v243 = vld [vmem:[%s231 + $0x50] sm:$0xff]
                  %244 = vst [vmem:[%s232 + $0x28] sm:$0xff] %v243
                  %v245 = vld [vmem:[%s231 + $0x60] sm:$0xff]
                  %246 = vst [vmem:[%s232 + $0x30] sm:$0xff] %v245
                  %v247 = vld [vmem:[%s231 + $0x70] sm:$0xff]
                  %248 = vst [vmem:[%s232 + $0x38] sm:$0xff] %v247
                  %v249 = vld [vmem:[%s231 + $0x80] sm:$0xff]
                  %250 = vst [vmem:[%s232 + $0x40] sm:$0xff] %v249
                  %v251 = vld [vmem:[%s231 + $0x90] sm:$0xff]
                  %252 = vst [vmem:[%s232 + $0x48] sm:$0xff] %v251
                  %v253 = vld [vmem:[%s231 + $0xa0] sm:$0xff]
                  %254 = vst [vmem:[%s232 + $0x50] sm:$0xff] %v253
                  %v255 = vld [vmem:[%s231 + $0xb0] sm:$0xff]
                  %256 = vst [vmem:[%s232 + $0x58] sm:$0xff] %v255
                  %v257 = vld [vmem:[%s231 + $0xc0] sm:$0xff]
                  %258 = vst [vmem:[%s232 + $0x60] sm:$0xff] %v257
                  %v259 = vld [vmem:[%s231 + $0xd0] sm:$0xff]
                  %260 = vst [vmem:[%s232 + $0x68] sm:$0xff] %v259
                  %v261 = vld [vmem:[%s231 + $0xe0] sm:$0xff]
                  %262 = vst [vmem:[%s232 + $0x70] sm:$0xff] %v261
                  %v263 = vld [vmem:[%s231 + $0xf0] sm:$0xff]
                  %264 = vst [vmem:[%s232 + $0x78] sm:$0xff] %v263
                  %v265 = vld [vmem:[%s231 + $0x100] sm:$0xff]
                  %266 = vst [vmem:[%s232 + $0x80] sm:$0xff] %v265
                  %v267 = vld [vmem:[%s231 + $0x110] sm:$0xff]
                  %268 = vst [vmem:[%s232 + $0x88] sm:$0xff] %v267
                  %v269 = vld [vmem:[%s231 + $0x120] sm:$0xff]
                  %270 = vst [vmem:[%s232 + $0x90] sm:$0xff] %v269
                  %v271 = vld [vmem:[%s231 + $0x130] sm:$0xff]
                  %272 = vst [vmem:[%s232 + $0x98] sm:$0xff] %v271
                $region52: #{resnet_generator_forward.19} parent=46 // loop_footer
                  %s230 = sadd.s32 1, %s226
                $region53: #{resnet_generator_forward.19} parent=46 // loop_footer_branch
                  %225 = sbr.rel target = $region49
                $region54: #{resnet_generator_forward.19} parent=46 // loop_exit
                  _
              $region47: #{resnet_generator_forward.19} parent=31 // pred_fallthru
                _
              // Predicated region
              $region55: #{resnet_generator_forward.19} parent=31 // pred_check
                _
              $region56: #{resnet_generator_forward.19} parent=31 // pred_check_branch
                %274 = sbr.rel target = $region58
              $region57: #{resnet_generator_forward.19} parent=31 // pred_region
                _
              $region58: #{resnet_generator_forward.19} parent=31 // pred_fallthru
                _
            $region32: #{resnet_generator_forward.19} parent=27 // pred_fallthru
              _
            // Predicated region
            $region33: #{resnet_generator_forward.19} parent=27 // pred_check
              _
            $region34: #{resnet_generator_forward.19} parent=27 // pred_check_branch
              %173 = sbr.rel target = $region36
            $region35: #{resnet_generator_forward.19} parent=27 // pred_region
              loop: start=0, step=1, limit=1
              $region37: #{resnet_generator_forward.19} parent=35 // loop_pre_header
                _
              $region38: #{resnet_generator_forward.19} parent=35 // loop_header
                %s176 = sphi 0, %s180
                %p177 = scmp.ge.s32.totalorder %s176, 1
                %s181 = sphi %s167, %s167
                %s182 = sphi %s164, %s164
              $region39: #{resnet_generator_forward.19} parent=35 // loop_header_branch
                %179 = sbr.rel (%p177) target = $region43
              $region40: #{resnet_generator_forward.19} parent=35 // loop_body
                %v183 = vld [vmem:[%s181] sm:$0xff]
                %184 = vst [vmem:[%s182] sm:$0xff] %v183
                %v185 = vld [vmem:[%s181 + $0x10] sm:$0xff]
                %186 = vst [vmem:[%s182 + $0x8] sm:$0xff] %v185
                %v187 = vld [vmem:[%s181 + $0x20] sm:$0xff]
                %188 = vst [vmem:[%s182 + $0x10] sm:$0xff] %v187
                %v189 = vld [vmem:[%s181 + $0x30] sm:$0xff]
                %190 = vst [vmem:[%s182 + $0x18] sm:$0xff] %v189
                %v191 = vld [vmem:[%s181 + $0x40] sm:$0xff]
                %192 = vst [vmem:[%s182 + $0x20] sm:$0xff] %v191
                %v193 = vld [vmem:[%s181 + $0x50] sm:$0xff]
                %194 = vst [vmem:[%s182 + $0x28] sm:$0xff] %v193
                %v195 = vld [vmem:[%s181 + $0x60] sm:$0xff]
                %196 = vst [vmem:[%s182 + $0x30] sm:$0xff] %v195
                %v197 = vld [vmem:[%s181 + $0x70] sm:$0xff]
                %198 = vst [vmem:[%s182 + $0x38] sm:$0xff] %v197
                %v199 = vld [vmem:[%s181 + $0x80] sm:$0xff]
                %200 = vst [vmem:[%s182 + $0x40] sm:$0xff] %v199
                %v201 = vld [vmem:[%s181 + $0x90] sm:$0xff]
                %202 = vst [vmem:[%s182 + $0x48] sm:$0xff] %v201
                %v203 = vld [vmem:[%s181 + $0xa0] sm:$0xff]
                %204 = vst [vmem:[%s182 + $0x50] sm:$0xff] %v203
                %v205 = vld [vmem:[%s181 + $0xb0] sm:$0xff]
                %206 = vst [vmem:[%s182 + $0x58] sm:$0xff] %v205
                %v207 = vld [vmem:[%s181 + $0xc0] sm:$0xff]
                %208 = vst [vmem:[%s182 + $0x60] sm:$0xff] %v207
                %v209 = vld [vmem:[%s181 + $0xd0] sm:$0xff]
                %210 = vst [vmem:[%s182 + $0x68] sm:$0xff] %v209
                %v211 = vld [vmem:[%s181 + $0xe0] sm:$0xff]
                %212 = vst [vmem:[%s182 + $0x70] sm:$0xff] %v211
                %v213 = vld [vmem:[%s181 + $0xf0] sm:$0xff]
                %214 = vst [vmem:[%s182 + $0x78] sm:$0xff] %v213
                %v215 = vld [vmem:[%s181 + $0x100] sm:$0xff]
                %216 = vst [vmem:[%s182 + $0x80] sm:$0xff] %v215
                %v217 = vld [vmem:[%s181 + $0x110] sm:$0xff]
                %218 = vst [vmem:[%s182 + $0x88] sm:$0xff] %v217
                %v219 = vld [vmem:[%s181 + $0x120] sm:$0xff]
                %220 = vst [vmem:[%s182 + $0x90] sm:$0xff] %v219
                %v221 = vld [vmem:[%s181 + $0x130] sm:$0xff]
                %222 = vst [vmem:[%s182 + $0x98] sm:$0xff] %v221
              $region41: #{resnet_generator_forward.19} parent=35 // loop_footer
                %s180 = sadd.s32 1, %s176
              $region42: #{resnet_generator_forward.19} parent=35 // loop_footer_branch
                %175 = sbr.rel target = $region38
              $region43: #{resnet_generator_forward.19} parent=35 // loop_exit
                _
            $region36: #{resnet_generator_forward.19} parent=27 // pred_fallthru
              _
          $region28: #{resnet_generator_forward.19} parent=23 // pred_fallthru
            _
          %275 = vnop
        $region24: #{resnet_generator_forward.19} parent=19 // pred_fallthru
          _
      $region20: #{resnet_generator_forward.19} parent=5 // pred_fallthru
        _
      %p276 = scmp.le.s32.totalorder 1, %s11
      %p277 = scmp.lt.s32.totalorder %s11, 3
      %p278 = pnand %p276, %p277
      %p279 = pneg %p278
      // Predicated region
      $region59: #{resnet_generator_forward.19} parent=5 // pred_check
        _
      $region60: #{resnet_generator_forward.19} parent=5 // pred_check_branch
        %281 = sbr.rel (%p278) target = $region62
      $region61: #{resnet_generator_forward.19} parent=5 // pred_region
        %s282 = ssub.s32 %s11, 1
        %s283 = sand.u32 %s45, 1
        %s284 = sand.u32 %s45, 1
        %s285 = smul.addr %s284, 160
        %s286 = scalar_lea.vmem [#allocation2], %s285
        // Predicated region
        $region63: #{resnet_generator_forward.19} parent=61 // pred_check
          %p287 = pneg %p58
        $region64: #{resnet_generator_forward.19} parent=61 // pred_check_branch
          %289 = sbr.rel (%p287) target = $region66
        $region65: #{resnet_generator_forward.19} parent=61 // pred_region
          _
        $region66: #{resnet_generator_forward.19} parent=61 // pred_fallthru
          _
        %p290 = pneg %p32
        %p291 = pneg %p29
        %s292 = sand.u32 %s45, 1
        %s293 = sand.u32 %s45, 1
        %s294 = smul.addr %s293, 160
        %s295 = scalar_lea.vmem [#allocation2], %s294
        %p296 = pneg %p58
        %p297 = pneg %p55
        %p298 = pneg %p84
        %p299 = pneg %p81
        %s300 = smul.u32 2, %s16
        %p301 = scmp.lt.s32.totalorder %s300, 3
        %s302 = scalar_select %p301, %s300, 3
        %s303 = smul.addr %s302, 4
        %s304 = scalar_lea.vmem %s2, %s303
        %p305 = pneg %p110
        %p306 = pneg %p107
        %p307 = scmp.lt.s32.totalorder %s16, 1
        %s308 = scalar_select %p307, %s16, 1
        %s309 = smul.addr %s308, 8
        %s310 = scalar_lea.vmem %s3, %s309
        %p311 = pneg %p136
        %p312 = pneg %p133
        %p313 = scmp.lt.s32.totalorder %s16, 1
        %s314 = scalar_select %p313, %s16, 1
        %s315 = smul.addr %s314, 8
        %s316 = scalar_lea.vmem %s4, %s315
        %s317 = smul.u32 2, %s16
        %s318 = smul.u32 2, %s16
        %p319 = scmp.lt.s32.totalorder %s318, 3
        %s320 = scalar_select %p319, %s318, 3
        %s321 = smul.addr %s320, 4
        %s322 = scalar_lea.vmem %s2, %s321
        %s323 = smul.u32 2, %s16
        %p324 = scmp.lt.s32.totalorder %s16, 1
        %s325 = scalar_select %p324, %s16, 1
        %s326 = smul.addr %s325, 8
        %s327 = scalar_lea.vmem %s3, %s326
        %p328 = scmp.lt.s32.totalorder %s16, 1
        %s329 = scalar_select %p328, %s16, 1
        %s330 = smul.addr %s329, 8
        %s331 = scalar_lea.vmem %s4, %s330
        %v333 = vld [vmem:[%s0] sm:$0xff]
        %v334 = vld [vmem:[%s286] sm:$0xff]
        %v335 = vld [vmem:[%s286 + $0x8] sm:$0xff]
        %v336 = vld [vmem:[%s286 + $0x10] sm:$0xff]
        %v337 = vld [vmem:[%s286 + $0x18] sm:$0xff]
        %v338 = vld [vmem:[%s286 + $0x20] sm:$0xff]
        %v339 = vld [vmem:[%s286 + $0x28] sm:$0xff]
        %v340 = vld [vmem:[%s286 + $0x30] sm:$0xff]
        %v341 = vld [vmem:[%s286 + $0x38] sm:$0xff]
        %v342 = vld [vmem:[%s286 + $0x40] sm:$0xff]
        %v343 = vld [vmem:[%s286 + $0x48] sm:$0xff]
        %v344 = vld [vmem:[%s286 + $0x50] sm:$0xff]
        %v345 = vld [vmem:[%s286 + $0x58] sm:$0xff]
        %v346 = vld [vmem:[%s286 + $0x60] sm:$0xff]
        %v347 = vld [vmem:[%s286 + $0x68] sm:$0xff]
        %v348 = vld [vmem:[%s286 + $0x70] sm:$0xff]
        %v349 = vld [vmem:[%s286 + $0x78] sm:$0xff]
        %v350 = vld [vmem:[%s286 + $0x80] sm:$0xff]
        %v351 = vld [vmem:[%s286 + $0x88] sm:$0xff]
        %v352 = vld [vmem:[%s286 + $0x90] sm:$0xff]
        %v353 = vld [vmem:[%s286 + $0x98] sm:$0xff]
        %v355 = vunpack.c.l.b16 %v333
        %v356 = vunpack.c.h.b16 %v333
        %v357 = vpack.c.b16 %v355, %v355
        %v358 = vpack.c.b16 %v356, %v356
        %v380 = vunpack.c.l.b16 %v334
        %v381 = vunpack.c.h.b16 %v334
        %v382 = vunpack.c.l.b16 %v335
        %v383 = vunpack.c.h.b16 %v335
        %v384 = vunpack.c.l.b16 %v336
        %v385 = vunpack.c.h.b16 %v336
        %v386 = vunpack.c.l.b16 %v337
        %v387 = vunpack.c.h.b16 %v337
        %v388 = vunpack.c.l.b16 %v338
        %v389 = vunpack.c.h.b16 %v338
        %v390 = vunpack.c.l.b16 %v339
        %v391 = vunpack.c.h.b16 %v339
        %v392 = vunpack.c.l.b16 %v340
        %v393 = vunpack.c.h.b16 %v340
        %v394 = vunpack.c.l.b16 %v341
        %v395 = vunpack.c.h.b16 %v341
        %v396 = vunpack.c.l.b16 %v342
        %v397 = vunpack.c.h.b16 %v342
        %v398 = vunpack.c.l.b16 %v343
        %v399 = vunpack.c.h.b16 %v343
        %v400 = vunpack.c.l.b16 %v344
        %v401 = vunpack.c.h.b16 %v344
        %v402 = vunpack.c.l.b16 %v345
        %v403 = vunpack.c.h.b16 %v345
        %v404 = vunpack.c.l.b16 %v346
        %v405 = vunpack.c.h.b16 %v346
        %v406 = vunpack.c.l.b16 %v347
        %v407 = vunpack.c.h.b16 %v347
        %v408 = vunpack.c.l.b16 %v348
        %v409 = vunpack.c.h.b16 %v348
        %v410 = vunpack.c.l.b16 %v349
        %v411 = vunpack.c.h.b16 %v349
        %v412 = vunpack.c.l.b16 %v350
        %v413 = vunpack.c.h.b16 %v350
        %v414 = vunpack.c.l.b16 %v351
        %v415 = vunpack.c.h.b16 %v351
        %v416 = vunpack.c.l.b16 %v352
        %v417 = vunpack.c.h.b16 %v352
        %v418 = vunpack.c.l.b16 %v353
        %v419 = vunpack.c.h.b16 %v353
        %v420 = vpack.c.b16 %v382, %v380
        %v421 = vpack.c.b16 %v383, %v381
        %v422 = vpack.c.b16 %v386, %v384
        %v423 = vpack.c.b16 %v387, %v385
        %v424 = vpack.c.b16 %v390, %v388
        %v425 = vpack.c.b16 %v391, %v389
        %v426 = vpack.c.b16 %v394, %v392
        %v427 = vpack.c.b16 %v395, %v393
        %v428 = vpack.c.b16 %v398, %v396
        %v429 = vpack.c.b16 %v399, %v397
        %v430 = vpack.c.b16 %v402, %v400
        %v431 = vpack.c.b16 %v403, %v401
        %v432 = vpack.c.b16 %v406, %v404
        %v433 = vpack.c.b16 %v407, %v405
        %v434 = vpack.c.b16 %v410, %v408
        %v435 = vpack.c.b16 %v411, %v409
        %v436 = vpack.c.b16 %v414, %v412
        %v437 = vpack.c.b16 %v415, %v413
        %v438 = vpack.c.b16 %v418, %v416
        %v439 = vpack.c.b16 %v419, %v417
        %vm460 = vcmask 261120
        %v462 = vsel %vm460, %v358, 0
        %464 = vmatprep.subr.bf16.mxu0 %v421
        %465 = vmatpush1.bf16.msra.mxu0 %v420
        %466 = vmatprep.subr.bf16.mxu0 %v423
        %467 = vmatpush1.bf16.msra.mxu0 %v422
        %468 = vmatprep.subr.bf16.mxu0 %v425
        %469 = vmatpush1.bf16.msra.mxu0 %v424
        %470 = vmatprep.subr.bf16.mxu0 %v427
        %471 = vmatpush1.bf16.msra.mxu0 %v426
        %472 = vmatprep.subr.bf16.mxu0 %v429
        %473 = vmatpush1.bf16.msra.mxu0 %v428
        %474 = vmatprep.subr.bf16.mxu0 %v431
        %475 = vmatpush1.bf16.msra.mxu0 %v430
        %476 = vmatprep.subr.bf16.mxu0 %v433
        %477 = vmatpush1.bf16.msra.mxu0 %v432
        %478 = vmatprep.subr.bf16.mxu0 %v435
        %479 = vmatpush1.bf16.msra.mxu0 %v434
        %480 = vmatprep.subr.bf16.mxu0 %v437
        %481 = vmatpush1.bf16.msra.mxu0 %v436
        %482 = vmatprep.subr.bf16.mxu0 %v439
        %483 = vmatpush1.bf16.msra.mxu0 %v438
        %484 = vmatprep.subr.bf16.mxu0 0
        %485 = vmatpush1.bf16.msra.mxu0 0
        %486 = vmatprep.subr.bf16.mxu0 0
        %487 = vmatpush1.bf16.msra.mxu0 0
        %488 = vmatprep.subr.bf16.mxu0 0
        %489 = vmatpush1.bf16.msra.mxu0 0
        %490 = vmatprep.subr.bf16.mxu0 0
        %491 = vmatpush1.bf16.msra.mxu0 0
        %492 = vmatprep.subr.bf16.mxu0 0
        %493 = vmatpush1.bf16.msra.mxu0 0
        %494 = vmatprep.subr.bf16.mxu0 0
        %495 = vmatpush1.bf16.msra.mxu0 0
        %496 = vmatprep.mubr.bf16.mxu0 %v462
        %497 = vmatmul.mubr.bf16.gmra.mrb[0].mxu0 %v357
        %v498 = vpop.f32.mrb[0].mxu0
        %v499 = vadd.f32 0.0, %v498
        %v500 = vpop.f32.mrb[0].mxu0
        %v501 = vadd.f32 0.0, %v500
        %v502 = vpop.f32.mrb[0].mxu0
        %v503 = vpop.f32.mrb[0].mxu0
        %504 = vdwg.mxu0
        %v505 = vpack.c.bf16 %v499, %v499
        %v506 = vpack.c.bf16 %v501, %v501
        %v509 = vunpack.c.l.b16 %v505
        %v510 = vunpack.c.l.b16 %v506
        %v511 = vpack.c.b16 %v510, %v509
        %513 = vst [vmem:[%s322] sm:$0xff] %v511
        %v514 = vadd.f32 %v499, %v501
        %515 = vadd.xlane.f32.xlu0 %v514
        %v516 = vpop.xlane.xlu0 %515
        %vm517 = vcmask 7168
        %518 = vst.msk [vmem:[%s327] sm:$0xff] %vm517, %v516
        %v519 = vmul.f32 %v499, %v499
        %v520 = vmul.f32 %v501, %v501
        %v521 = vadd.f32 %v519, %v520
        %522 = vadd.xlane.f32.xlu0 %v521
        %v523 = vpop.xlane.xlu0 %522
        %524 = vst.msk [vmem:[%s331] sm:$0xff] %vm517, %v523
        %s525 = smul.u32 2, %s16
        %p526 = scmp.lt.s32.totalorder %s525, 3
        %s527 = scalar_select %p526, %s525, 3
        %s528 = smul.addr %s527, 4
        %s529 = scalar_lea.vmem %s2, %s528
        %p530 = scmp.lt.s32.totalorder %s16, 1
        %s531 = scalar_select %p530, %s16, 1
        %s532 = smul.addr %s531, 8
        %s533 = scalar_lea.vmem %s3, %s532
        %p534 = scmp.lt.s32.totalorder %s16, 1
        %s535 = scalar_select %p534, %s16, 1
        %s536 = smul.addr %s535, 8
        %s537 = scalar_lea.vmem %s4, %s536
        // Predicated region
        $region67: #{resnet_generator_forward.19} parent=61 // pred_check
          %p538 = pneg %p81
        $region68: #{resnet_generator_forward.19} parent=61 // pred_check_branch
          %540 = sbr.rel (%p538) target = $region70
        $region69: #{resnet_generator_forward.19} parent=61 // pred_region
          %s541 = smul.u32 2, %s16
        $region70: #{resnet_generator_forward.19} parent=61 // pred_fallthru
          _
        // Predicated region
        $region71: #{resnet_generator_forward.19} parent=61 // pred_check
          %p542 = pneg %p107
        $region72: #{resnet_generator_forward.19} parent=61 // pred_check_branch
          %544 = sbr.rel (%p542) target = $region74
        $region73: #{resnet_generator_forward.19} parent=61 // pred_region
          _
        $region74: #{resnet_generator_forward.19} parent=61 // pred_fallthru
          _
        // Predicated region
        $region75: #{resnet_generator_forward.19} parent=61 // pred_check
          %p545 = pneg %p133
        $region76: #{resnet_generator_forward.19} parent=61 // pred_check_branch
          %547 = sbr.rel (%p545) target = $region78
        $region77: #{resnet_generator_forward.19} parent=61 // pred_region
          _
        $region78: #{resnet_generator_forward.19} parent=61 // pred_fallthru
          _
      $region62: #{resnet_generator_forward.19} parent=5 // pred_fallthru
        _
      %p548 = scmp.le.s32.totalorder 2, %s11
      // Predicated region
      $region79: #{resnet_generator_forward.19} parent=5 // pred_check
        %p549 = pneg %p548
      $region80: #{resnet_generator_forward.19} parent=5 // pred_check_branch
        %551 = sbr.rel (%p549) target = $region82
      $region81: #{resnet_generator_forward.19} parent=5 // pred_region
        %s552 = ssub.s32 %s11, 2
        // Predicated region
        $region83: #{resnet_generator_forward.19} parent=81 // pred_check
          %p553 = pneg %p87
        $region84: #{resnet_generator_forward.19} parent=81 // pred_check_branch
          %555 = sbr.rel (%p553) target = $region86
        $region85: #{resnet_generator_forward.19} parent=81 // pred_region
          %s556 = smul.u32 2, %s17
          %p557 = scmp.lt.s32.totalorder %s556, 3
          %s558 = scalar_select %p557, %s556, 3
          %s559 = smul.addr %s558, 4
          %s560 = scalar_lea.vmem %s2, %s559
        $region86: #{resnet_generator_forward.19} parent=81 // pred_fallthru
          _
        // Predicated region
        $region87: #{resnet_generator_forward.19} parent=81 // pred_check
          %p561 = pneg %p113
        $region88: #{resnet_generator_forward.19} parent=81 // pred_check_branch
          %563 = sbr.rel (%p561) target = $region90
        $region89: #{resnet_generator_forward.19} parent=81 // pred_region
          %p564 = scmp.lt.s32.totalorder %s17, 1
          %s565 = scalar_select %p564, %s17, 1
          %s566 = smul.addr %s565, 8
          %s567 = scalar_lea.vmem %s3, %s566
        $region90: #{resnet_generator_forward.19} parent=81 // pred_fallthru
          _
        // Predicated region
        $region91: #{resnet_generator_forward.19} parent=81 // pred_check
          %p568 = pneg %p139
        $region92: #{resnet_generator_forward.19} parent=81 // pred_check_branch
          %570 = sbr.rel (%p568) target = $region94
        $region93: #{resnet_generator_forward.19} parent=81 // pred_region
          %p571 = scmp.lt.s32.totalorder %s17, 1
          %s572 = scalar_select %p571, %s17, 1
          %s573 = smul.addr %s572, 8
          %s574 = scalar_lea.vmem %s4, %s573
        $region94: #{resnet_generator_forward.19} parent=81 // pred_fallthru
          _
      $region82: #{resnet_generator_forward.19} parent=5 // pred_fallthru
        _
    $region6: #{resnet_generator_forward.19} parent=1 // loop_footer
      %s15 = sadd.s32 1, %s11
    $region7: #{resnet_generator_forward.19} parent=1 // loop_footer_branch
      %10 = sbr.rel target = $region3
    $region8: #{resnet_generator_forward.19} parent=1 // loop_exit
      _

// kernel: resnet_generator_forward.21
$region0: #{resnet_generator_forward.21}
  #allocation0 [shape = 'u32[]', space=smem, size = 0x4, offset = 0x4, fixed_abs, tag = 'smem constant byte address 0x4 - core index']
  #allocation1 [shape = 'u32[144,128]{1,0:T(1,128)}', space=vmem, size = 0x12000, scoped, tag = 'internal scratch']
  %s0 = inlined_call_operand.vmem [shape: bf16[16,80], index: 0, kind: input, shape index: {}]
  %s1 = inlined_call_operand.vmem [shape: bf16[80,128], index: 1, kind: input, shape index: {}]
  %s2 = inlined_call_operand.vmem [shape: bf16[16,128], index: 2, kind: output, shape index: {0}]
  %s3 = inlined_call_operand.vmem [shape: f32[1,16,1], index: 3, kind: output, shape index: {1}]
  %s4 = inlined_call_operand.vmem [shape: f32[1,16,1], index: 4, kind: output, shape index: {2}]
  %5 = xla_tuple %s2, %s3, %s4
  %s6 = sld [smem:[#allocation0]]
  $region34: #{resnet_generator_forward.21} parent=0
    _
  %s8 = ssub.s32 1, %s6
  %s9 = scalar_select 0, %s8, %s6
  // Predicated region
  $region2: #{resnet_generator_forward.21} parent=0 // pred_check
    _
  $region3: #{resnet_generator_forward.21} parent=0 // pred_check_branch
    %11 = sbr.rel (0) target = $region5
  $region4: #{resnet_generator_forward.21} parent=0 // pred_region
    _
  $region5: #{resnet_generator_forward.21} parent=0 // pred_fallthru
    _
  // Predicated region
  $region6: #{resnet_generator_forward.21} parent=0 // pred_check
    _
  $region7: #{resnet_generator_forward.21} parent=0 // pred_check_branch
    %13 = sbr.rel (0) target = $region9
  $region8: #{resnet_generator_forward.21} parent=0 // pred_region
    _
  $region9: #{resnet_generator_forward.21} parent=0 // pred_fallthru
    _
  %v15 = vld [vmem:[%s0] sm:$0xf]
  %v16 = vld [vmem:[%s0 + $0x4] sm:$0xf]
  %v17 = vld [vmem:[%s1] sm:$0xf]
  %v18 = vld [vmem:[%s1 + $0x4] sm:$0xf]
  %v19 = vld [vmem:[%s1 + $0x8] sm:$0xf]
  %v20 = vld [vmem:[%s1 + $0xc] sm:$0xf]
  %v21 = vld [vmem:[%s1 + $0x10] sm:$0xf]
  %v22 = vld [vmem:[%s1 + $0x14] sm:$0xf]
  %v23 = vld [vmem:[%s1 + $0x18] sm:$0xf]
  %v24 = vld [vmem:[%s1 + $0x1c] sm:$0xf]
  %v25 = vld [vmem:[%s1 + $0x20] sm:$0xf]
  %v26 = vld [vmem:[%s1 + $0x24] sm:$0xf]
  %v29 = vunpack.c.l.b16 %v15
  %v30 = vunpack.c.l.b16 %v16
  %v31 = vpack.c.b16 %v30, %v29
  %v42 = vunpack.c.l.b16 %v17
  %v43 = vunpack.c.l.b16 %v18
  %v44 = vunpack.c.l.b16 %v19
  %v45 = vunpack.c.l.b16 %v20
  %v46 = vunpack.c.l.b16 %v21
  %v47 = vunpack.c.l.b16 %v22
  %v48 = vunpack.c.l.b16 %v23
  %v49 = vunpack.c.l.b16 %v24
  %v50 = vunpack.c.l.b16 %v25
  %v51 = vunpack.c.l.b16 %v26
  %v52 = vpack.c.b16 %v43, %v42
  %v53 = vpack.c.b16 %v45, %v44
  %v54 = vpack.c.b16 %v47, %v46
  %v55 = vpack.c.b16 %v49, %v48
  %v56 = vpack.c.b16 %v51, %v50
  %vm62 = vcmask 654336
  %v64 = vsel %vm62, %v31, 0
  %66 = vmatprep.subr.bf16.mxu0 0
  %67 = vmatpush1.bf16.msra.mxu0 %v52
  %68 = vmatprep.subr.bf16.mxu0 0
  %69 = vmatpush1.bf16.msra.mxu0 %v53
  %70 = vmatprep.subr.bf16.mxu0 0
  %71 = vmatpush1.bf16.msra.mxu0 %v54
  %72 = vmatprep.subr.bf16.mxu0 0
  %73 = vmatpush1.bf16.msra.mxu0 %v55
  %74 = vmatprep.subr.bf16.mxu0 0
  %75 = vmatpush1.bf16.msra.mxu0 %v56
  %76 = vmatprep.subr.bf16.mxu0 0
  %77 = vmatpush1.bf16.msra.mxu0 0
  %78 = vmatprep.subr.bf16.mxu0 0
  %79 = vmatpush1.bf16.msra.mxu0 0
  %80 = vmatprep.subr.bf16.mxu0 0
  %81 = vmatpush1.bf16.msra.mxu0 0
  %82 = vmatprep.subr.bf16.mxu0 0
  %83 = vmatpush1.bf16.msra.mxu0 0
  %84 = vmatprep.subr.bf16.mxu0 0
  %85 = vmatpush1.bf16.msra.mxu0 0
  %86 = vmatprep.subr.bf16.mxu0 0
  %87 = vmatpush1.bf16.msra.mxu0 0
  %88 = vmatprep.subr.bf16.mxu0 0
  %89 = vmatpush1.bf16.msra.mxu0 0
  %90 = vmatprep.subr.bf16.mxu0 0
  %91 = vmatpush1.bf16.msra.mxu0 0
  %92 = vmatprep.subr.bf16.mxu0 0
  %93 = vmatpush1.bf16.msra.mxu0 0
  %94 = vmatprep.subr.bf16.mxu0 0
  %95 = vmatpush1.bf16.msra.mxu0 0
  %96 = vmatprep.subr.bf16.mxu0 0
  %97 = vmatpush1.bf16.msra.mxu0 0
  %98 = vmatprep.mubr.bf16.mxu0 0
  %99 = vmatmul.mubr.bf16.gmra.mrb[0].mxu0 %v64
  %v100 = vpop.f32.mrb[0].mxu0
  %v101 = vadd.f32 0.0, %v100
  %v102 = vpop.f32.mrb[0].mxu0
  %v103 = vpop.f32.mrb[0].mxu0
  %v104 = vadd.f32 0.0, %v103
  %v105 = vpop.f32.mrb[0].mxu0
  %106 = vdwg.mxu0
  %v107 = vpack.c.bf16 %v104, %v101
  %v109 = vunpack.c.l.b16 %v107
  %v110 = vunpack.c.h.b16 %v107
  %v111 = vpack.c.b16 %v109, %v109
  %v112 = vpack.c.b16 %v110, %v110
  %115 = vst [vmem:[%s2] sm:$0xf] %v111
  %116 = vst [vmem:[%s2 + $0x4] sm:$0xf] %v112
  %117 = vadd.xlane.f32.xlu0 %v101
  %v118 = vpop.xlane.xlu0 %117
  %119 = vadd.xlane.f32.xlu0 %v104
  %v120 = vpop.xlane.xlu0 %119
  %vm121 = vcmask 7168
  %122 = vst.msk [vmem:[%s3] sm:$0xff] %vm121, %v118
  %123 = vst.msk [vmem:[%s3 + $0x8] sm:$0xff] %vm121, %v120
  %v124 = vmul.f32 %v101, %v101
  %v125 = vmul.f32 %v104, %v104
  %126 = vadd.xlane.f32.xlu0 %v124
  %v127 = vpop.xlane.xlu0 %126
  %128 = vadd.xlane.f32.xlu0 %v125
  %v129 = vpop.xlane.xlu0 %128
  %130 = vst.msk [vmem:[%s4] sm:$0xff] %vm121, %v127
  %131 = vst.msk [vmem:[%s4 + $0x8] sm:$0xff] %vm121, %v129
  // Predicated region
  $region10: #{resnet_generator_forward.21} parent=0 // pred_check
    _
  $region11: #{resnet_generator_forward.21} parent=0 // pred_check_branch
    %133 = sbr.rel (0) target = $region13
  $region12: #{resnet_generator_forward.21} parent=0 // pred_region
    _
  $region13: #{resnet_generator_forward.21} parent=0 // pred_fallthru
    _
  // Predicated region
  $region14: #{resnet_generator_forward.21} parent=0 // pred_check
    _
  $region15: #{resnet_generator_forward.21} parent=0 // pred_check_branch
    %135 = sbr.rel (0) target = $region17
  $region16: #{resnet_generator_forward.21} parent=0 // pred_region
    _
  $region17: #{resnet_generator_forward.21} parent=0 // pred_fallthru
    _
  // Predicated region
  $region18: #{resnet_generator_forward.21} parent=0 // pred_check
    _
  $region19: #{resnet_generator_forward.21} parent=0 // pred_check_branch
    %137 = sbr.rel (0) target = $region21
  $region20: #{resnet_generator_forward.21} parent=0 // pred_region
    _
  $region21: #{resnet_generator_forward.21} parent=0 // pred_fallthru
    _
  // Predicated region
  $region22: #{resnet_generator_forward.21} parent=0 // pred_check
    _
  $region23: #{resnet_generator_forward.21} parent=0 // pred_check_branch
    %139 = sbr.rel (0) target = $region25
  $region24: #{resnet_generator_forward.21} parent=0 // pred_region
    _
  $region25: #{resnet_generator_forward.21} parent=0 // pred_fallthru
    _
  // Predicated region
  $region26: #{resnet_generator_forward.21} parent=0 // pred_check
    _
  $region27: #{resnet_generator_forward.21} parent=0 // pred_check_branch
    %141 = sbr.rel (0) target = $region29
  $region28: #{resnet_generator_forward.21} parent=0 // pred_region
    _
  $region29: #{resnet_generator_forward.21} parent=0 // pred_fallthru
    _
  // Predicated region
  $region30: #{resnet_generator_forward.21} parent=0 // pred_check
    _
  $region31: #{resnet_generator_forward.21} parent=0 // pred_check_branch
    %143 = sbr.rel (0) target = $region33
  $region32: #{resnet_generator_forward.21} parent=0 // pred_region
    _
  $region33: #{resnet_generator_forward.21} parent=0 // pred_fallthru
    _

// kernel: resnet_generator_forward.22
$region0: #{resnet_generator_forward.22}
  #allocation0 [shape = 'u32[]', space=smem, size = 0x4, offset = 0x4, fixed_abs, tag = 'smem constant byte address 0x4 - core index']
  #allocation1 [shape = 'u32[144,128]{1,0:T(1,128)}', space=vmem, size = 0x12000, scoped, tag = 'internal scratch']
  %s0 = inlined_call_operand.vmem [shape: bf16[16,128], index: 0, kind: input, shape index: {}]
  %s1 = inlined_call_operand.vmem [shape: f32[16,1], index: 1, kind: input, shape index: {}]
  %s2 = inlined_call_operand.vmem [shape: f32[16,1], index: 2, kind: input, shape index: {}]
  %s3 = inlined_call_operand.vmem [shape: bf16[16,128], index: 3, kind: output, shape index: {}]
  %s4 = sld [smem:[#allocation0]]
  $region22: #{resnet_generator_forward.22} parent=0
    _
  %s6 = ssub.s32 1, %s4
  %s7 = scalar_select 0, %s6, %s4
  // Predicated region
  $region2: #{resnet_generator_forward.22} parent=0 // pred_check
    _
  $region3: #{resnet_generator_forward.22} parent=0 // pred_check_branch
    %9 = sbr.rel (0) target = $region5
  $region4: #{resnet_generator_forward.22} parent=0 // pred_region
    _
  $region5: #{resnet_generator_forward.22} parent=0 // pred_fallthru
    _
  // Predicated region
  $region6: #{resnet_generator_forward.22} parent=0 // pred_check
    _
  $region7: #{resnet_generator_forward.22} parent=0 // pred_check_branch
    %11 = sbr.rel (0) target = $region9
  $region8: #{resnet_generator_forward.22} parent=0 // pred_region
    _
  $region9: #{resnet_generator_forward.22} parent=0 // pred_fallthru
    _
  // Predicated region
  $region10: #{resnet_generator_forward.22} parent=0 // pred_check
    _
  $region11: #{resnet_generator_forward.22} parent=0 // pred_check_branch
    %13 = sbr.rel (0) target = $region13
  $region12: #{resnet_generator_forward.22} parent=0 // pred_region
    _
  $region13: #{resnet_generator_forward.22} parent=0 // pred_fallthru
    _
  %v14 = vld [vmem:[%s0] sm:$0xf]
  %v15 = vld [vmem:[%s0 + $0x4] sm:$0xf]
  %v16 = vunpack.c.l.bf16 %v14
  %v17 = vunpack.c.l.bf16 %v15
  %v18 = vld [vmem:[%s1] sm:$0xff]
  %v19 = vld [vmem:[%s1 + $0x8] sm:$0xff]
  %21 = vset.pattern.permute.xlu0 0
  %22 = vperm.xlu0 %21, %v18
  %v23 = vpop.permute.xlu0 %22
  %26 = vset.pattern.permute.xlu0 0
  %27 = vperm.xlu0 %26, %v19
  %v28 = vpop.permute.xlu0 %27
  %v30 = vmul.f32 %v16, %v23
  %v31 = vmul.f32 %v17, %v28
  %v32 = vld [vmem:[%s2] sm:$0xff]
  %v33 = vld [vmem:[%s2 + $0x8] sm:$0xff]
  %35 = vset.pattern.permute.xlu0 0
  %36 = vperm.xlu0 %35, %v32
  %v37 = vpop.permute.xlu0 %36
  %40 = vset.pattern.permute.xlu0 0
  %41 = vperm.xlu0 %40, %v33
  %v42 = vpop.permute.xlu0 %41
  %v44 = vadd.f32 %v30, %v37
  %v45 = vadd.f32 %v31, %v42
  %v46 = vmax.f32 %v44, 0.0
  %v47 = vmax.f32 %v45, 0.0
  %v48 = vpack.c.bf16 %v47, %v46
  %v50 = vunpack.c.l.b16 %v48
  %v51 = vunpack.c.h.b16 %v48
  %v52 = vpack.c.b16 %v50, %v50
  %v53 = vpack.c.b16 %v51, %v51
  %56 = vst [vmem:[%s3] sm:$0xf] %v52
  %57 = vst [vmem:[%s3 + $0x4] sm:$0xf] %v53
  // Predicated region
  $region14: #{resnet_generator_forward.22} parent=0 // pred_check
    _
  $region15: #{resnet_generator_forward.22} parent=0 // pred_check_branch
    %59 = sbr.rel (0) target = $region17
  $region16: #{resnet_generator_forward.22} parent=0 // pred_region
    _
  $region17: #{resnet_generator_forward.22} parent=0 // pred_fallthru
    _
  // Predicated region
  $region18: #{resnet_generator_forward.22} parent=0 // pred_check
    _
  $region19: #{resnet_generator_forward.22} parent=0 // pred_check_branch
    %61 = sbr.rel (0) target = $region21
  $region20: #{resnet_generator_forward.22} parent=0 // pred_region
    _
  $region21: #{resnet_generator_forward.22} parent=0 // pred_fallthru
    _

// kernel: resnet_generator_forward.24
$region0: #{resnet_generator_forward.24}
  #allocation0 [shape = 'u32[]', space=smem, size = 0x4, offset = 0x4, fixed_abs, tag = 'smem constant byte address 0x4 - core index']
  #allocation1 [shape = 'u32[144,128]{1,0:T(1,128)}', space=vmem, size = 0x12000, scoped, tag = 'internal scratch']
  %s0 = inlined_call_operand.vmem [shape: bf16[32,32], index: 0, kind: input, shape index: {}]
  %s1 = inlined_call_operand.vmem [shape: f32[32,1], index: 1, kind: input, shape index: {}]
  %s2 = inlined_call_operand.vmem [shape: f32[32,1], index: 2, kind: input, shape index: {}]
  %s3 = inlined_call_operand.vmem [shape: bf16[32,32], index: 3, kind: output, shape index: {}]
  %s4 = sld [smem:[#allocation0]]
  $region22: #{resnet_generator_forward.24} parent=0
    _
  %s6 = ssub.s32 1, %s4
  %s7 = scalar_select 0, %s6, %s4
  // Predicated region
  $region2: #{resnet_generator_forward.24} parent=0 // pred_check
    _
  $region3: #{resnet_generator_forward.24} parent=0 // pred_check_branch
    %9 = sbr.rel (0) target = $region5
  $region4: #{resnet_generator_forward.24} parent=0 // pred_region
    _
  $region5: #{resnet_generator_forward.24} parent=0 // pred_fallthru
    _
  // Predicated region
  $region6: #{resnet_generator_forward.24} parent=0 // pred_check
    _
  $region7: #{resnet_generator_forward.24} parent=0 // pred_check_branch
    %11 = sbr.rel (0) target = $region9
  $region8: #{resnet_generator_forward.24} parent=0 // pred_region
    _
  $region9: #{resnet_generator_forward.24} parent=0 // pred_fallthru
    _
  // Predicated region
  $region10: #{resnet_generator_forward.24} parent=0 // pred_check
    _
  $region11: #{resnet_generator_forward.24} parent=0 // pred_check_branch
    %13 = sbr.rel (0) target = $region13
  $region12: #{resnet_generator_forward.24} parent=0 // pred_region
    _
  $region13: #{resnet_generator_forward.24} parent=0 // pred_fallthru
    _
  %v14 = vld [vmem:[%s0] sm:$0xf]
  %v15 = vld [vmem:[%s0 + $0x4] sm:$0xf]
  %v16 = vld [vmem:[%s0 + $0x8] sm:$0xf]
  %v17 = vld [vmem:[%s0 + $0xc] sm:$0xf]
  %v18 = vunpack.c.l.bf16 %v14
  %v19 = vunpack.c.l.bf16 %v15
  %v20 = vunpack.c.l.bf16 %v16
  %v21 = vunpack.c.l.bf16 %v17
  %v22 = vld [vmem:[%s1] sm:$0xff]
  %v23 = vld [vmem:[%s1 + $0x8] sm:$0xff]
  %v24 = vld [vmem:[%s1 + $0x10] sm:$0xff]
  %v25 = vld [vmem:[%s1 + $0x18] sm:$0xff]
  %27 = vset.pattern.permute.xlu0 0
  %28 = vperm.xlu0 %27, %v22
  %v29 = vpop.permute.xlu0 %28
  %32 = vset.pattern.permute.xlu0 0
  %33 = vperm.xlu0 %32, %v23
  %v34 = vpop.permute.xlu0 %33
  %37 = vset.pattern.permute.xlu0 0
  %38 = vperm.xlu0 %37, %v24
  %v39 = vpop.permute.xlu0 %38
  %42 = vset.pattern.permute.xlu0 0
  %43 = vperm.xlu0 %42, %v25
  %v44 = vpop.permute.xlu0 %43
  %v46 = vmul.f32 %v18, %v29
  %v47 = vmul.f32 %v19, %v34
  %v48 = vmul.f32 %v20, %v39
  %v49 = vmul.f32 %v21, %v44
  %v50 = vld [vmem:[%s2] sm:$0xff]
  %v51 = vld [vmem:[%s2 + $0x8] sm:$0xff]
  %v52 = vld [vmem:[%s2 + $0x10] sm:$0xff]
  %v53 = vld [vmem:[%s2 + $0x18] sm:$0xff]
  %55 = vset.pattern.permute.xlu0 0
  %56 = vperm.xlu0 %55, %v50
  %v57 = vpop.permute.xlu0 %56
  %60 = vset.pattern.permute.xlu0 0
  %61 = vperm.xlu0 %60, %v51
  %v62 = vpop.permute.xlu0 %61
  %65 = vset.pattern.permute.xlu0 0
  %66 = vperm.xlu0 %65, %v52
  %v67 = vpop.permute.xlu0 %66
  %70 = vset.pattern.permute.xlu0 0
  %71 = vperm.xlu0 %70, %v53
  %v72 = vpop.permute.xlu0 %71
  %v74 = vadd.f32 %v46, %v57
  %v75 = vadd.f32 %v47, %v62
  %v76 = vadd.f32 %v48, %v67
  %v77 = vadd.f32 %v49, %v72
  %v78 = vmax.f32 %v74, 0.0
  %v79 = vmax.f32 %v75, 0.0
  %v80 = vmax.f32 %v76, 0.0
  %v81 = vmax.f32 %v77, 0.0
  %v82 = vpack.c.bf16 %v79, %v78
  %v83 = vpack.c.bf16 %v81, %v80
  %v86 = vunpack.c.l.b16 %v82
  %v87 = vunpack.c.h.b16 %v82
  %v88 = vunpack.c.l.b16 %v83
  %v89 = vunpack.c.h.b16 %v83
  %v90 = vpack.c.b16 %v86, %v86
  %v91 = vpack.c.b16 %v87, %v87
  %v92 = vpack.c.b16 %v88, %v88
  %v93 = vpack.c.b16 %v89, %v89
  %vm98 = vcmask 257024
  %99 = vst.msk [vmem:[%s3] sm:$0xf] %vm98, %v90
  %100 = vst.msk [vmem:[%s3 + $0x4] sm:$0xf] %vm98, %v91
  %101 = vst.msk [vmem:[%s3 + $0x8] sm:$0xf] %vm98, %v92
  %102 = vst.msk [vmem:[%s3 + $0xc] sm:$0xf] %vm98, %v93
  // Predicated region
  $region14: #{resnet_generator_forward.24} parent=0 // pred_check
    _
  $region15: #{resnet_generator_forward.24} parent=0 // pred_check_branch
    %104 = sbr.rel (0) target = $region17
  $region16: #{resnet_generator_forward.24} parent=0 // pred_region
    _
  $region17: #{resnet_generator_forward.24} parent=0 // pred_fallthru
    _
  // Predicated region
  $region18: #{resnet_generator_forward.24} parent=0 // pred_check
    _
  $region19: #{resnet_generator_forward.24} parent=0 // pred_check_branch
    %106 = sbr.rel (0) target = $region21
  $region20: #{resnet_generator_forward.24} parent=0 // pred_region
    _
  $region21: #{resnet_generator_forward.24} parent=0 // pred_fallthru
    _

// kernel: resnet_generator_forward.23
$region0: #{resnet_generator_forward.23}
  #allocation0 [shape = 'u32[]', space=smem, size = 0x4, offset = 0x4, fixed_abs, tag = 'smem constant byte address 0x4 - core index']
  #allocation1 [shape = 'u32[144,128]{1,0:T(1,128)}', space=vmem, size = 0x12000, scoped, tag = 'internal scratch']
  %s0 = inlined_call_operand.vmem [shape: bf16[32,144], index: 0, kind: input, shape index: {}]
  %s1 = inlined_call_operand.vmem [shape: bf16[144,32], index: 1, kind: input, shape index: {}]
  %s2 = inlined_call_operand.vmem [shape: bf16[32,32], index: 2, kind: output, shape index: {0}]
  %s3 = inlined_call_operand.vmem [shape: f32[1,32,1], index: 3, kind: output, shape index: {1}]
  %s4 = inlined_call_operand.vmem [shape: f32[1,32,1], index: 4, kind: output, shape index: {2}]
  %5 = xla_tuple %s2, %s3, %s4
  %s6 = sld [smem:[#allocation0]]
  $region34: #{resnet_generator_forward.23} parent=0
    _
  %s8 = ssub.s32 1, %s6
  %s9 = scalar_select 0, %s8, %s6
  // Predicated region
  $region2: #{resnet_generator_forward.23} parent=0 // pred_check
    _
  $region3: #{resnet_generator_forward.23} parent=0 // pred_check_branch
    %11 = sbr.rel (0) target = $region5
  $region4: #{resnet_generator_forward.23} parent=0 // pred_region
    _
  $region5: #{resnet_generator_forward.23} parent=0 // pred_fallthru
    _
  // Predicated region
  $region6: #{resnet_generator_forward.23} parent=0 // pred_check
    _
  $region7: #{resnet_generator_forward.23} parent=0 // pred_check_branch
    %13 = sbr.rel (0) target = $region9
  $region8: #{resnet_generator_forward.23} parent=0 // pred_region
    _
  $region9: #{resnet_generator_forward.23} parent=0 // pred_fallthru
    _
  %v15 = vld [vmem:[%s0] sm:$0xff]
  %v16 = vld [vmem:[%s0 + $0x8] sm:$0xff]
  %v17 = vld [vmem:[%s0 + $0x10] sm:$0xff]
  %v18 = vld [vmem:[%s0 + $0x18] sm:$0xff]
  %v19 = vld [vmem:[%s1] sm:$0xf]
  %v20 = vld [vmem:[%s1 + $0x4] sm:$0xf]
  %v21 = vld [vmem:[%s1 + $0x8] sm:$0xf]
  %v22 = vld [vmem:[%s1 + $0xc] sm:$0xf]
  %v23 = vld [vmem:[%s1 + $0x10] sm:$0xf]
  %v24 = vld [vmem:[%s1 + $0x14] sm:$0xf]
  %v25 = vld [vmem:[%s1 + $0x18] sm:$0xf]
  %v26 = vld [vmem:[%s1 + $0x1c] sm:$0xf]
  %v27 = vld [vmem:[%s1 + $0x20] sm:$0xf]
  %v28 = vld [vmem:[%s1 + $0x24] sm:$0xf]
  %v29 = vld [vmem:[%s1 + $0x28] sm:$0xf]
  %v30 = vld [vmem:[%s1 + $0x2c] sm:$0xf]
  %v31 = vld [vmem:[%s1 + $0x30] sm:$0xf]
  %v32 = vld [vmem:[%s1 + $0x34] sm:$0xf]
  %v33 = vld [vmem:[%s1 + $0x38] sm:$0xf]
  %v34 = vld [vmem:[%s1 + $0x3c] sm:$0xf]
  %v35 = vld [vmem:[%s1 + $0x40] sm:$0xf]
  %v36 = vld [vmem:[%s1 + $0x44] sm:$0xf]
  %v41 = vunpack.c.l.b16 %v15
  %v42 = vunpack.c.h.b16 %v15
  %v43 = vunpack.c.l.b16 %v16
  %v44 = vunpack.c.h.b16 %v16
  %v45 = vunpack.c.l.b16 %v17
  %v46 = vunpack.c.h.b16 %v17
  %v47 = vunpack.c.l.b16 %v18
  %v48 = vunpack.c.h.b16 %v18
  %v49 = vpack.c.b16 %v43, %v41
  %v50 = vpack.c.b16 %v44, %v42
  %v51 = vpack.c.b16 %v47, %v45
  %v52 = vpack.c.b16 %v48, %v46
  %v73 = vunpack.c.l.b16 %v19
  %v74 = vunpack.c.l.b16 %v20
  %v75 = vunpack.c.l.b16 %v21
  %v76 = vunpack.c.l.b16 %v22
  %v77 = vunpack.c.l.b16 %v23
  %v78 = vunpack.c.l.b16 %v24
  %v79 = vunpack.c.l.b16 %v25
  %v80 = vunpack.c.l.b16 %v26
  %v81 = vunpack.c.l.b16 %v27
  %v82 = vunpack.c.l.b16 %v28
  %v83 = vunpack.c.l.b16 %v29
  %v84 = vunpack.c.l.b16 %v30
  %v85 = vunpack.c.l.b16 %v31
  %v86 = vunpack.c.l.b16 %v32
  %v87 = vunpack.c.l.b16 %v33
  %v88 = vunpack.c.l.b16 %v34
  %v89 = vunpack.c.l.b16 %v35
  %v90 = vunpack.c.l.b16 %v36
  %v91 = vpack.c.b16 %v74, %v73
  %v92 = vpack.c.b16 %v76, %v75
  %v93 = vpack.c.b16 %v78, %v77
  %v94 = vpack.c.b16 %v80, %v79
  %v95 = vpack.c.b16 %v82, %v81
  %v96 = vpack.c.b16 %v84, %v83
  %v97 = vpack.c.b16 %v86, %v85
  %v98 = vpack.c.b16 %v88, %v87
  %v99 = vpack.c.b16 %v90, %v89
  %vm109 = vcmask 130048
  %v111 = vsel %vm109, %v50, 0
  %v114 = vsel %vm109, %v52, 0
  %116 = vmatprep.subr.bf16.mxu0 0
  %117 = vmatpush1.bf16.msra.mxu0 %v91
  %118 = vmatprep.subr.bf16.mxu0 0
  %119 = vmatpush1.bf16.msra.mxu0 %v92
  %120 = vmatprep.subr.bf16.mxu0 0
  %121 = vmatpush1.bf16.msra.mxu0 %v93
  %122 = vmatprep.subr.bf16.mxu0 0
  %123 = vmatpush1.bf16.msra.mxu0 %v94
  %124 = vmatprep.subr.bf16.mxu0 0
  %125 = vmatpush1.bf16.msra.mxu0 %v95
  %126 = vmatprep.subr.bf16.mxu0 0
  %127 = vmatpush1.bf16.msra.mxu0 %v96
  %128 = vmatprep.subr.bf16.mxu0 0
  %129 = vmatpush1.bf16.msra.mxu0 %v97
  %130 = vmatprep.subr.bf16.mxu0 0
  %131 = vmatpush1.bf16.msra.mxu0 %v98
  %132 = vmatprep.subr.bf16.mxu0 0
  %133 = vmatpush1.bf16.msra.mxu0 %v99
  %134 = vmatprep.subr.bf16.mxu0 0
  %135 = vmatpush1.bf16.msra.mxu0 0
  %136 = vmatprep.subr.bf16.mxu0 0
  %137 = vmatpush1.bf16.msra.mxu0 0
  %138 = vmatprep.subr.bf16.mxu0 0
  %139 = vmatpush1.bf16.msra.mxu0 0
  %140 = vmatprep.subr.bf16.mxu0 0
  %141 = vmatpush1.bf16.msra.mxu0 0
  %142 = vmatprep.subr.bf16.mxu0 0
  %143 = vmatpush1.bf16.msra.mxu0 0
  %144 = vmatprep.subr.bf16.mxu0 0
  %145 = vmatpush1.bf16.msra.mxu0 0
  %146 = vmatprep.subr.bf16.mxu0 0
  %147 = vmatpush1.bf16.msra.mxu0 0
  %148 = vmatprep.mubr.bf16.mxu0 %v111
  %149 = vmatmul.mubr.bf16.gmra.mrb[0].mxu0 %v49
  %v150 = vpop.f32.mrb[0].mxu0
  %v151 = vadd.f32 0.0, %v150
  %v152 = vpop.f32.mrb[0].mxu0
  %v153 = vpop.f32.mrb[0].mxu0
  %v154 = vadd.f32 0.0, %v153
  %v155 = vpop.f32.mrb[0].mxu0
  %156 = vmatprep.mubr.bf16.mxu0 %v114
  %157 = vmatmul.mubr.bf16.gmra.mrb[0].mxu0 %v51
  %v158 = vpop.f32.mrb[0].mxu0
  %v159 = vadd.f32 0.0, %v158
  %v160 = vpop.f32.mrb[0].mxu0
  %v161 = vpop.f32.mrb[0].mxu0
  %v162 = vadd.f32 0.0, %v161
  %v163 = vpop.f32.mrb[0].mxu0
  %164 = vdwg.mxu0
  %v165 = vpack.c.bf16 %v154, %v151
  %v166 = vpack.c.bf16 %v162, %v159
  %v169 = vunpack.c.l.b16 %v165
  %v170 = vunpack.c.h.b16 %v165
  %v171 = vunpack.c.l.b16 %v166
  %v172 = vunpack.c.h.b16 %v166
  %v173 = vpack.c.b16 %v169, %v169
  %v174 = vpack.c.b16 %v170, %v170
  %v175 = vpack.c.b16 %v171, %v171
  %v176 = vpack.c.b16 %v172, %v172
  %vm181 = vcmask 257024
  %182 = vst.msk [vmem:[%s2] sm:$0xf] %vm181, %v173
  %183 = vst.msk [vmem:[%s2 + $0x4] sm:$0xf] %vm181, %v174
  %184 = vst.msk [vmem:[%s2 + $0x8] sm:$0xf] %vm181, %v175
  %185 = vst.msk [vmem:[%s2 + $0xc] sm:$0xf] %vm181, %v176
  %vm186 = vcmask 261120
  %v187 = vsel %vm186, %v151, 0.0
  %188 = vadd.xlane.f32.xlu0 %v187
  %v189 = vpop.xlane.xlu0 %188
  %v190 = vsel %vm186, %v154, 0.0
  %191 = vadd.xlane.f32.xlu0 %v190
  %v192 = vpop.xlane.xlu0 %191
  %v193 = vsel %vm186, %v159, 0.0
  %194 = vadd.xlane.f32.xlu0 %v193
  %v195 = vpop.xlane.xlu0 %194
  %v196 = vsel %vm186, %v162, 0.0
  %197 = vadd.xlane.f32.xlu0 %v196
  %v198 = vpop.xlane.xlu0 %197
  %vm199 = vcmask 7168
  %200 = vst.msk [vmem:[%s3] sm:$0xff] %vm199, %v189
  %201 = vst.msk [vmem:[%s3 + $0x8] sm:$0xff] %vm199, %v192
  %202 = vst.msk [vmem:[%s3 + $0x10] sm:$0xff] %vm199, %v195
  %203 = vst.msk [vmem:[%s3 + $0x18] sm:$0xff] %vm199, %v198
  %v204 = vmul.f32 %v151, %v151
  %v205 = vmul.f32 %v154, %v154
  %v206 = vmul.f32 %v159, %v159
  %v207 = vmul.f32 %v162, %v162
  %v208 = vsel %vm186, %v204, 0.0
  %209 = vadd.xlane.f32.xlu0 %v208
  %v210 = vpop.xlane.xlu0 %209
  %v211 = vsel %vm186, %v205, 0.0
  %212 = vadd.xlane.f32.xlu0 %v211
  %v213 = vpop.xlane.xlu0 %212
  %v214 = vsel %vm186, %v206, 0.0
  %215 = vadd.xlane.f32.xlu0 %v214
  %v216 = vpop.xlane.xlu0 %215
  %v217 = vsel %vm186, %v207, 0.0
  %218 = vadd.xlane.f32.xlu0 %v217
  %v219 = vpop.xlane.xlu0 %218
  %220 = vst.msk [vmem:[%s4] sm:$0xff] %vm199, %v210
  %221 = vst.msk [vmem:[%s4 + $0x8] sm:$0xff] %vm199, %v213
  %222 = vst.msk [vmem:[%s4 + $0x10] sm:$0xff] %vm199, %v216
  %223 = vst.msk [vmem:[%s4 + $0x18] sm:$0xff] %vm199, %v219
  // Predicated region
  $region10: #{resnet_generator_forward.23} parent=0 // pred_check
    _
  $region11: #{resnet_generator_forward.23} parent=0 // pred_check_branch
    %225 = sbr.rel (0) target = $region13
  $region12: #{resnet_generator_forward.23} parent=0 // pred_region
    _
  $region13: #{resnet_generator_forward.23} parent=0 // pred_fallthru
    _
  // Predicated region
  $region14: #{resnet_generator_forward.23} parent=0 // pred_check
    _
  $region15: #{resnet_generator_forward.23} parent=0 // pred_check_branch
    %227 = sbr.rel (0) target = $region17
  $region16: #{resnet_generator_forward.23} parent=0 // pred_region
    _
  $region17: #{resnet_generator_forward.23} parent=0 // pred_fallthru
    _
  // Predicated region
  $region18: #{resnet_generator_forward.23} parent=0 // pred_check
    _
  $region19: #{resnet_generator_forward.23} parent=0 // pred_check_branch
    %229 = sbr.rel (0) target = $region21
  $region20: #{resnet_generator_forward.23} parent=0 // pred_region
    _
  $region21: #{resnet_generator_forward.23} parent=0 // pred_fallthru
    _
  // Predicated region
  $region22: #{resnet_generator_forward.23} parent=0 // pred_check
    _
  $region23: #{resnet_generator_forward.23} parent=0 // pred_check_branch
    %231 = sbr.rel (0) target = $region25
  $region24: #{resnet_generator_forward.23} parent=0 // pred_region
    _
  $region25: #{resnet_generator_forward.23} parent=0 // pred_fallthru
    _
  // Predicated region
  $region26: #{resnet_generator_forward.23} parent=0 // pred_check
    _
  $region27: #{resnet_generator_forward.23} parent=0 // pred_check_branch
    %233 = sbr.rel (0) target = $region29
  $region28: #{resnet_generator_forward.23} parent=0 // pred_region
    _
  $region29: #{resnet_generator_forward.23} parent=0 // pred_fallthru
    _
  // Predicated region
  $region30: #{resnet_generator_forward.23} parent=0 // pred_check
    _
  $region31: #{resnet_generator_forward.23} parent=0 // pred_check_branch
    %235 = sbr.rel (0) target = $region33
  $region32: #{resnet_generator_forward.23} parent=0 // pred_region
    _
  $region33: #{resnet_generator_forward.23} parent=0 // pred_fallthru
    _

// kernel: tile.27
$region0: #{tile.27}
  #allocation0 [shape = 's32[1]{0}', space=sflag, size = 0x4, scoped, tag = 'scoped memory for tile.27']
  %s0 = inlined_call_operand.vmem [shape: f32[16], index: 0, kind: input, shape index: {}]
  %s1 = inlined_call_operand.vmem [shape: f32[4,16], index: 1, kind: output, shape index: {}]
  // Predicated region
  $region2: #{tile.27} parent=0 // pred_check
    _
  $region3: #{tile.27} parent=0 // pred_check_branch
    %3 = sbr.rel (0) target = $region5
  $region4: #{tile.27} parent=0 // pred_region
    _
  $region5: #{tile.27} parent=0 // pred_fallthru
    _
  %v4 = vld [vmem:[%s0] ss:$0 sm:$0xff]
  %5 = vst [vmem:[%s1] sm:$0xf] %v4

// kernel: tile.0
$region0: #{tile.0}
  %s0 = inlined_call_operand.vmem [shape: f32[4,16], index: 0, kind: input, shape index: {}]
  %s1 = inlined_call_operand.vmem [shape: f32[64,1], index: 1, kind: output, shape index: {}]
  $region1: #{tile.0} parent=0
    #allocation0 [shape = 'u8[4096]{0}', space=vmem, size = 0x1000, scoped, tag = 'scoped mem for input reshape']
    %s3 = sshllo.u32 0, 4
    %v4 = vld [vmem:[%s0] sm:%s3]
    %5 = vst [vmem:[#allocation0] sm:%s3] %v4
    %v6 = vld [vmem:[#allocation0] sm:$0xf]
    %vm7 = vcmask 7168
    %8 = vst.msk [vmem:[%s1] ss:$16 sm:$0x3] %vm7, %v6
    %9 = vst.msk [vmem:[%s1] ss:$16 sm:$0xc] %vm7, %v6
    %v10 = vld [vmem:[#allocation0] sm:$0xf]
    %11 = vrot.lane.b32.xlu0 %v10, 127
    %v12 = vpop.permute.xlu0 %11
    %vm13 = vcmask 7168
    %s14 = scalar_lea.vmem %s1, 1
    %15 = vst.msk [vmem:[%s14] ss:$16 sm:$0x3] %vm13, %v12
    %s16 = scalar_lea.vmem %s1, 1
    %17 = vst.msk [vmem:[%s16] ss:$16 sm:$0xc] %vm13, %v12
    %v18 = vld [vmem:[#allocation0] sm:$0xf]
    %19 = vrot.lane.b32.xlu0 %v18, 126
    %v20 = vpop.permute.xlu0 %19
    %vm21 = vcmask 7168
    %s22 = scalar_lea.vmem %s1, 2
    %23 = vst.msk [vmem:[%s22] ss:$16 sm:$0x3] %vm21, %v20
    %s24 = scalar_lea.vmem %s1, 2
    %25 = vst.msk [vmem:[%s24] ss:$16 sm:$0xc] %vm21, %v20
    %v26 = vld [vmem:[#allocation0] sm:$0xf]
    %27 = vrot.lane.b32.xlu0 %v26, 125
    %v28 = vpop.permute.xlu0 %27
    %vm29 = vcmask 7168
    %s30 = scalar_lea.vmem %s1, 3
    %31 = vst.msk [vmem:[%s30] ss:$16 sm:$0x3] %vm29, %v28
    %s32 = scalar_lea.vmem %s1, 3
    %33 = vst.msk [vmem:[%s32] ss:$16 sm:$0xc] %vm29, %v28
    %v34 = vld [vmem:[#allocation0] sm:$0xf]
    %35 = vrot.lane.b32.xlu0 %v34, 124
    %v36 = vpop.permute.xlu0 %35
    %vm37 = vcmask 7168
    %s38 = scalar_lea.vmem %s1, 4
    %39 = vst.msk [vmem:[%s38] ss:$16 sm:$0x3] %vm37, %v36
    %s40 = scalar_lea.vmem %s1, 4
    %41 = vst.msk [vmem:[%s40] ss:$16 sm:$0xc] %vm37, %v36
    %v42 = vld [vmem:[#allocation0] sm:$0xf]
    %43 = vrot.lane.b32.xlu0 %v42, 123
    %v44 = vpop.permute.xlu0 %43
    %vm45 = vcmask 7168
    %s46 = scalar_lea.vmem %s1, 5
    %47 = vst.msk [vmem:[%s46] ss:$16 sm:$0x3] %vm45, %v44
    %s48 = scalar_lea.vmem %s1, 5
    %49 = vst.msk [vmem:[%s48] ss:$16 sm:$0xc] %vm45, %v44
    %v50 = vld [vmem:[#allocation0] sm:$0xf]
    %51 = vrot.lane.b32.xlu0 %v50, 122
    %v52 = vpop.permute.xlu0 %51
    %vm53 = vcmask 7168
    %s54 = scalar_lea.vmem %s1, 6
    %55 = vst.msk [vmem:[%s54] ss:$16 sm:$0x3] %vm53, %v52
    %s56 = scalar_lea.vmem %s1, 6
    %57 = vst.msk [vmem:[%s56] ss:$16 sm:$0xc] %vm53, %v52
    %v58 = vld [vmem:[#allocation0] sm:$0xf]
    %59 = vrot.lane.b32.xlu0 %v58, 121
    %v60 = vpop.permute.xlu0 %59
    %vm61 = vcmask 7168
    %s62 = scalar_lea.vmem %s1, 7
    %63 = vst.msk [vmem:[%s62] ss:$16 sm:$0x3] %vm61, %v60
    %s64 = scalar_lea.vmem %s1, 7
    %65 = vst.msk [vmem:[%s64] ss:$16 sm:$0xc] %vm61, %v60
    %v66 = vld [vmem:[#allocation0] sm:$0xf]
    %67 = vrot.lane.b32.xlu0 %v66, 120
    %v68 = vpop.permute.xlu0 %67
    %vm69 = vcmask 7168
    %s70 = scalar_lea.vmem %s1, 8
    %71 = vst.msk [vmem:[%s70] ss:$16 sm:$0x3] %vm69, %v68
    %s72 = scalar_lea.vmem %s1, 8
    %73 = vst.msk [vmem:[%s72] ss:$16 sm:$0xc] %vm69, %v68
    %v74 = vld [vmem:[#allocation0] sm:$0xf]
    %75 = vrot.lane.b32.xlu0 %v74, 119
    %v76 = vpop.permute.xlu0 %75
    %vm77 = vcmask 7168
    %s78 = scalar_lea.vmem %s1, 9
    %79 = vst.msk [vmem:[%s78] ss:$16 sm:$0x3] %vm77, %v76
    %s80 = scalar_lea.vmem %s1, 9
    %81 = vst.msk [vmem:[%s80] ss:$16 sm:$0xc] %vm77, %v76
    %v82 = vld [vmem:[#allocation0] sm:$0xf]
    %83 = vrot.lane.b32.xlu0 %v82, 118
    %v84 = vpop.permute.xlu0 %83
    %vm85 = vcmask 7168
    %s86 = scalar_lea.vmem %s1, 10
    %87 = vst.msk [vmem:[%s86] ss:$16 sm:$0x3] %vm85, %v84
    %s88 = scalar_lea.vmem %s1, 10
    %89 = vst.msk [vmem:[%s88] ss:$16 sm:$0xc] %vm85, %v84
    %v90 = vld [vmem:[#allocation0] sm:$0xf]
    %91 = vrot.lane.b32.xlu0 %v90, 117
    %v92 = vpop.permute.xlu0 %91
    %vm93 = vcmask 7168
    %s94 = scalar_lea.vmem %s1, 11
    %95 = vst.msk [vmem:[%s94] ss:$16 sm:$0x3] %vm93, %v92
    %s96 = scalar_lea.vmem %s1, 11
    %97 = vst.msk [vmem:[%s96] ss:$16 sm:$0xc] %vm93, %v92
    %v98 = vld [vmem:[#allocation0] sm:$0xf]
    %99 = vrot.lane.b32.xlu0 %v98, 116
    %v100 = vpop.permute.xlu0 %99
    %vm101 = vcmask 7168
    %s102 = scalar_lea.vmem %s1, 12
    %103 = vst.msk [vmem:[%s102] ss:$16 sm:$0x3] %vm101, %v100
    %s104 = scalar_lea.vmem %s1, 12
    %105 = vst.msk [vmem:[%s104] ss:$16 sm:$0xc] %vm101, %v100
    %v106 = vld [vmem:[#allocation0] sm:$0xf]
    %107 = vrot.lane.b32.xlu0 %v106, 115
    %v108 = vpop.permute.xlu0 %107
    %vm109 = vcmask 7168
    %s110 = scalar_lea.vmem %s1, 13
    %111 = vst.msk [vmem:[%s110] ss:$16 sm:$0x3] %vm109, %v108
    %s112 = scalar_lea.vmem %s1, 13
    %113 = vst.msk [vmem:[%s112] ss:$16 sm:$0xc] %vm109, %v108
    %v114 = vld [vmem:[#allocation0] sm:$0xf]
    %115 = vrot.lane.b32.xlu0 %v114, 114
    %v116 = vpop.permute.xlu0 %115
    %vm117 = vcmask 7168
    %s118 = scalar_lea.vmem %s1, 14
    %119 = vst.msk [vmem:[%s118] ss:$16 sm:$0x3] %vm117, %v116
    %s120 = scalar_lea.vmem %s1, 14
    %121 = vst.msk [vmem:[%s120] ss:$16 sm:$0xc] %vm117, %v116
    %v122 = vld [vmem:[#allocation0] sm:$0xf]
    %123 = vrot.lane.b32.xlu0 %v122, 113
    %v124 = vpop.permute.xlu0 %123
    %vm125 = vcmask 7168
    %s126 = scalar_lea.vmem %s1, 15
    %127 = vst.msk [vmem:[%s126] ss:$16 sm:$0x3] %vm125, %v124
    %s128 = scalar_lea.vmem %s1, 15
    %129 = vst.msk [vmem:[%s128] ss:$16 sm:$0xc] %vm125, %v124

// kernel: resnet_generator_forward.28
$region0: #{resnet_generator_forward.28}
  #allocation0 [shape = 'u32[]', space=smem, size = 0x4, offset = 0x4, fixed_abs, tag = 'smem constant byte address 0x4 - core index']
  #allocation1 [shape = 'u32[144,128]{1,0:T(1,128)}', space=vmem, size = 0x12000, scoped, tag = 'internal scratch']
  %s0 = inlined_call_operand.vmem [shape: bf16[32,32], index: 0, kind: input, shape index: {}]
  %s1 = inlined_call_operand.vmem [shape: f32[32,1], index: 1, kind: input, shape index: {}]
  %s2 = inlined_call_operand.vmem [shape: f32[32,1], index: 2, kind: input, shape index: {}]
  %s3 = inlined_call_operand.vmem [shape: bf16[32,32], index: 3, kind: input, shape index: {}]
  %s4 = inlined_call_operand.vmem [shape: bf16[32,32], index: 4, kind: output, shape index: {}]
  %s5 = sld [smem:[#allocation0]]
  $region26: #{resnet_generator_forward.28} parent=0
    _
  %s7 = ssub.s32 1, %s5
  %s8 = scalar_select 0, %s7, %s5
  // Predicated region
  $region2: #{resnet_generator_forward.28} parent=0 // pred_check
    _
  $region3: #{resnet_generator_forward.28} parent=0 // pred_check_branch
    %10 = sbr.rel (0) target = $region5
  $region4: #{resnet_generator_forward.28} parent=0 // pred_region
    _
  $region5: #{resnet_generator_forward.28} parent=0 // pred_fallthru
    _
  // Predicated region
  $region6: #{resnet_generator_forward.28} parent=0 // pred_check
    _
  $region7: #{resnet_generator_forward.28} parent=0 // pred_check_branch
    %12 = sbr.rel (0) target = $region9
  $region8: #{resnet_generator_forward.28} parent=0 // pred_region
    _
  $region9: #{resnet_generator_forward.28} parent=0 // pred_fallthru
    _
  // Predicated region
  $region10: #{resnet_generator_forward.28} parent=0 // pred_check
    _
  $region11: #{resnet_generator_forward.28} parent=0 // pred_check_branch
    %14 = sbr.rel (0) target = $region13
  $region12: #{resnet_generator_forward.28} parent=0 // pred_region
    _
  $region13: #{resnet_generator_forward.28} parent=0 // pred_fallthru
    _
  // Predicated region
  $region14: #{resnet_generator_forward.28} parent=0 // pred_check
    _
  $region15: #{resnet_generator_forward.28} parent=0 // pred_check_branch
    %16 = sbr.rel (0) target = $region17
  $region16: #{resnet_generator_forward.28} parent=0 // pred_region
    _
  $region17: #{resnet_generator_forward.28} parent=0 // pred_fallthru
    _
  %v17 = vld [vmem:[%s0] sm:$0xf]
  %v18 = vld [vmem:[%s0 + $0x4] sm:$0xf]
  %v19 = vld [vmem:[%s0 + $0x8] sm:$0xf]
  %v20 = vld [vmem:[%s0 + $0xc] sm:$0xf]
  %v21 = vunpack.c.l.bf16 %v17
  %v22 = vunpack.c.l.bf16 %v18
  %v23 = vunpack.c.l.bf16 %v19
  %v24 = vunpack.c.l.bf16 %v20
  %v25 = vld [vmem:[%s1] sm:$0xff]
  %v26 = vld [vmem:[%s1 + $0x8] sm:$0xff]
  %v27 = vld [vmem:[%s1 + $0x10] sm:$0xff]
  %v28 = vld [vmem:[%s1 + $0x18] sm:$0xff]
  %30 = vset.pattern.permute.xlu0 0
  %31 = vperm.xlu0 %30, %v25
  %v32 = vpop.permute.xlu0 %31
  %35 = vset.pattern.permute.xlu0 0
  %36 = vperm.xlu0 %35, %v26
  %v37 = vpop.permute.xlu0 %36
  %40 = vset.pattern.permute.xlu0 0
  %41 = vperm.xlu0 %40, %v27
  %v42 = vpop.permute.xlu0 %41
  %45 = vset.pattern.permute.xlu0 0
  %46 = vperm.xlu0 %45, %v28
  %v47 = vpop.permute.xlu0 %46
  %v49 = vmul.f32 %v21, %v32
  %v50 = vmul.f32 %v22, %v37
  %v51 = vmul.f32 %v23, %v42
  %v52 = vmul.f32 %v24, %v47
  %v53 = vld [vmem:[%s2] sm:$0xff]
  %v54 = vld [vmem:[%s2 + $0x8] sm:$0xff]
  %v55 = vld [vmem:[%s2 + $0x10] sm:$0xff]
  %v56 = vld [vmem:[%s2 + $0x18] sm:$0xff]
  %58 = vset.pattern.permute.xlu0 0
  %59 = vperm.xlu0 %58, %v53
  %v60 = vpop.permute.xlu0 %59
  %63 = vset.pattern.permute.xlu0 0
  %64 = vperm.xlu0 %63, %v54
  %v65 = vpop.permute.xlu0 %64
  %68 = vset.pattern.permute.xlu0 0
  %69 = vperm.xlu0 %68, %v55
  %v70 = vpop.permute.xlu0 %69
  %73 = vset.pattern.permute.xlu0 0
  %74 = vperm.xlu0 %73, %v56
  %v75 = vpop.permute.xlu0 %74
  %v77 = vadd.f32 %v49, %v60
  %v78 = vadd.f32 %v50, %v65
  %v79 = vadd.f32 %v51, %v70
  %v80 = vadd.f32 %v52, %v75
  %v81 = vld [vmem:[%s3] sm:$0xf]
  %v82 = vld [vmem:[%s3 + $0x4] sm:$0xf]
  %v83 = vld [vmem:[%s3 + $0x8] sm:$0xf]
  %v84 = vld [vmem:[%s3 + $0xc] sm:$0xf]
  %v85 = vunpack.c.l.bf16 %v81
  %v86 = vunpack.c.l.bf16 %v82
  %v87 = vunpack.c.l.bf16 %v83
  %v88 = vunpack.c.l.bf16 %v84
  %v89 = vadd.f32 %v77, %v85
  %v90 = vadd.f32 %v78, %v86
  %v91 = vadd.f32 %v79, %v87
  %v92 = vadd.f32 %v80, %v88
  %v93 = vpack.c.bf16 %v90, %v89
  %v94 = vpack.c.bf16 %v92, %v91
  %v97 = vunpack.c.l.b16 %v93
  %v98 = vunpack.c.h.b16 %v93
  %v99 = vunpack.c.l.b16 %v94
  %v100 = vunpack.c.h.b16 %v94
  %v101 = vpack.c.b16 %v97, %v97
  %v102 = vpack.c.b16 %v98, %v98
  %v103 = vpack.c.b16 %v99, %v99
  %v104 = vpack.c.b16 %v100, %v100
  %vm109 = vcmask 257024
  %110 = vst.msk [vmem:[%s4] sm:$0xf] %vm109, %v101
  %111 = vst.msk [vmem:[%s4 + $0x4] sm:$0xf] %vm109, %v102
  %112 = vst.msk [vmem:[%s4 + $0x8] sm:$0xf] %vm109, %v103
  %113 = vst.msk [vmem:[%s4 + $0xc] sm:$0xf] %vm109, %v104
  // Predicated region
  $region18: #{resnet_generator_forward.28} parent=0 // pred_check
    _
  $region19: #{resnet_generator_forward.28} parent=0 // pred_check_branch
    %115 = sbr.rel (0) target = $region21
  $region20: #{resnet_generator_forward.28} parent=0 // pred_region
    _
  $region21: #{resnet_generator_forward.28} parent=0 // pred_fallthru
    _
  // Predicated region
  $region22: #{resnet_generator_forward.28} parent=0 // pred_check
    _
  $region23: #{resnet_generator_forward.28} parent=0 // pred_check_branch
    %117 = sbr.rel (0) target = $region25
  $region24: #{resnet_generator_forward.28} parent=0 // pred_region
    _
  $region25: #{resnet_generator_forward.28} parent=0 // pred_fallthru
    _

// kernel: resnet_generator_forward.25
$region0: #{resnet_generator_forward.25}
  #allocation0 [shape = 'u32[]', space=smem, size = 0x4, offset = 0x4, fixed_abs, tag = 'smem constant byte address 0x4 - core index']
  #allocation1 [shape = 'u32[144,128]{1,0:T(1,128)}', space=vmem, size = 0x12000, scoped, tag = 'internal scratch']
  %s0 = inlined_call_operand.vmem [shape: bf16[32,288], index: 0, kind: input, shape index: {}]
  %s1 = inlined_call_operand.vmem [shape: bf16[288,32], index: 1, kind: input, shape index: {}]
  %s2 = inlined_call_operand.vmem [shape: bf16[32,32], index: 2, kind: output, shape index: {0}]
  %s3 = inlined_call_operand.vmem [shape: f32[1,32,1], index: 3, kind: output, shape index: {1}]
  %s4 = inlined_call_operand.vmem [shape: f32[1,32,1], index: 4, kind: output, shape index: {2}]
  %5 = xla_tuple %s2, %s3, %s4
  %s6 = sld [smem:[#allocation0]]
  $region34: #{resnet_generator_forward.25} parent=0
    _
  %s8 = ssub.s32 1, %s6
  %s9 = scalar_select 0, %s8, %s6
  // Predicated region
  $region2: #{resnet_generator_forward.25} parent=0 // pred_check
    _
  $region3: #{resnet_generator_forward.25} parent=0 // pred_check_branch
    %11 = sbr.rel (0) target = $region5
  $region4: #{resnet_generator_forward.25} parent=0 // pred_region
    _
  $region5: #{resnet_generator_forward.25} parent=0 // pred_fallthru
    _
  // Predicated region
  $region6: #{resnet_generator_forward.25} parent=0 // pred_check
    _
  $region7: #{resnet_generator_forward.25} parent=0 // pred_check_branch
    %13 = sbr.rel (0) target = $region9
  $region8: #{resnet_generator_forward.25} parent=0 // pred_region
    _
  $region9: #{resnet_generator_forward.25} parent=0 // pred_fallthru
    _
  %v15 = vld [vmem:[%s0] sm:$0xff]
  %v16 = vld [vmem:[%s0 + $0x8] sm:$0xf]
  %v17 = vld [vmem:[%s0 + $0xc] sm:$0xff]
  %v18 = vld [vmem:[%s0 + $0x14] sm:$0xf]
  %v19 = vld [vmem:[%s0 + $0x18] sm:$0xff]
  %v20 = vld [vmem:[%s0 + $0x20] sm:$0xf]
  %v21 = vld [vmem:[%s0 + $0x24] sm:$0xff]
  %v22 = vld [vmem:[%s0 + $0x2c] sm:$0xf]
  %v23 = vld [vmem:[%s1] sm:$0xf]
  %v24 = vld [vmem:[%s1 + $0x4] sm:$0xf]
  %v25 = vld [vmem:[%s1 + $0x8] sm:$0xf]
  %v26 = vld [vmem:[%s1 + $0xc] sm:$0xf]
  %v27 = vld [vmem:[%s1 + $0x10] sm:$0xf]
  %v28 = vld [vmem:[%s1 + $0x14] sm:$0xf]
  %v29 = vld [vmem:[%s1 + $0x18] sm:$0xf]
  %v30 = vld [vmem:[%s1 + $0x1c] sm:$0xf]
  %v31 = vld [vmem:[%s1 + $0x20] sm:$0xf]
  %v32 = vld [vmem:[%s1 + $0x24] sm:$0xf]
  %v33 = vld [vmem:[%s1 + $0x28] sm:$0xf]
  %v34 = vld [vmem:[%s1 + $0x2c] sm:$0xf]
  %v35 = vld [vmem:[%s1 + $0x30] sm:$0xf]
  %v36 = vld [vmem:[%s1 + $0x34] sm:$0xf]
  %v37 = vld [vmem:[%s1 + $0x38] sm:$0xf]
  %v38 = vld [vmem:[%s1 + $0x3c] sm:$0xf]
  %v39 = vld [vmem:[%s1 + $0x40] sm:$0xf]
  %v40 = vld [vmem:[%s1 + $0x44] sm:$0xf]
  %v41 = vld [vmem:[%s1 + $0x48] sm:$0xf]
  %v42 = vld [vmem:[%s1 + $0x4c] sm:$0xf]
  %v43 = vld [vmem:[%s1 + $0x50] sm:$0xf]
  %v44 = vld [vmem:[%s1 + $0x54] sm:$0xf]
  %v45 = vld [vmem:[%s1 + $0x58] sm:$0xf]
  %v46 = vld [vmem:[%s1 + $0x5c] sm:$0xf]
  %v47 = vld [vmem:[%s1 + $0x60] sm:$0xf]
  %v48 = vld [vmem:[%s1 + $0x64] sm:$0xf]
  %v49 = vld [vmem:[%s1 + $0x68] sm:$0xf]
  %v50 = vld [vmem:[%s1 + $0x6c] sm:$0xf]
  %v51 = vld [vmem:[%s1 + $0x70] sm:$0xf]
  %v52 = vld [vmem:[%s1 + $0x74] sm:$0xf]
  %v53 = vld [vmem:[%s1 + $0x78] sm:$0xf]
  %v54 = vld [vmem:[%s1 + $0x7c] sm:$0xf]
  %v55 = vld [vmem:[%s1 + $0x80] sm:$0xf]
  %v56 = vld [vmem:[%s1 + $0x84] sm:$0xf]
  %v57 = vld [vmem:[%s1 + $0x88] sm:$0xf]
  %v58 = vld [vmem:[%s1 + $0x8c] sm:$0xf]
  %v67 = vunpack.c.l.b16 %v15
  %v68 = vunpack.c.h.b16 %v15
  %v69 = vunpack.c.l.b16 %v16
  %v70 = vunpack.c.l.b16 %v17
  %v71 = vunpack.c.h.b16 %v17
  %v72 = vunpack.c.l.b16 %v18
  %v73 = vunpack.c.l.b16 %v19
  %v74 = vunpack.c.h.b16 %v19
  %v75 = vunpack.c.l.b16 %v20
  %v76 = vunpack.c.l.b16 %v21
  %v77 = vunpack.c.h.b16 %v21
  %v78 = vunpack.c.l.b16 %v22
  %v79 = vpack.c.b16 %v70, %v67
  %v80 = vpack.c.b16 %v71, %v68
  %v81 = vpack.c.b16 %v72, %v69
  %v82 = vpack.c.b16 %v76, %v73
  %v83 = vpack.c.b16 %v77, %v74
  %v84 = vpack.c.b16 %v78, %v75
  %v125 = vunpack.c.l.b16 %v23
  %v126 = vunpack.c.l.b16 %v24
  %v127 = vunpack.c.l.b16 %v25
  %v128 = vunpack.c.l.b16 %v26
  %v129 = vunpack.c.l.b16 %v27
  %v130 = vunpack.c.l.b16 %v28
  %v131 = vunpack.c.l.b16 %v29
  %v132 = vunpack.c.l.b16 %v30
  %v133 = vunpack.c.l.b16 %v31
  %v134 = vunpack.c.l.b16 %v32
  %v135 = vunpack.c.l.b16 %v33
  %v136 = vunpack.c.l.b16 %v34
  %v137 = vunpack.c.l.b16 %v35
  %v138 = vunpack.c.l.b16 %v36
  %v139 = vunpack.c.l.b16 %v37
  %v140 = vunpack.c.l.b16 %v38
  %v141 = vunpack.c.l.b16 %v39
  %v142 = vunpack.c.l.b16 %v40
  %v143 = vunpack.c.l.b16 %v41
  %v144 = vunpack.c.l.b16 %v42
  %v145 = vunpack.c.l.b16 %v43
  %v146 = vunpack.c.l.b16 %v44
  %v147 = vunpack.c.l.b16 %v45
  %v148 = vunpack.c.l.b16 %v46
  %v149 = vunpack.c.l.b16 %v47
  %v150 = vunpack.c.l.b16 %v48
  %v151 = vunpack.c.l.b16 %v49
  %v152 = vunpack.c.l.b16 %v50
  %v153 = vunpack.c.l.b16 %v51
  %v154 = vunpack.c.l.b16 %v52
  %v155 = vunpack.c.l.b16 %v53
  %v156 = vunpack.c.l.b16 %v54
  %v157 = vunpack.c.l.b16 %v55
  %v158 = vunpack.c.l.b16 %v56
  %v159 = vunpack.c.l.b16 %v57
  %v160 = vunpack.c.l.b16 %v58
  %v161 = vpack.c.b16 %v126, %v125
  %v162 = vpack.c.b16 %v128, %v127
  %v163 = vpack.c.b16 %v130, %v129
  %v164 = vpack.c.b16 %v132, %v131
  %v165 = vpack.c.b16 %v134, %v133
  %v166 = vpack.c.b16 %v136, %v135
  %v167 = vpack.c.b16 %v138, %v137
  %v168 = vpack.c.b16 %v140, %v139
  %v169 = vpack.c.b16 %v142, %v141
  %v170 = vpack.c.b16 %v144, %v143
  %v171 = vpack.c.b16 %v146, %v145
  %v172 = vpack.c.b16 %v148, %v147
  %v173 = vpack.c.b16 %v150, %v149
  %v174 = vpack.c.b16 %v152, %v151
  %v175 = vpack.c.b16 %v154, %v153
  %v176 = vpack.c.b16 %v156, %v155
  %v177 = vpack.c.b16 %v158, %v157
  %v178 = vpack.c.b16 %v160, %v159
  %vm197 = vcmask 261120
  %v199 = vsel %vm197, %v81, 0
  %v202 = vsel %vm197, %v84, 0
  %204 = vmatprep.subr.bf16.mxu0 0
  %205 = vmatpush1.bf16.msra.mxu0 %v161
  %206 = vmatprep.subr.bf16.mxu0 0
  %207 = vmatpush1.bf16.msra.mxu0 %v162
  %208 = vmatprep.subr.bf16.mxu0 0
  %209 = vmatpush1.bf16.msra.mxu0 %v163
  %210 = vmatprep.subr.bf16.mxu0 0
  %211 = vmatpush1.bf16.msra.mxu0 %v164
  %212 = vmatprep.subr.bf16.mxu0 0
  %213 = vmatpush1.bf16.msra.mxu0 %v165
  %214 = vmatprep.subr.bf16.mxu0 0
  %215 = vmatpush1.bf16.msra.mxu0 %v166
  %216 = vmatprep.subr.bf16.mxu0 0
  %217 = vmatpush1.bf16.msra.mxu0 %v167
  %218 = vmatprep.subr.bf16.mxu0 0
  %219 = vmatpush1.bf16.msra.mxu0 %v168
  %220 = vmatprep.subr.bf16.mxu0 0
  %221 = vmatpush1.bf16.msra.mxu0 %v169
  %222 = vmatprep.subr.bf16.mxu0 0
  %223 = vmatpush1.bf16.msra.mxu0 %v170
  %224 = vmatprep.subr.bf16.mxu0 0
  %225 = vmatpush1.bf16.msra.mxu0 %v171
  %226 = vmatprep.subr.bf16.mxu0 0
  %227 = vmatpush1.bf16.msra.mxu0 %v172
  %228 = vmatprep.subr.bf16.mxu0 0
  %229 = vmatpush1.bf16.msra.mxu0 %v173
  %230 = vmatprep.subr.bf16.mxu0 0
  %231 = vmatpush1.bf16.msra.mxu0 %v174
  %232 = vmatprep.subr.bf16.mxu0 0
  %233 = vmatpush1.bf16.msra.mxu0 %v175
  %234 = vmatprep.subr.bf16.mxu0 0
  %235 = vmatpush1.bf16.msra.mxu0 %v176
  %236 = vmatprep.mubr.bf16.mxu0 %v80
  %237 = vmatmul.mubr.bf16.gmra.mrb[0].mxu0 %v79
  %v238 = vpop.f32.mrb[0].mxu0
  %v239 = vadd.f32 0.0, %v238
  %v240 = vpop.f32.mrb[0].mxu0
  %v241 = vpop.f32.mrb[0].mxu0
  %v242 = vadd.f32 0.0, %v241
  %v243 = vpop.f32.mrb[0].mxu0
  %244 = vmatprep.mubr.bf16.mxu0 %v83
  %245 = vmatmul.mubr.bf16.gmra.mrb[0].mxu0 %v82
  %v246 = vpop.f32.mrb[0].mxu0
  %v247 = vadd.f32 0.0, %v246
  %v248 = vpop.f32.mrb[0].mxu0
  %v249 = vpop.f32.mrb[0].mxu0
  %v250 = vadd.f32 0.0, %v249
  %v251 = vpop.f32.mrb[0].mxu0
  %252 = vdwg.mxu0
  %253 = vmatprep.subr.bf16.mxu0 0
  %254 = vmatpush1.bf16.msra.mxu0 %v177
  %255 = vmatprep.subr.bf16.mxu0 0
  %256 = vmatpush1.bf16.msra.mxu0 %v178
  %257 = vmatprep.subr.bf16.mxu0 0
  %258 = vmatpush1.bf16.msra.mxu0 0
  %259 = vmatprep.subr.bf16.mxu0 0
  %260 = vmatpush1.bf16.msra.mxu0 0
  %261 = vmatprep.subr.bf16.mxu0 0
  %262 = vmatpush1.bf16.msra.mxu0 0
  %263 = vmatprep.subr.bf16.mxu0 0
  %264 = vmatpush1.bf16.msra.mxu0 0
  %265 = vmatprep.subr.bf16.mxu0 0
  %266 = vmatpush1.bf16.msra.mxu0 0
  %267 = vmatprep.subr.bf16.mxu0 0
  %268 = vmatpush1.bf16.msra.mxu0 0
  %269 = vmatprep.subr.bf16.mxu0 0
  %270 = vmatpush1.bf16.msra.mxu0 0
  %271 = vmatprep.subr.bf16.mxu0 0
  %272 = vmatpush1.bf16.msra.mxu0 0
  %273 = vmatprep.subr.bf16.mxu0 0
  %274 = vmatpush1.bf16.msra.mxu0 0
  %275 = vmatprep.subr.bf16.mxu0 0
  %276 = vmatpush1.bf16.msra.mxu0 0
  %277 = vmatprep.subr.bf16.mxu0 0
  %278 = vmatpush1.bf16.msra.mxu0 0
  %279 = vmatprep.subr.bf16.mxu0 0
  %280 = vmatpush1.bf16.msra.mxu0 0
  %281 = vmatprep.subr.bf16.mxu0 0
  %282 = vmatpush1.bf16.msra.mxu0 0
  %283 = vmatprep.subr.bf16.mxu0 0
  %284 = vmatpush1.bf16.msra.mxu0 0
  %285 = vmatprep.mubr.bf16.mxu0 0
  %286 = vmatmul.mubr.bf16.gmra.mrb[0].mxu0 %v199
  %v287 = vpop.f32.mrb[0].mxu0
  %v288 = vadd.f32 %v239, %v287
  %v289 = vpop.f32.mrb[0].mxu0
  %v290 = vpop.f32.mrb[0].mxu0
  %v291 = vadd.f32 %v242, %v290
  %v292 = vpop.f32.mrb[0].mxu0
  %293 = vmatprep.mubr.bf16.mxu0 0
  %294 = vmatmul.mubr.bf16.gmra.mrb[0].mxu0 %v202
  %v295 = vpop.f32.mrb[0].mxu0
  %v296 = vadd.f32 %v247, %v295
  %v297 = vpop.f32.mrb[0].mxu0
  %v298 = vpop.f32.mrb[0].mxu0
  %v299 = vadd.f32 %v250, %v298
  %v300 = vpop.f32.mrb[0].mxu0
  %301 = vdwg.mxu0
  %v302 = vpack.c.bf16 %v291, %v288
  %v303 = vpack.c.bf16 %v299, %v296
  %v306 = vunpack.c.l.b16 %v302
  %v307 = vunpack.c.h.b16 %v302
  %v308 = vunpack.c.l.b16 %v303
  %v309 = vunpack.c.h.b16 %v303
  %v310 = vpack.c.b16 %v306, %v306
  %v311 = vpack.c.b16 %v307, %v307
  %v312 = vpack.c.b16 %v308, %v308
  %v313 = vpack.c.b16 %v309, %v309
  %vm318 = vcmask 257024
  %319 = vst.msk [vmem:[%s2] sm:$0xf] %vm318, %v310
  %320 = vst.msk [vmem:[%s2 + $0x4] sm:$0xf] %vm318, %v311
  %321 = vst.msk [vmem:[%s2 + $0x8] sm:$0xf] %vm318, %v312
  %322 = vst.msk [vmem:[%s2 + $0xc] sm:$0xf] %vm318, %v313
  %v323 = vsel %vm197, %v288, 0.0
  %324 = vadd.xlane.f32.xlu0 %v323
  %v325 = vpop.xlane.xlu0 %324
  %v326 = vsel %vm197, %v291, 0.0
  %327 = vadd.xlane.f32.xlu0 %v326
  %v328 = vpop.xlane.xlu0 %327
  %v329 = vsel %vm197, %v296, 0.0
  %330 = vadd.xlane.f32.xlu0 %v329
  %v331 = vpop.xlane.xlu0 %330
  %v332 = vsel %vm197, %v299, 0.0
  %333 = vadd.xlane.f32.xlu0 %v332
  %v334 = vpop.xlane.xlu0 %333
  %vm335 = vcmask 7168
  %336 = vst.msk [vmem:[%s3] sm:$0xff] %vm335, %v325
  %337 = vst.msk [vmem:[%s3 + $0x8] sm:$0xff] %vm335, %v328
  %338 = vst.msk [vmem:[%s3 + $0x10] sm:$0xff] %vm335, %v331
  %339 = vst.msk [vmem:[%s3 + $0x18] sm:$0xff] %vm335, %v334
  %v340 = vmul.f32 %v288, %v288
  %v341 = vmul.f32 %v291, %v291
  %v342 = vmul.f32 %v296, %v296
  %v343 = vmul.f32 %v299, %v299
  %v344 = vsel %vm197, %v340, 0.0
  %345 = vadd.xlane.f32.xlu0 %v344
  %v346 = vpop.xlane.xlu0 %345
  %v347 = vsel %vm197, %v341, 0.0
  %348 = vadd.xlane.f32.xlu0 %v347
  %v349 = vpop.xlane.xlu0 %348
  %v350 = vsel %vm197, %v342, 0.0
  %351 = vadd.xlane.f32.xlu0 %v350
  %v352 = vpop.xlane.xlu0 %351
  %v353 = vsel %vm197, %v343, 0.0
  %354 = vadd.xlane.f32.xlu0 %v353
  %v355 = vpop.xlane.xlu0 %354
  %356 = vst.msk [vmem:[%s4] sm:$0xff] %vm335, %v346
  %357 = vst.msk [vmem:[%s4 + $0x8] sm:$0xff] %vm335, %v349
  %358 = vst.msk [vmem:[%s4 + $0x10] sm:$0xff] %vm335, %v352
  %359 = vst.msk [vmem:[%s4 + $0x18] sm:$0xff] %vm335, %v355
  // Predicated region
  $region10: #{resnet_generator_forward.25} parent=0 // pred_check
    _
  $region11: #{resnet_generator_forward.25} parent=0 // pred_check_branch
    %361 = sbr.rel (0) target = $region13
  $region12: #{resnet_generator_forward.25} parent=0 // pred_region
    _
  $region13: #{resnet_generator_forward.25} parent=0 // pred_fallthru
    _
  // Predicated region
  $region14: #{resnet_generator_forward.25} parent=0 // pred_check
    _
  $region15: #{resnet_generator_forward.25} parent=0 // pred_check_branch
    %363 = sbr.rel (0) target = $region17
  $region16: #{resnet_generator_forward.25} parent=0 // pred_region
    _
  $region17: #{resnet_generator_forward.25} parent=0 // pred_fallthru
    _
  // Predicated region
  $region18: #{resnet_generator_forward.25} parent=0 // pred_check
    _
  $region19: #{resnet_generator_forward.25} parent=0 // pred_check_branch
    %365 = sbr.rel (0) target = $region21
  $region20: #{resnet_generator_forward.25} parent=0 // pred_region
    _
  $region21: #{resnet_generator_forward.25} parent=0 // pred_fallthru
    _
  // Predicated region
  $region22: #{resnet_generator_forward.25} parent=0 // pred_check
    _
  $region23: #{resnet_generator_forward.25} parent=0 // pred_check_branch
    %367 = sbr.rel (0) target = $region25
  $region24: #{resnet_generator_forward.25} parent=0 // pred_region
    _
  $region25: #{resnet_generator_forward.25} parent=0 // pred_fallthru
    _
  // Predicated region
  $region26: #{resnet_generator_forward.25} parent=0 // pred_check
    _
  $region27: #{resnet_generator_forward.25} parent=0 // pred_check_branch
    %369 = sbr.rel (0) target = $region29
  $region28: #{resnet_generator_forward.25} parent=0 // pred_region
    _
  $region29: #{resnet_generator_forward.25} parent=0 // pred_fallthru
    _
  // Predicated region
  $region30: #{resnet_generator_forward.25} parent=0 // pred_check
    _
  $region31: #{resnet_generator_forward.25} parent=0 // pred_check_branch
    %371 = sbr.rel (0) target = $region33
  $region32: #{resnet_generator_forward.25} parent=0 // pred_region
    _
  $region33: #{resnet_generator_forward.25} parent=0 // pred_fallthru
    _

// kernel: resnet_generator_forward.33
$region0: #{resnet_generator_forward.33}
  #allocation0 [shape = 'u32[]', space=smem, size = 0x4, offset = 0x4, fixed_abs, tag = 'smem constant byte address 0x4 - core index']
  #allocation1 [shape = 'u32[144,128]{1,0:T(1,128)}', space=vmem, size = 0x12000, scoped, tag = 'internal scratch']
  %s0 = inlined_call_operand.vmem [shape: bf16[64,128], index: 0, kind: input, shape index: {}]
  %s1 = inlined_call_operand.vmem [shape: bf16[128,32], index: 1, kind: input, shape index: {}]
  %s2 = inlined_call_operand.vmem [shape: bf16[64,32], index: 2, kind: output, shape index: {0}]
  %s3 = inlined_call_operand.vmem [shape: f32[1,64,1], index: 3, kind: output, shape index: {1}]
  %s4 = inlined_call_operand.vmem [shape: f32[1,64,1], index: 4, kind: output, shape index: {2}]
  %5 = xla_tuple %s2, %s3, %s4
  %s6 = sld [smem:[#allocation0]]
  $region34: #{resnet_generator_forward.33} parent=0
    _
  %s8 = ssub.s32 1, %s6
  %s9 = scalar_select 0, %s8, %s6
  // Predicated region
  $region2: #{resnet_generator_forward.33} parent=0 // pred_check
    _
  $region3: #{resnet_generator_forward.33} parent=0 // pred_check_branch
    %11 = sbr.rel (0) target = $region5
  $region4: #{resnet_generator_forward.33} parent=0 // pred_region
    _
  $region5: #{resnet_generator_forward.33} parent=0 // pred_fallthru
    _
  // Predicated region
  $region6: #{resnet_generator_forward.33} parent=0 // pred_check
    _
  $region7: #{resnet_generator_forward.33} parent=0 // pred_check_branch
    %13 = sbr.rel (0) target = $region9
  $region8: #{resnet_generator_forward.33} parent=0 // pred_region
    _
  $region9: #{resnet_generator_forward.33} parent=0 // pred_fallthru
    _
  %v15 = vld [vmem:[%s0] sm:$0xf]
  %v16 = vld [vmem:[%s0 + $0x4] sm:$0xf]
  %v17 = vld [vmem:[%s0 + $0x8] sm:$0xf]
  %v18 = vld [vmem:[%s0 + $0xc] sm:$0xf]
  %v19 = vld [vmem:[%s0 + $0x10] sm:$0xf]
  %v20 = vld [vmem:[%s0 + $0x14] sm:$0xf]
  %v21 = vld [vmem:[%s0 + $0x18] sm:$0xf]
  %v22 = vld [vmem:[%s0 + $0x1c] sm:$0xf]
  %v23 = vld [vmem:[%s1] sm:$0xf]
  %v24 = vld [vmem:[%s1 + $0x4] sm:$0xf]
  %v25 = vld [vmem:[%s1 + $0x8] sm:$0xf]
  %v26 = vld [vmem:[%s1 + $0xc] sm:$0xf]
  %v27 = vld [vmem:[%s1 + $0x10] sm:$0xf]
  %v28 = vld [vmem:[%s1 + $0x14] sm:$0xf]
  %v29 = vld [vmem:[%s1 + $0x18] sm:$0xf]
  %v30 = vld [vmem:[%s1 + $0x1c] sm:$0xf]
  %v31 = vld [vmem:[%s1 + $0x20] sm:$0xf]
  %v32 = vld [vmem:[%s1 + $0x24] sm:$0xf]
  %v33 = vld [vmem:[%s1 + $0x28] sm:$0xf]
  %v34 = vld [vmem:[%s1 + $0x2c] sm:$0xf]
  %v35 = vld [vmem:[%s1 + $0x30] sm:$0xf]
  %v36 = vld [vmem:[%s1 + $0x34] sm:$0xf]
  %v37 = vld [vmem:[%s1 + $0x38] sm:$0xf]
  %v38 = vld [vmem:[%s1 + $0x3c] sm:$0xf]
  %v47 = vunpack.c.l.b16 %v15
  %v48 = vunpack.c.l.b16 %v16
  %v49 = vunpack.c.l.b16 %v17
  %v50 = vunpack.c.l.b16 %v18
  %v51 = vunpack.c.l.b16 %v19
  %v52 = vunpack.c.l.b16 %v20
  %v53 = vunpack.c.l.b16 %v21
  %v54 = vunpack.c.l.b16 %v22
  %v55 = vpack.c.b16 %v48, %v47
  %v56 = vpack.c.b16 %v50, %v49
  %v57 = vpack.c.b16 %v52, %v51
  %v58 = vpack.c.b16 %v54, %v53
  %v79 = vunpack.c.l.b16 %v23
  %v80 = vunpack.c.l.b16 %v24
  %v81 = vunpack.c.l.b16 %v25
  %v82 = vunpack.c.l.b16 %v26
  %v83 = vunpack.c.l.b16 %v27
  %v84 = vunpack.c.l.b16 %v28
  %v85 = vunpack.c.l.b16 %v29
  %v86 = vunpack.c.l.b16 %v30
  %v87 = vunpack.c.l.b16 %v31
  %v88 = vunpack.c.l.b16 %v32
  %v89 = vunpack.c.l.b16 %v33
  %v90 = vunpack.c.l.b16 %v34
  %v91 = vunpack.c.l.b16 %v35
  %v92 = vunpack.c.l.b16 %v36
  %v93 = vunpack.c.l.b16 %v37
  %v94 = vunpack.c.l.b16 %v38
  %v95 = vpack.c.b16 %v80, %v79
  %v96 = vpack.c.b16 %v82, %v81
  %v97 = vpack.c.b16 %v84, %v83
  %v98 = vpack.c.b16 %v86, %v85
  %v99 = vpack.c.b16 %v88, %v87
  %v100 = vpack.c.b16 %v90, %v89
  %v101 = vpack.c.b16 %v92, %v91
  %v102 = vpack.c.b16 %v94, %v93
  %111 = vmatprep.subr.bf16.mxu0 0
  %112 = vmatpush1.bf16.msra.mxu0 %v95
  %113 = vmatprep.subr.bf16.mxu0 0
  %114 = vmatpush1.bf16.msra.mxu0 %v96
  %115 = vmatprep.subr.bf16.mxu0 0
  %116 = vmatpush1.bf16.msra.mxu0 %v97
  %117 = vmatprep.subr.bf16.mxu0 0
  %118 = vmatpush1.bf16.msra.mxu0 %v98
  %119 = vmatprep.subr.bf16.mxu0 0
  %120 = vmatpush1.bf16.msra.mxu0 %v99
  %121 = vmatprep.subr.bf16.mxu0 0
  %122 = vmatpush1.bf16.msra.mxu0 %v100
  %123 = vmatprep.subr.bf16.mxu0 0
  %124 = vmatpush1.bf16.msra.mxu0 %v101
  %125 = vmatprep.subr.bf16.mxu0 0
  %126 = vmatpush1.bf16.msra.mxu0 %v102
  %127 = vmatprep.subr.bf16.mxu0 0
  %128 = vmatpush1.bf16.msra.mxu0 0
  %129 = vmatprep.subr.bf16.mxu0 0
  %130 = vmatpush1.bf16.msra.mxu0 0
  %131 = vmatprep.subr.bf16.mxu0 0
  %132 = vmatpush1.bf16.msra.mxu0 0
  %133 = vmatprep.subr.bf16.mxu0 0
  %134 = vmatpush1.bf16.msra.mxu0 0
  %135 = vmatprep.subr.bf16.mxu0 0
  %136 = vmatpush1.bf16.msra.mxu0 0
  %137 = vmatprep.subr.bf16.mxu0 0
  %138 = vmatpush1.bf16.msra.mxu0 0
  %139 = vmatprep.subr.bf16.mxu0 0
  %140 = vmatpush1.bf16.msra.mxu0 0
  %141 = vmatprep.subr.bf16.mxu0 0
  %142 = vmatpush1.bf16.msra.mxu0 0
  %143 = vmatprep.mubr.bf16.mxu0 0
  %144 = vmatmul.mubr.bf16.gmra.mrb[0].mxu0 %v55
  %v145 = vpop.f32.mrb[0].mxu0
  %v146 = vadd.f32 0.0, %v145
  %v147 = vpop.f32.mrb[0].mxu0
  %v148 = vpop.f32.mrb[0].mxu0
  %v149 = vadd.f32 0.0, %v148
  %v150 = vpop.f32.mrb[0].mxu0
  %151 = vmatprep.mubr.bf16.mxu0 0
  %152 = vmatmul.mubr.bf16.gmra.mrb[0].mxu0 %v56
  %v153 = vpop.f32.mrb[0].mxu0
  %v154 = vadd.f32 0.0, %v153
  %v155 = vpop.f32.mrb[0].mxu0
  %v156 = vpop.f32.mrb[0].mxu0
  %v157 = vadd.f32 0.0, %v156
  %v158 = vpop.f32.mrb[0].mxu0
  %159 = vmatprep.mubr.bf16.mxu0 0
  %160 = vmatmul.mubr.bf16.gmra.mrb[0].mxu0 %v57
  %v161 = vpop.f32.mrb[0].mxu0
  %v162 = vadd.f32 0.0, %v161
  %v163 = vpop.f32.mrb[0].mxu0
  %v164 = vpop.f32.mrb[0].mxu0
  %v165 = vadd.f32 0.0, %v164
  %v166 = vpop.f32.mrb[0].mxu0
  %167 = vmatprep.mubr.bf16.mxu0 0
  %168 = vmatmul.mubr.bf16.gmra.mrb[0].mxu0 %v58
  %v169 = vpop.f32.mrb[0].mxu0
  %v170 = vadd.f32 0.0, %v169
  %v171 = vpop.f32.mrb[0].mxu0
  %v172 = vpop.f32.mrb[0].mxu0
  %v173 = vadd.f32 0.0, %v172
  %v174 = vpop.f32.mrb[0].mxu0
  %175 = vdwg.mxu0
  %v176 = vpack.c.bf16 %v149, %v146
  %v177 = vpack.c.bf16 %v157, %v154
  %v178 = vpack.c.bf16 %v165, %v162
  %v179 = vpack.c.bf16 %v173, %v170
  %v184 = vunpack.c.l.b16 %v176
  %v185 = vunpack.c.h.b16 %v176
  %v186 = vunpack.c.l.b16 %v177
  %v187 = vunpack.c.h.b16 %v177
  %v188 = vunpack.c.l.b16 %v178
  %v189 = vunpack.c.h.b16 %v178
  %v190 = vunpack.c.l.b16 %v179
  %v191 = vunpack.c.h.b16 %v179
  %v192 = vpack.c.b16 %v184, %v184
  %v193 = vpack.c.b16 %v185, %v185
  %v194 = vpack.c.b16 %v186, %v186
  %v195 = vpack.c.b16 %v187, %v187
  %v196 = vpack.c.b16 %v188, %v188
  %v197 = vpack.c.b16 %v189, %v189
  %v198 = vpack.c.b16 %v190, %v190
  %v199 = vpack.c.b16 %v191, %v191
  %vm208 = vcmask 257024
  %209 = vst.msk [vmem:[%s2] sm:$0xf] %vm208, %v192
  %210 = vst.msk [vmem:[%s2 + $0x4] sm:$0xf] %vm208, %v193
  %211 = vst.msk [vmem:[%s2 + $0x8] sm:$0xf] %vm208, %v194
  %212 = vst.msk [vmem:[%s2 + $0xc] sm:$0xf] %vm208, %v195
  %213 = vst.msk [vmem:[%s2 + $0x10] sm:$0xf] %vm208, %v196
  %214 = vst.msk [vmem:[%s2 + $0x14] sm:$0xf] %vm208, %v197
  %215 = vst.msk [vmem:[%s2 + $0x18] sm:$0xf] %vm208, %v198
  %216 = vst.msk [vmem:[%s2 + $0x1c] sm:$0xf] %vm208, %v199
  %vm217 = vcmask 261120
  %v218 = vsel %vm217, %v146, 0.0
  %219 = vadd.xlane.f32.xlu0 %v218
  %v220 = vpop.xlane.xlu0 %219
  %v221 = vsel %vm217, %v149, 0.0
  %222 = vadd.xlane.f32.xlu0 %v221
  %v223 = vpop.xlane.xlu0 %222
  %v224 = vsel %vm217, %v154, 0.0
  %225 = vadd.xlane.f32.xlu0 %v224
  %v226 = vpop.xlane.xlu0 %225
  %v227 = vsel %vm217, %v157, 0.0
  %228 = vadd.xlane.f32.xlu0 %v227
  %v229 = vpop.xlane.xlu0 %228
  %v230 = vsel %vm217, %v162, 0.0
  %231 = vadd.xlane.f32.xlu0 %v230
  %v232 = vpop.xlane.xlu0 %231
  %v233 = vsel %vm217, %v165, 0.0
  %234 = vadd.xlane.f32.xlu0 %v233
  %v235 = vpop.xlane.xlu0 %234
  %v236 = vsel %vm217, %v170, 0.0
  %237 = vadd.xlane.f32.xlu0 %v236
  %v238 = vpop.xlane.xlu0 %237
  %v239 = vsel %vm217, %v173, 0.0
  %240 = vadd.xlane.f32.xlu0 %v239
  %v241 = vpop.xlane.xlu0 %240
  %vm242 = vcmask 7168
  %243 = vst.msk [vmem:[%s3] sm:$0xff] %vm242, %v220
  %244 = vst.msk [vmem:[%s3 + $0x8] sm:$0xff] %vm242, %v223
  %245 = vst.msk [vmem:[%s3 + $0x10] sm:$0xff] %vm242, %v226
  %246 = vst.msk [vmem:[%s3 + $0x18] sm:$0xff] %vm242, %v229
  %247 = vst.msk [vmem:[%s3 + $0x20] sm:$0xff] %vm242, %v232
  %248 = vst.msk [vmem:[%s3 + $0x28] sm:$0xff] %vm242, %v235
  %249 = vst.msk [vmem:[%s3 + $0x30] sm:$0xff] %vm242, %v238
  %250 = vst.msk [vmem:[%s3 + $0x38] sm:$0xff] %vm242, %v241
  %v251 = vmul.f32 %v146, %v146
  %v252 = vmul.f32 %v149, %v149
  %v253 = vmul.f32 %v154, %v154
  %v254 = vmul.f32 %v157, %v157
  %v255 = vmul.f32 %v162, %v162
  %v256 = vmul.f32 %v165, %v165
  %v257 = vmul.f32 %v170, %v170
  %v258 = vmul.f32 %v173, %v173
  %v259 = vsel %vm217, %v251, 0.0
  %260 = vadd.xlane.f32.xlu0 %v259
  %v261 = vpop.xlane.xlu0 %260
  %v262 = vsel %vm217, %v252, 0.0
  %263 = vadd.xlane.f32.xlu0 %v262
  %v264 = vpop.xlane.xlu0 %263
  %v265 = vsel %vm217, %v253, 0.0
  %266 = vadd.xlane.f32.xlu0 %v265
  %v267 = vpop.xlane.xlu0 %266
  %v268 = vsel %vm217, %v254, 0.0
  %269 = vadd.xlane.f32.xlu0 %v268
  %v270 = vpop.xlane.xlu0 %269
  %v271 = vsel %vm217, %v255, 0.0
  %272 = vadd.xlane.f32.xlu0 %v271
  %v273 = vpop.xlane.xlu0 %272
  %v274 = vsel %vm217, %v256, 0.0
  %275 = vadd.xlane.f32.xlu0 %v274
  %v276 = vpop.xlane.xlu0 %275
  %v277 = vsel %vm217, %v257, 0.0
  %278 = vadd.xlane.f32.xlu0 %v277
  %v279 = vpop.xlane.xlu0 %278
  %v280 = vsel %vm217, %v258, 0.0
  %281 = vadd.xlane.f32.xlu0 %v280
  %v282 = vpop.xlane.xlu0 %281
  %283 = vst.msk [vmem:[%s4] sm:$0xff] %vm242, %v261
  %284 = vst.msk [vmem:[%s4 + $0x8] sm:$0xff] %vm242, %v264
  %285 = vst.msk [vmem:[%s4 + $0x10] sm:$0xff] %vm242, %v267
  %286 = vst.msk [vmem:[%s4 + $0x18] sm:$0xff] %vm242, %v270
  %287 = vst.msk [vmem:[%s4 + $0x20] sm:$0xff] %vm242, %v273
  %288 = vst.msk [vmem:[%s4 + $0x28] sm:$0xff] %vm242, %v276
  %289 = vst.msk [vmem:[%s4 + $0x30] sm:$0xff] %vm242, %v279
  %290 = vst.msk [vmem:[%s4 + $0x38] sm:$0xff] %vm242, %v282
  // Predicated region
  $region10: #{resnet_generator_forward.33} parent=0 // pred_check
    _
  $region11: #{resnet_generator_forward.33} parent=0 // pred_check_branch
    %292 = sbr.rel (0) target = $region13
  $region12: #{resnet_generator_forward.33} parent=0 // pred_region
    _
  $region13: #{resnet_generator_forward.33} parent=0 // pred_fallthru
    _
  // Predicated region
  $region14: #{resnet_generator_forward.33} parent=0 // pred_check
    _
  $region15: #{resnet_generator_forward.33} parent=0 // pred_check_branch
    %294 = sbr.rel (0) target = $region17
  $region16: #{resnet_generator_forward.33} parent=0 // pred_region
    _
  $region17: #{resnet_generator_forward.33} parent=0 // pred_fallthru
    _
  // Predicated region
  $region18: #{resnet_generator_forward.33} parent=0 // pred_check
    _
  $region19: #{resnet_generator_forward.33} parent=0 // pred_check_branch
    %296 = sbr.rel (0) target = $region21
  $region20: #{resnet_generator_forward.33} parent=0 // pred_region
    _
  $region21: #{resnet_generator_forward.33} parent=0 // pred_fallthru
    _
  // Predicated region
  $region22: #{resnet_generator_forward.33} parent=0 // pred_check
    _
  $region23: #{resnet_generator_forward.33} parent=0 // pred_check_branch
    %298 = sbr.rel (0) target = $region25
  $region24: #{resnet_generator_forward.33} parent=0 // pred_region
    _
  $region25: #{resnet_generator_forward.33} parent=0 // pred_fallthru
    _
  // Predicated region
  $region26: #{resnet_generator_forward.33} parent=0 // pred_check
    _
  $region27: #{resnet_generator_forward.33} parent=0 // pred_check_branch
    %300 = sbr.rel (0) target = $region29
  $region28: #{resnet_generator_forward.33} parent=0 // pred_region
    _
  $region29: #{resnet_generator_forward.33} parent=0 // pred_fallthru
    _
  // Predicated region
  $region30: #{resnet_generator_forward.33} parent=0 // pred_check
    _
  $region31: #{resnet_generator_forward.33} parent=0 // pred_check_branch
    %302 = sbr.rel (0) target = $region33
  $region32: #{resnet_generator_forward.33} parent=0 // pred_region
    _
  $region33: #{resnet_generator_forward.33} parent=0 // pred_fallthru
    _

// kernel: tile.37
$region0: #{tile.37}
  #allocation0 [shape = 's32[1]{0}', space=sflag, size = 0x4, scoped, tag = 'scoped memory for tile.37']
  %s0 = inlined_call_operand.vmem [shape: f32[8], index: 0, kind: input, shape index: {}]
  %s1 = inlined_call_operand.vmem [shape: f32[4,8], index: 1, kind: output, shape index: {}]
  // Predicated region
  $region2: #{tile.37} parent=0 // pred_check
    _
  $region3: #{tile.37} parent=0 // pred_check_branch
    %3 = sbr.rel (0) target = $region5
  $region4: #{tile.37} parent=0 // pred_region
    _
  $region5: #{tile.37} parent=0 // pred_fallthru
    _
  %v4 = vld [vmem:[%s0] ss:$0 sm:$0xff]
  %5 = vst [vmem:[%s1] sm:$0xf] %v4

// kernel: resnet_generator_forward.34
$region0: #{resnet_generator_forward.34}
  #allocation0 [shape = 'u32[]', space=smem, size = 0x4, offset = 0x4, fixed_abs, tag = 'smem constant byte address 0x4 - core index']
  #allocation1 [shape = 'u32[144,128]{1,0:T(1,128)}', space=vmem, size = 0x12000, scoped, tag = 'internal scratch']
  %s0 = inlined_call_operand.vmem [shape: bf16[64,32], index: 0, kind: input, shape index: {}]
  %s1 = inlined_call_operand.vmem [shape: f32[64,1], index: 1, kind: input, shape index: {}]
  %s2 = inlined_call_operand.vmem [shape: f32[64,1], index: 2, kind: input, shape index: {}]
  %s3 = inlined_call_operand.vmem [shape: bf16[64,32], index: 3, kind: output, shape index: {}]
  %s4 = sld [smem:[#allocation0]]
  $region22: #{resnet_generator_forward.34} parent=0
    _
  %s6 = ssub.s32 1, %s4
  %s7 = scalar_select 0, %s6, %s4
  // Predicated region
  $region2: #{resnet_generator_forward.34} parent=0 // pred_check
    _
  $region3: #{resnet_generator_forward.34} parent=0 // pred_check_branch
    %9 = sbr.rel (0) target = $region5
  $region4: #{resnet_generator_forward.34} parent=0 // pred_region
    _
  $region5: #{resnet_generator_forward.34} parent=0 // pred_fallthru
    _
  // Predicated region
  $region6: #{resnet_generator_forward.34} parent=0 // pred_check
    _
  $region7: #{resnet_generator_forward.34} parent=0 // pred_check_branch
    %11 = sbr.rel (0) target = $region9
  $region8: #{resnet_generator_forward.34} parent=0 // pred_region
    _
  $region9: #{resnet_generator_forward.34} parent=0 // pred_fallthru
    _
  // Predicated region
  $region10: #{resnet_generator_forward.34} parent=0 // pred_check
    _
  $region11: #{resnet_generator_forward.34} parent=0 // pred_check_branch
    %13 = sbr.rel (0) target = $region13
  $region12: #{resnet_generator_forward.34} parent=0 // pred_region
    _
  $region13: #{resnet_generator_forward.34} parent=0 // pred_fallthru
    _
  %v14 = vld [vmem:[%s0] sm:$0xf]
  %v15 = vld [vmem:[%s0 + $0x4] sm:$0xf]
  %v16 = vld [vmem:[%s0 + $0x8] sm:$0xf]
  %v17 = vld [vmem:[%s0 + $0xc] sm:$0xf]
  %v18 = vld [vmem:[%s0 + $0x10] sm:$0xf]
  %v19 = vld [vmem:[%s0 + $0x14] sm:$0xf]
  %v20 = vld [vmem:[%s0 + $0x18] sm:$0xf]
  %v21 = vld [vmem:[%s0 + $0x1c] sm:$0xf]
  %v22 = vunpack.c.l.bf16 %v14
  %v23 = vunpack.c.l.bf16 %v15
  %v24 = vunpack.c.l.bf16 %v16
  %v25 = vunpack.c.l.bf16 %v17
  %v26 = vunpack.c.l.bf16 %v18
  %v27 = vunpack.c.l.bf16 %v19
  %v28 = vunpack.c.l.bf16 %v20
  %v29 = vunpack.c.l.bf16 %v21
  %v30 = vld [vmem:[%s1] sm:$0xff]
  %v31 = vld [vmem:[%s1 + $0x8] sm:$0xff]
  %v32 = vld [vmem:[%s1 + $0x10] sm:$0xff]
  %v33 = vld [vmem:[%s1 + $0x18] sm:$0xff]
  %v34 = vld [vmem:[%s1 + $0x20] sm:$0xff]
  %v35 = vld [vmem:[%s1 + $0x28] sm:$0xff]
  %v36 = vld [vmem:[%s1 + $0x30] sm:$0xff]
  %v37 = vld [vmem:[%s1 + $0x38] sm:$0xff]
  %39 = vset.pattern.permute.xlu0 0
  %40 = vperm.xlu0 %39, %v30
  %v41 = vpop.permute.xlu0 %40
  %44 = vset.pattern.permute.xlu0 0
  %45 = vperm.xlu0 %44, %v31
  %v46 = vpop.permute.xlu0 %45
  %49 = vset.pattern.permute.xlu0 0
  %50 = vperm.xlu0 %49, %v32
  %v51 = vpop.permute.xlu0 %50
  %54 = vset.pattern.permute.xlu0 0
  %55 = vperm.xlu0 %54, %v33
  %v56 = vpop.permute.xlu0 %55
  %59 = vset.pattern.permute.xlu0 0
  %60 = vperm.xlu0 %59, %v34
  %v61 = vpop.permute.xlu0 %60
  %64 = vset.pattern.permute.xlu0 0
  %65 = vperm.xlu0 %64, %v35
  %v66 = vpop.permute.xlu0 %65
  %69 = vset.pattern.permute.xlu0 0
  %70 = vperm.xlu0 %69, %v36
  %v71 = vpop.permute.xlu0 %70
  %74 = vset.pattern.permute.xlu0 0
  %75 = vperm.xlu0 %74, %v37
  %v76 = vpop.permute.xlu0 %75
  %v78 = vmul.f32 %v22, %v41
  %v79 = vmul.f32 %v23, %v46
  %v80 = vmul.f32 %v24, %v51
  %v81 = vmul.f32 %v25, %v56
  %v82 = vmul.f32 %v26, %v61
  %v83 = vmul.f32 %v27, %v66
  %v84 = vmul.f32 %v28, %v71
  %v85 = vmul.f32 %v29, %v76
  %v86 = vld [vmem:[%s2] sm:$0xff]
  %v87 = vld [vmem:[%s2 + $0x8] sm:$0xff]
  %v88 = vld [vmem:[%s2 + $0x10] sm:$0xff]
  %v89 = vld [vmem:[%s2 + $0x18] sm:$0xff]
  %v90 = vld [vmem:[%s2 + $0x20] sm:$0xff]
  %v91 = vld [vmem:[%s2 + $0x28] sm:$0xff]
  %v92 = vld [vmem:[%s2 + $0x30] sm:$0xff]
  %v93 = vld [vmem:[%s2 + $0x38] sm:$0xff]
  %95 = vset.pattern.permute.xlu0 0
  %96 = vperm.xlu0 %95, %v86
  %v97 = vpop.permute.xlu0 %96
  %100 = vset.pattern.permute.xlu0 0
  %101 = vperm.xlu0 %100, %v87
  %v102 = vpop.permute.xlu0 %101
  %105 = vset.pattern.permute.xlu0 0
  %106 = vperm.xlu0 %105, %v88
  %v107 = vpop.permute.xlu0 %106
  %110 = vset.pattern.permute.xlu0 0
  %111 = vperm.xlu0 %110, %v89
  %v112 = vpop.permute.xlu0 %111
  %115 = vset.pattern.permute.xlu0 0
  %116 = vperm.xlu0 %115, %v90
  %v117 = vpop.permute.xlu0 %116
  %120 = vset.pattern.permute.xlu0 0
  %121 = vperm.xlu0 %120, %v91
  %v122 = vpop.permute.xlu0 %121
  %125 = vset.pattern.permute.xlu0 0
  %126 = vperm.xlu0 %125, %v92
  %v127 = vpop.permute.xlu0 %126
  %130 = vset.pattern.permute.xlu0 0
  %131 = vperm.xlu0 %130, %v93
  %v132 = vpop.permute.xlu0 %131
  %v134 = vadd.f32 %v78, %v97
  %v135 = vadd.f32 %v79, %v102
  %v136 = vadd.f32 %v80, %v107
  %v137 = vadd.f32 %v81, %v112
  %v138 = vadd.f32 %v82, %v117
  %v139 = vadd.f32 %v83, %v122
  %v140 = vadd.f32 %v84, %v127
  %v141 = vadd.f32 %v85, %v132
  %v142 = vmax.f32 %v134, 0.0
  %v143 = vmax.f32 %v135, 0.0
  %v144 = vmax.f32 %v136, 0.0
  %v145 = vmax.f32 %v137, 0.0
  %v146 = vmax.f32 %v138, 0.0
  %v147 = vmax.f32 %v139, 0.0
  %v148 = vmax.f32 %v140, 0.0
  %v149 = vmax.f32 %v141, 0.0
  %v150 = vpack.c.bf16 %v143, %v142
  %v151 = vpack.c.bf16 %v145, %v144
  %v152 = vpack.c.bf16 %v147, %v146
  %v153 = vpack.c.bf16 %v149, %v148
  %v158 = vunpack.c.l.b16 %v150
  %v159 = vunpack.c.h.b16 %v150
  %v160 = vunpack.c.l.b16 %v151
  %v161 = vunpack.c.h.b16 %v151
  %v162 = vunpack.c.l.b16 %v152
  %v163 = vunpack.c.h.b16 %v152
  %v164 = vunpack.c.l.b16 %v153
  %v165 = vunpack.c.h.b16 %v153
  %v166 = vpack.c.b16 %v158, %v158
  %v167 = vpack.c.b16 %v159, %v159
  %v168 = vpack.c.b16 %v160, %v160
  %v169 = vpack.c.b16 %v161, %v161
  %v170 = vpack.c.b16 %v162, %v162
  %v171 = vpack.c.b16 %v163, %v163
  %v172 = vpack.c.b16 %v164, %v164
  %v173 = vpack.c.b16 %v165, %v165
  %vm182 = vcmask 257024
  %183 = vst.msk [vmem:[%s3] sm:$0xf] %vm182, %v166
  %184 = vst.msk [vmem:[%s3 + $0x4] sm:$0xf] %vm182, %v167
  %185 = vst.msk [vmem:[%s3 + $0x8] sm:$0xf] %vm182, %v168
  %186 = vst.msk [vmem:[%s3 + $0xc] sm:$0xf] %vm182, %v169
  %187 = vst.msk [vmem:[%s3 + $0x10] sm:$0xf] %vm182, %v170
  %188 = vst.msk [vmem:[%s3 + $0x14] sm:$0xf] %vm182, %v171
  %189 = vst.msk [vmem:[%s3 + $0x18] sm:$0xf] %vm182, %v172
  %190 = vst.msk [vmem:[%s3 + $0x1c] sm:$0xf] %vm182, %v173
  // Predicated region
  $region14: #{resnet_generator_forward.34} parent=0 // pred_check
    _
  $region15: #{resnet_generator_forward.34} parent=0 // pred_check_branch
    %192 = sbr.rel (0) target = $region17
  $region16: #{resnet_generator_forward.34} parent=0 // pred_region
    _
  $region17: #{resnet_generator_forward.34} parent=0 // pred_fallthru
    _
  // Predicated region
  $region18: #{resnet_generator_forward.34} parent=0 // pred_check
    _
  $region19: #{resnet_generator_forward.34} parent=0 // pred_check_branch
    %194 = sbr.rel (0) target = $region21
  $region20: #{resnet_generator_forward.34} parent=0 // pred_region
    _
  $region21: #{resnet_generator_forward.34} parent=0 // pred_fallthru
    _

// kernel: tile.2
$region0: #{tile.2}
  %s0 = inlined_call_operand.vmem [shape: f32[4,8], index: 0, kind: input, shape index: {}]
  %s1 = inlined_call_operand.vmem [shape: f32[32,1], index: 1, kind: output, shape index: {}]
  $region1: #{tile.2} parent=0
    #allocation0 [shape = 'u8[4096]{0}', space=vmem, size = 0x1000, scoped, tag = 'scoped mem for input reshape']
    %s3 = sshllo.u32 0, 4
    %v4 = vld [vmem:[%s0] sm:%s3]
    %5 = vst [vmem:[#allocation0] sm:%s3] %v4
    %v6 = vld [vmem:[#allocation0] sm:$0xf]
    %vm7 = vcmask 7168
    %8 = vst.msk [vmem:[%s1] ss:$8 sm:$0xf] %vm7, %v6
    %v9 = vld [vmem:[#allocation0] sm:$0xf]
    %10 = vrot.lane.b32.xlu0 %v9, 127
    %v11 = vpop.permute.xlu0 %10
    %vm12 = vcmask 7168
    %s13 = scalar_lea.vmem %s1, 1
    %14 = vst.msk [vmem:[%s13] ss:$8 sm:$0xf] %vm12, %v11
    %v15 = vld [vmem:[#allocation0] sm:$0xf]
    %16 = vrot.lane.b32.xlu0 %v15, 126
    %v17 = vpop.permute.xlu0 %16
    %vm18 = vcmask 7168
    %s19 = scalar_lea.vmem %s1, 2
    %20 = vst.msk [vmem:[%s19] ss:$8 sm:$0xf] %vm18, %v17
    %v21 = vld [vmem:[#allocation0] sm:$0xf]
    %22 = vrot.lane.b32.xlu0 %v21, 125
    %v23 = vpop.permute.xlu0 %22
    %vm24 = vcmask 7168
    %s25 = scalar_lea.vmem %s1, 3
    %26 = vst.msk [vmem:[%s25] ss:$8 sm:$0xf] %vm24, %v23
    %v27 = vld [vmem:[#allocation0] sm:$0xf]
    %28 = vrot.lane.b32.xlu0 %v27, 124
    %v29 = vpop.permute.xlu0 %28
    %vm30 = vcmask 7168
    %s31 = scalar_lea.vmem %s1, 4
    %32 = vst.msk [vmem:[%s31] ss:$8 sm:$0xf] %vm30, %v29
    %v33 = vld [vmem:[#allocation0] sm:$0xf]
    %34 = vrot.lane.b32.xlu0 %v33, 123
    %v35 = vpop.permute.xlu0 %34
    %vm36 = vcmask 7168
    %s37 = scalar_lea.vmem %s1, 5
    %38 = vst.msk [vmem:[%s37] ss:$8 sm:$0xf] %vm36, %v35
    %v39 = vld [vmem:[#allocation0] sm:$0xf]
    %40 = vrot.lane.b32.xlu0 %v39, 122
    %v41 = vpop.permute.xlu0 %40
    %vm42 = vcmask 7168
    %s43 = scalar_lea.vmem %s1, 6
    %44 = vst.msk [vmem:[%s43] ss:$8 sm:$0xf] %vm42, %v41
    %v45 = vld [vmem:[#allocation0] sm:$0xf]
    %46 = vrot.lane.b32.xlu0 %v45, 121
    %v47 = vpop.permute.xlu0 %46
    %vm48 = vcmask 7168
    %s49 = scalar_lea.vmem %s1, 7
    %50 = vst.msk [vmem:[%s49] ss:$8 sm:$0xf] %vm48, %v47

// kernel: resnet_generator_forward.35
$region0: #{resnet_generator_forward.35}
  #allocation0 [shape = 'u32[]', space=smem, size = 0x4, offset = 0x4, fixed_abs, tag = 'smem constant byte address 0x4 - core index']
  #allocation1 [shape = 'u32[144,128]{1,0:T(1,128)}', space=vmem, size = 0x12000, scoped, tag = 'internal scratch']
  %s0 = inlined_call_operand.vmem [shape: bf16[32,64], index: 0, kind: input, shape index: {}]
  %s1 = inlined_call_operand.vmem [shape: bf16[64,128], index: 1, kind: input, shape index: {}]
  %s2 = inlined_call_operand.vmem [shape: bf16[32,128], index: 2, kind: output, shape index: {0}]
  %s3 = inlined_call_operand.vmem [shape: f32[1,32,1], index: 3, kind: output, shape index: {1}]
  %s4 = inlined_call_operand.vmem [shape: f32[1,32,1], index: 4, kind: output, shape index: {2}]
  %5 = xla_tuple %s2, %s3, %s4
  %s6 = sld [smem:[#allocation0]]
  $region34: #{resnet_generator_forward.35} parent=0
    _
  %s8 = ssub.s32 1, %s6
  %s9 = scalar_select 0, %s8, %s6
  // Predicated region
  $region2: #{resnet_generator_forward.35} parent=0 // pred_check
    _
  $region3: #{resnet_generator_forward.35} parent=0 // pred_check_branch
    %11 = sbr.rel (0) target = $region5
  $region4: #{resnet_generator_forward.35} parent=0 // pred_region
    _
  $region5: #{resnet_generator_forward.35} parent=0 // pred_fallthru
    _
  // Predicated region
  $region6: #{resnet_generator_forward.35} parent=0 // pred_check
    _
  $region7: #{resnet_generator_forward.35} parent=0 // pred_check_branch
    %13 = sbr.rel (0) target = $region9
  $region8: #{resnet_generator_forward.35} parent=0 // pred_region
    _
  $region9: #{resnet_generator_forward.35} parent=0 // pred_fallthru
    _
  %v15 = vld [vmem:[%s0] sm:$0xf]
  %v16 = vld [vmem:[%s0 + $0x4] sm:$0xf]
  %v17 = vld [vmem:[%s0 + $0x8] sm:$0xf]
  %v18 = vld [vmem:[%s0 + $0xc] sm:$0xf]
  %v19 = vld [vmem:[%s1] sm:$0xf]
  %v20 = vld [vmem:[%s1 + $0x4] sm:$0xf]
  %v21 = vld [vmem:[%s1 + $0x8] sm:$0xf]
  %v22 = vld [vmem:[%s1 + $0xc] sm:$0xf]
  %v23 = vld [vmem:[%s1 + $0x10] sm:$0xf]
  %v24 = vld [vmem:[%s1 + $0x14] sm:$0xf]
  %v25 = vld [vmem:[%s1 + $0x18] sm:$0xf]
  %v26 = vld [vmem:[%s1 + $0x1c] sm:$0xf]
  %v31 = vunpack.c.l.b16 %v15
  %v32 = vunpack.c.l.b16 %v16
  %v33 = vunpack.c.l.b16 %v17
  %v34 = vunpack.c.l.b16 %v18
  %v35 = vpack.c.b16 %v32, %v31
  %v36 = vpack.c.b16 %v34, %v33
  %v45 = vunpack.c.l.b16 %v19
  %v46 = vunpack.c.l.b16 %v20
  %v47 = vunpack.c.l.b16 %v21
  %v48 = vunpack.c.l.b16 %v22
  %v49 = vunpack.c.l.b16 %v23
  %v50 = vunpack.c.l.b16 %v24
  %v51 = vunpack.c.l.b16 %v25
  %v52 = vunpack.c.l.b16 %v26
  %v53 = vpack.c.b16 %v46, %v45
  %v54 = vpack.c.b16 %v48, %v47
  %v55 = vpack.c.b16 %v50, %v49
  %v56 = vpack.c.b16 %v52, %v51
  %vm61 = vcmask 523264
  %v63 = vsel %vm61, %v35, 0
  %v66 = vsel %vm61, %v36, 0
  %68 = vmatprep.subr.bf16.mxu0 0
  %69 = vmatpush1.bf16.msra.mxu0 %v53
  %70 = vmatprep.subr.bf16.mxu0 0
  %71 = vmatpush1.bf16.msra.mxu0 %v54
  %72 = vmatprep.subr.bf16.mxu0 0
  %73 = vmatpush1.bf16.msra.mxu0 %v55
  %74 = vmatprep.subr.bf16.mxu0 0
  %75 = vmatpush1.bf16.msra.mxu0 %v56
  %76 = vmatprep.subr.bf16.mxu0 0
  %77 = vmatpush1.bf16.msra.mxu0 0
  %78 = vmatprep.subr.bf16.mxu0 0
  %79 = vmatpush1.bf16.msra.mxu0 0
  %80 = vmatprep.subr.bf16.mxu0 0
  %81 = vmatpush1.bf16.msra.mxu0 0
  %82 = vmatprep.subr.bf16.mxu0 0
  %83 = vmatpush1.bf16.msra.mxu0 0
  %84 = vmatprep.subr.bf16.mxu0 0
  %85 = vmatpush1.bf16.msra.mxu0 0
  %86 = vmatprep.subr.bf16.mxu0 0
  %87 = vmatpush1.bf16.msra.mxu0 0
  %88 = vmatprep.subr.bf16.mxu0 0
  %89 = vmatpush1.bf16.msra.mxu0 0
  %90 = vmatprep.subr.bf16.mxu0 0
  %91 = vmatpush1.bf16.msra.mxu0 0
  %92 = vmatprep.subr.bf16.mxu0 0
  %93 = vmatpush1.bf16.msra.mxu0 0
  %94 = vmatprep.subr.bf16.mxu0 0
  %95 = vmatpush1.bf16.msra.mxu0 0
  %96 = vmatprep.subr.bf16.mxu0 0
  %97 = vmatpush1.bf16.msra.mxu0 0
  %98 = vmatprep.subr.bf16.mxu0 0
  %99 = vmatpush1.bf16.msra.mxu0 0
  %100 = vmatprep.mubr.bf16.mxu0 0
  %101 = vmatmul.mubr.bf16.gmra.mrb[0].mxu0 %v63
  %v102 = vpop.f32.mrb[0].mxu0
  %v103 = vadd.f32 0.0, %v102
  %v104 = vpop.f32.mrb[0].mxu0
  %v105 = vpop.f32.mrb[0].mxu0
  %v106 = vadd.f32 0.0, %v105
  %v107 = vpop.f32.mrb[0].mxu0
  %108 = vmatprep.mubr.bf16.mxu0 0
  %109 = vmatmul.mubr.bf16.gmra.mrb[0].mxu0 %v66
  %v110 = vpop.f32.mrb[0].mxu0
  %v111 = vadd.f32 0.0, %v110
  %v112 = vpop.f32.mrb[0].mxu0
  %v113 = vpop.f32.mrb[0].mxu0
  %v114 = vadd.f32 0.0, %v113
  %v115 = vpop.f32.mrb[0].mxu0
  %116 = vdwg.mxu0
  %v117 = vpack.c.bf16 %v106, %v103
  %v118 = vpack.c.bf16 %v114, %v111
  %v121 = vunpack.c.l.b16 %v117
  %v122 = vunpack.c.h.b16 %v117
  %v123 = vunpack.c.l.b16 %v118
  %v124 = vunpack.c.h.b16 %v118
  %v125 = vpack.c.b16 %v121, %v121
  %v126 = vpack.c.b16 %v122, %v122
  %v127 = vpack.c.b16 %v123, %v123
  %v128 = vpack.c.b16 %v124, %v124
  %133 = vst [vmem:[%s2] sm:$0xf] %v125
  %134 = vst [vmem:[%s2 + $0x4] sm:$0xf] %v126
  %135 = vst [vmem:[%s2 + $0x8] sm:$0xf] %v127
  %136 = vst [vmem:[%s2 + $0xc] sm:$0xf] %v128
  %137 = vadd.xlane.f32.xlu0 %v103
  %v138 = vpop.xlane.xlu0 %137
  %139 = vadd.xlane.f32.xlu0 %v106
  %v140 = vpop.xlane.xlu0 %139
  %141 = vadd.xlane.f32.xlu0 %v111
  %v142 = vpop.xlane.xlu0 %141
  %143 = vadd.xlane.f32.xlu0 %v114
  %v144 = vpop.xlane.xlu0 %143
  %vm145 = vcmask 7168
  %146 = vst.msk [vmem:[%s3] sm:$0xff] %vm145, %v138
  %147 = vst.msk [vmem:[%s3 + $0x8] sm:$0xff] %vm145, %v140
  %148 = vst.msk [vmem:[%s3 + $0x10] sm:$0xff] %vm145, %v142
  %149 = vst.msk [vmem:[%s3 + $0x18] sm:$0xff] %vm145, %v144
  %v150 = vmul.f32 %v103, %v103
  %v151 = vmul.f32 %v106, %v106
  %v152 = vmul.f32 %v111, %v111
  %v153 = vmul.f32 %v114, %v114
  %154 = vadd.xlane.f32.xlu0 %v150
  %v155 = vpop.xlane.xlu0 %154
  %156 = vadd.xlane.f32.xlu0 %v151
  %v157 = vpop.xlane.xlu0 %156
  %158 = vadd.xlane.f32.xlu0 %v152
  %v159 = vpop.xlane.xlu0 %158
  %160 = vadd.xlane.f32.xlu0 %v153
  %v161 = vpop.xlane.xlu0 %160
  %162 = vst.msk [vmem:[%s4] sm:$0xff] %vm145, %v155
  %163 = vst.msk [vmem:[%s4 + $0x8] sm:$0xff] %vm145, %v157
  %164 = vst.msk [vmem:[%s4 + $0x10] sm:$0xff] %vm145, %v159
  %165 = vst.msk [vmem:[%s4 + $0x18] sm:$0xff] %vm145, %v161
  // Predicated region
  $region10: #{resnet_generator_forward.35} parent=0 // pred_check
    _
  $region11: #{resnet_generator_forward.35} parent=0 // pred_check_branch
    %167 = sbr.rel (0) target = $region13
  $region12: #{resnet_generator_forward.35} parent=0 // pred_region
    _
  $region13: #{resnet_generator_forward.35} parent=0 // pred_fallthru
    _
  // Predicated region
  $region14: #{resnet_generator_forward.35} parent=0 // pred_check
    _
  $region15: #{resnet_generator_forward.35} parent=0 // pred_check_branch
    %169 = sbr.rel (0) target = $region17
  $region16: #{resnet_generator_forward.35} parent=0 // pred_region
    _
  $region17: #{resnet_generator_forward.35} parent=0 // pred_fallthru
    _
  // Predicated region
  $region18: #{resnet_generator_forward.35} parent=0 // pred_check
    _
  $region19: #{resnet_generator_forward.35} parent=0 // pred_check_branch
    %171 = sbr.rel (0) target = $region21
  $region20: #{resnet_generator_forward.35} parent=0 // pred_region
    _
  $region21: #{resnet_generator_forward.35} parent=0 // pred_fallthru
    _
  // Predicated region
  $region22: #{resnet_generator_forward.35} parent=0 // pred_check
    _
  $region23: #{resnet_generator_forward.35} parent=0 // pred_check_branch
    %173 = sbr.rel (0) target = $region25
  $region24: #{resnet_generator_forward.35} parent=0 // pred_region
    _
  $region25: #{resnet_generator_forward.35} parent=0 // pred_fallthru
    _
  // Predicated region
  $region26: #{resnet_generator_forward.35} parent=0 // pred_check
    _
  $region27: #{resnet_generator_forward.35} parent=0 // pred_check_branch
    %175 = sbr.rel (0) target = $region29
  $region28: #{resnet_generator_forward.35} parent=0 // pred_region
    _
  $region29: #{resnet_generator_forward.35} parent=0 // pred_fallthru
    _
  // Predicated region
  $region30: #{resnet_generator_forward.35} parent=0 // pred_check
    _
  $region31: #{resnet_generator_forward.35} parent=0 // pred_check_branch
    %177 = sbr.rel (0) target = $region33
  $region32: #{resnet_generator_forward.35} parent=0 // pred_region
    _
  $region33: #{resnet_generator_forward.35} parent=0 // pred_fallthru
    _

// kernel: resnet_generator_forward.36
$region0: #{resnet_generator_forward.36}
  #allocation0 [shape = 'u32[]', space=smem, size = 0x4, offset = 0x4, fixed_abs, tag = 'smem constant byte address 0x4 - core index']
  #allocation1 [shape = 'u32[144,128]{1,0:T(1,128)}', space=vmem, size = 0x12000, scoped, tag = 'internal scratch']
  %s0 = inlined_call_operand.vmem [shape: bf16[32,128], index: 0, kind: input, shape index: {}]
  %s1 = inlined_call_operand.vmem [shape: f32[32,1], index: 1, kind: input, shape index: {}]
  %s2 = inlined_call_operand.vmem [shape: f32[32,1], index: 2, kind: input, shape index: {}]
  %s3 = inlined_call_operand.vmem [shape: bf16[32,128], index: 3, kind: output, shape index: {}]
  %s4 = sld [smem:[#allocation0]]
  $region22: #{resnet_generator_forward.36} parent=0
    _
  %s6 = ssub.s32 1, %s4
  %s7 = scalar_select 0, %s6, %s4
  // Predicated region
  $region2: #{resnet_generator_forward.36} parent=0 // pred_check
    _
  $region3: #{resnet_generator_forward.36} parent=0 // pred_check_branch
    %9 = sbr.rel (0) target = $region5
  $region4: #{resnet_generator_forward.36} parent=0 // pred_region
    _
  $region5: #{resnet_generator_forward.36} parent=0 // pred_fallthru
    _
  // Predicated region
  $region6: #{resnet_generator_forward.36} parent=0 // pred_check
    _
  $region7: #{resnet_generator_forward.36} parent=0 // pred_check_branch
    %11 = sbr.rel (0) target = $region9
  $region8: #{resnet_generator_forward.36} parent=0 // pred_region
    _
  $region9: #{resnet_generator_forward.36} parent=0 // pred_fallthru
    _
  // Predicated region
  $region10: #{resnet_generator_forward.36} parent=0 // pred_check
    _
  $region11: #{resnet_generator_forward.36} parent=0 // pred_check_branch
    %13 = sbr.rel (0) target = $region13
  $region12: #{resnet_generator_forward.36} parent=0 // pred_region
    _
  $region13: #{resnet_generator_forward.36} parent=0 // pred_fallthru
    _
  %v14 = vld [vmem:[%s0] sm:$0xf]
  %v15 = vld [vmem:[%s0 + $0x4] sm:$0xf]
  %v16 = vld [vmem:[%s0 + $0x8] sm:$0xf]
  %v17 = vld [vmem:[%s0 + $0xc] sm:$0xf]
  %v18 = vunpack.c.l.bf16 %v14
  %v19 = vunpack.c.l.bf16 %v15
  %v20 = vunpack.c.l.bf16 %v16
  %v21 = vunpack.c.l.bf16 %v17
  %v22 = vld [vmem:[%s1] sm:$0xff]
  %v23 = vld [vmem:[%s1 + $0x8] sm:$0xff]
  %v24 = vld [vmem:[%s1 + $0x10] sm:$0xff]
  %v25 = vld [vmem:[%s1 + $0x18] sm:$0xff]
  %27 = vset.pattern.permute.xlu0 0
  %28 = vperm.xlu0 %27, %v22
  %v29 = vpop.permute.xlu0 %28
  %32 = vset.pattern.permute.xlu0 0
  %33 = vperm.xlu0 %32, %v23
  %v34 = vpop.permute.xlu0 %33
  %37 = vset.pattern.permute.xlu0 0
  %38 = vperm.xlu0 %37, %v24
  %v39 = vpop.permute.xlu0 %38
  %42 = vset.pattern.permute.xlu0 0
  %43 = vperm.xlu0 %42, %v25
  %v44 = vpop.permute.xlu0 %43
  %v46 = vmul.f32 %v18, %v29
  %v47 = vmul.f32 %v19, %v34
  %v48 = vmul.f32 %v20, %v39
  %v49 = vmul.f32 %v21, %v44
  %v50 = vld [vmem:[%s2] sm:$0xff]
  %v51 = vld [vmem:[%s2 + $0x8] sm:$0xff]
  %v52 = vld [vmem:[%s2 + $0x10] sm:$0xff]
  %v53 = vld [vmem:[%s2 + $0x18] sm:$0xff]
  %55 = vset.pattern.permute.xlu0 0
  %56 = vperm.xlu0 %55, %v50
  %v57 = vpop.permute.xlu0 %56
  %60 = vset.pattern.permute.xlu0 0
  %61 = vperm.xlu0 %60, %v51
  %v62 = vpop.permute.xlu0 %61
  %65 = vset.pattern.permute.xlu0 0
  %66 = vperm.xlu0 %65, %v52
  %v67 = vpop.permute.xlu0 %66
  %70 = vset.pattern.permute.xlu0 0
  %71 = vperm.xlu0 %70, %v53
  %v72 = vpop.permute.xlu0 %71
  %v74 = vadd.f32 %v46, %v57
  %v75 = vadd.f32 %v47, %v62
  %v76 = vadd.f32 %v48, %v67
  %v77 = vadd.f32 %v49, %v72
  %v78 = vmax.f32 %v74, 0.0
  %v79 = vmax.f32 %v75, 0.0
  %v80 = vmax.f32 %v76, 0.0
  %v81 = vmax.f32 %v77, 0.0
  %v82 = vpack.c.bf16 %v79, %v78
  %v83 = vpack.c.bf16 %v81, %v80
  %v86 = vunpack.c.l.b16 %v82
  %v87 = vunpack.c.h.b16 %v82
  %v88 = vunpack.c.l.b16 %v83
  %v89 = vunpack.c.h.b16 %v83
  %v90 = vpack.c.b16 %v86, %v86
  %v91 = vpack.c.b16 %v87, %v87
  %v92 = vpack.c.b16 %v88, %v88
  %v93 = vpack.c.b16 %v89, %v89
  %98 = vst [vmem:[%s3] sm:$0xf] %v90
  %99 = vst [vmem:[%s3 + $0x4] sm:$0xf] %v91
  %100 = vst [vmem:[%s3 + $0x8] sm:$0xf] %v92
  %101 = vst [vmem:[%s3 + $0xc] sm:$0xf] %v93
  // Predicated region
  $region14: #{resnet_generator_forward.36} parent=0 // pred_check
    _
  $region15: #{resnet_generator_forward.36} parent=0 // pred_check_branch
    %103 = sbr.rel (0) target = $region17
  $region16: #{resnet_generator_forward.36} parent=0 // pred_region
    _
  $region17: #{resnet_generator_forward.36} parent=0 // pred_fallthru
    _
  // Predicated region
  $region18: #{resnet_generator_forward.36} parent=0 // pred_check
    _
  $region19: #{resnet_generator_forward.36} parent=0 // pred_check_branch
    %105 = sbr.rel (0) target = $region21
  $region20: #{resnet_generator_forward.36} parent=0 // pred_region
    _
  $region21: #{resnet_generator_forward.36} parent=0 // pred_fallthru
    _

// kernel: resnet_generator_forward.37
$region0: #{resnet_generator_forward.37}
  #allocation0 [shape = 'u32[]', space=smem, size = 0x4, offset = 0x4, fixed_abs, tag = 'smem constant byte address 0x4 - core index']
  #allocation1 [shape = 'u32[144,128]{1,0:T(1,128)}', space=vmem, size = 0x12000, scoped, tag = 'internal scratch']
  %s0 = inlined_call_operand.vmem [shape: bf16[3,400], index: 0, kind: input, shape index: {}]
  %s1 = inlined_call_operand.vmem [shape: bf16[400,512], index: 1, kind: input, shape index: {}]
  %s2 = inlined_call_operand.vmem [shape: f32[3,1], index: 2, kind: input, shape index: {}]
  %s3 = inlined_call_operand.vmem [shape: f32[3,512], index: 3, kind: input, shape index: {}]
  %s4 = inlined_call_operand.vmem [shape: f32[3,512], index: 4, kind: output, shape index: {}]
  %s5 = sld [smem:[#allocation0]]
  $region87: #{resnet_generator_forward.37} parent=0
    _
  %s7 = ssub.s32 1, %s5
  %s8 = scalar_select 0, %s7, %s5
  $region1: #{resnet_generator_forward.37} parent=0
    #allocation2 [shape = 'u8[409600]{0}', space=vmem, size = 0x64000, scoped, tag = 'input window, operand 1']
    loop: start=0, step=1, limit=4
    $region2: #{resnet_generator_forward.37} parent=1 // loop_pre_header
      _
    $region3: #{resnet_generator_forward.37} parent=1 // loop_header
      %s10 = sphi 0, %s14
      %p11 = scmp.ge.s32.totalorder %s10, 4
      %s18 = sphi 0, %s18
      %s20 = sphi 0, %s18
      %s21 = sphi 0, %s20
      %s35 = sphi 0, %s21
      %s41 = sphi 0, %s43
      %s44 = sphi 0, %s41
      %s45 = sphi 0, %s44
      %s61 = sphi 0, %s45
      %s65 = sphi 0, %s65
      %s67 = sphi 0, %s65
      %s68 = sphi 0, %s67
      %s82 = sphi 0, %s68
      %s88 = sphi 0, %s90
      %s91 = sphi 0, %s88
      %s92 = sphi 0, %s91
      %s108 = sphi 0, %s92
      %s114 = sphi 0, %s116
      %s117 = sphi 0, %s114
      %s118 = sphi 0, %s117
      %s134 = sphi 0, %s118
    $region4: #{resnet_generator_forward.37} parent=1 // loop_header_branch
      %13 = sbr.rel (%p11) target = $region8
    $region5: #{resnet_generator_forward.37} parent=1 // loop_body
      %s15 = ssub.s32 %s10, 1
      %s16 = ssub.s32 %s10, 2
      %s17 = sadd.s32 %s10, 1
      %s19 = sadd.s32 %s18, 1
      %p22 = scmp.eq.s32.totalorder %s10, 1
      %p23 = scmp.ne.s32.totalorder %s18, %s20
      %p24 = scmp.eq.s32.totalorder %s10, 0
      %p25 = por %p23, %p24
      %p26 = scmp.ne.s32.totalorder %s18, %s20
      %p27 = scmp.eq.s32.totalorder %s15, 1
      %p28 = por %p26, %p27
      %p29 = scmp.ne.s32.totalorder %s20, %s21
      %p30 = scmp.eq.s32.totalorder %s15, 0
      %p31 = por %p29, %p30
      %p32 = scmp.ne.s32.totalorder %s20, %s21
      %p33 = scmp.eq.s32.totalorder %s16, 1
      %p34 = por %p32, %p33
      %p36 = scmp.ne.s32.totalorder %s21, %s35
      %p37 = scmp.eq.s32.totalorder %s16, 0
      %p38 = por %p36, %p37
      %s39 = ssub.s32 %s10, %s17
      %p40 = scmp.eq.s32.totalorder %s39, 0
      %s42 = sadd.s32 %s41, 1
      %s43 = scalar_select %p40, %s41, %s42
      %p46 = pneg %p40
      %p47 = scmp.eq.s32.totalorder %s10, 1
      %p48 = por %p46, %p47
      %p49 = scmp.ne.s32.totalorder %s41, %s44
      %p50 = scmp.eq.s32.totalorder %s10, 0
      %p51 = por %p49, %p50
      %p52 = scmp.ne.s32.totalorder %s41, %s44
      %p53 = scmp.eq.s32.totalorder %s15, 1
      %p54 = por %p52, %p53
      %p55 = scmp.ne.s32.totalorder %s44, %s45
      %p56 = scmp.eq.s32.totalorder %s15, 0
      %p57 = por %p55, %p56
      %p58 = scmp.ne.s32.totalorder %s44, %s45
      %p59 = scmp.eq.s32.totalorder %s16, 1
      %p60 = por %p58, %p59
      %p62 = scmp.ne.s32.totalorder %s45, %s61
      %p63 = scmp.eq.s32.totalorder %s16, 0
      %p64 = por %p62, %p63
      %s66 = sadd.s32 %s65, 1
      %p69 = scmp.eq.s32.totalorder %s10, 1
      %p70 = scmp.ne.s32.totalorder %s65, %s67
      %p71 = scmp.eq.s32.totalorder %s10, 0
      %p72 = por %p70, %p71
      %p73 = scmp.ne.s32.totalorder %s65, %s67
      %p74 = scmp.eq.s32.totalorder %s15, 1
      %p75 = por %p73, %p74
      %p76 = scmp.ne.s32.totalorder %s67, %s68
      %p77 = scmp.eq.s32.totalorder %s15, 0
      %p78 = por %p76, %p77
      %p79 = scmp.ne.s32.totalorder %s67, %s68
      %p80 = scmp.eq.s32.totalorder %s16, 1
      %p81 = por %p79, %p80
      %p83 = scmp.ne.s32.totalorder %s68, %s82
      %p84 = scmp.eq.s32.totalorder %s16, 0
      %p85 = por %p83, %p84
      %s86 = ssub.s32 %s10, %s17
      %p87 = scmp.eq.s32.totalorder %s86, 0
      %s89 = sadd.s32 %s88, 1
      %s90 = scalar_select %p87, %s88, %s89
      %p93 = pneg %p87
      %p94 = scmp.eq.s32.totalorder %s10, 1
      %p95 = por %p93, %p94
      %p96 = scmp.ne.s32.totalorder %s88, %s91
      %p97 = scmp.eq.s32.totalorder %s10, 0
      %p98 = por %p96, %p97
      %p99 = scmp.ne.s32.totalorder %s88, %s91
      %p100 = scmp.eq.s32.totalorder %s15, 1
      %p101 = por %p99, %p100
      %p102 = scmp.ne.s32.totalorder %s91, %s92
      %p103 = scmp.eq.s32.totalorder %s15, 0
      %p104 = por %p102, %p103
      %p105 = scmp.ne.s32.totalorder %s91, %s92
      %p106 = scmp.eq.s32.totalorder %s16, 1
      %p107 = por %p105, %p106
      %p109 = scmp.ne.s32.totalorder %s92, %s108
      %p110 = scmp.eq.s32.totalorder %s16, 0
      %p111 = por %p109, %p110
      %s112 = ssub.s32 %s10, %s17
      %p113 = scmp.eq.s32.totalorder %s112, 0
      %s115 = sadd.s32 %s114, 1
      %s116 = scalar_select %p113, %s114, %s115
      %p119 = pneg %p113
      %p120 = scmp.eq.s32.totalorder %s10, 1
      %p121 = por %p119, %p120
      %p122 = scmp.ne.s32.totalorder %s114, %s117
      %p123 = scmp.eq.s32.totalorder %s10, 0
      %p124 = por %p122, %p123
      %p125 = scmp.ne.s32.totalorder %s114, %s117
      %p126 = scmp.eq.s32.totalorder %s15, 1
      %p127 = por %p125, %p126
      %p128 = scmp.ne.s32.totalorder %s117, %s118
      %p129 = scmp.eq.s32.totalorder %s15, 0
      %p130 = por %p128, %p129
      %p131 = scmp.ne.s32.totalorder %s117, %s118
      %p132 = scmp.eq.s32.totalorder %s16, 1
      %p133 = por %p131, %p132
      %p135 = scmp.ne.s32.totalorder %s118, %s134
      %p136 = scmp.eq.s32.totalorder %s16, 0
      %p137 = por %p135, %p136
      %p138 = scmp.le.s32.totalorder 1, %s10
      %p139 = scmp.lt.s32.totalorder %s10, 3
      %p140 = pnand %p138, %p139
      %p141 = pneg %p140
      // Predicated region
      $region9: #{resnet_generator_forward.37} parent=5 // pred_check
        _
      $region10: #{resnet_generator_forward.37} parent=5 // pred_check_branch
        %143 = sbr.rel (%p140) target = $region12
      $region11: #{resnet_generator_forward.37} parent=5 // pred_region
        %s144 = ssub.s32 %s10, 1
        // Predicated region
        $region13: #{resnet_generator_forward.37} parent=11 // pred_check
          %p145 = pneg %p31
        $region14: #{resnet_generator_forward.37} parent=11 // pred_check_branch
          %147 = sbr.rel (%p145) target = $region16
        $region15: #{resnet_generator_forward.37} parent=11 // pred_region
          _
        $region16: #{resnet_generator_forward.37} parent=11 // pred_fallthru
          _
        // Predicated region
        $region17: #{resnet_generator_forward.37} parent=11 // pred_check
          %p148 = pneg %p78
        $region18: #{resnet_generator_forward.37} parent=11 // pred_check_branch
          %150 = sbr.rel (%p148) target = $region20
        $region19: #{resnet_generator_forward.37} parent=11 // pred_region
          _
        $region20: #{resnet_generator_forward.37} parent=11 // pred_fallthru
          _
      $region12: #{resnet_generator_forward.37} parent=5 // pred_fallthru
        _
      %p151 = scmp.lt.s32.totalorder %s10, 2
      // Predicated region
      $region21: #{resnet_generator_forward.37} parent=5 // pred_check
        %p152 = pneg %p151
      $region22: #{resnet_generator_forward.37} parent=5 // pred_check_branch
        %154 = sbr.rel (%p152) target = $region24
      $region23: #{resnet_generator_forward.37} parent=5 // pred_region
        // Predicated region
        $region25: #{resnet_generator_forward.37} parent=23 // pred_check
          %p155 = pneg %p51
        $region26: #{resnet_generator_forward.37} parent=23 // pred_check_branch
          %157 = sbr.rel (%p155) target = $region28
        $region27: #{resnet_generator_forward.37} parent=23 // pred_region
          %s158 = sand.u32 %s41, 1
          %s159 = sand.u32 %s41, 1
          %s160 = smul.addr %s159, 400
          %s161 = scalar_lea.vmem [#allocation2], %s160
          %s162 = smul.u32 2, %s10
          %s163 = smul.addr %s162, 4
          %s164 = scalar_lea.vmem %s1, %s163
          // Predicated region
          $region29: #{resnet_generator_forward.37} parent=27 // pred_check
            _
          $region30: #{resnet_generator_forward.37} parent=27 // pred_check_branch
            %166 = sbr.rel (0) target = $region32
          $region31: #{resnet_generator_forward.37} parent=27 // pred_region
            // Predicated region
            $region33: #{resnet_generator_forward.37} parent=31 // pred_check
              _
            $region34: #{resnet_generator_forward.37} parent=31 // pred_check_branch
              %168 = sbr.rel (0) target = $region36
            $region35: #{resnet_generator_forward.37} parent=31 // pred_region
              // Predicated region
              $region48: #{resnet_generator_forward.37} parent=35 // pred_check
                _
              $region49: #{resnet_generator_forward.37} parent=35 // pred_check_branch
                %281 = sbr.rel (0) target = $region51
              $region50: #{resnet_generator_forward.37} parent=35 // pred_region
                loop: start=0, step=1, limit=1
                $region52: #{resnet_generator_forward.37} parent=50 // loop_pre_header
                  _
                $region53: #{resnet_generator_forward.37} parent=50 // loop_header
                  %s283 = sphi 0, %s287
                  %p284 = scmp.ge.s32.totalorder %s283, 1
                  %s288 = sphi %s164, %s164
                  %s289 = sphi %s161, %s161
                $region54: #{resnet_generator_forward.37} parent=50 // loop_header_branch
                  %286 = sbr.rel (%p284) target = $region58
                $region55: #{resnet_generator_forward.37} parent=50 // loop_body
                  %v290 = vld [vmem:[%s288] sm:$0xff]
                  %291 = vst [vmem:[%s289] sm:$0xff] %v290
                  %v292 = vld [vmem:[%s288 + $0x10] sm:$0xff]
                  %293 = vst [vmem:[%s289 + $0x8] sm:$0xff] %v292
                  %v294 = vld [vmem:[%s288 + $0x20] sm:$0xff]
                  %295 = vst [vmem:[%s289 + $0x10] sm:$0xff] %v294
                  %v296 = vld [vmem:[%s288 + $0x30] sm:$0xff]
                  %297 = vst [vmem:[%s289 + $0x18] sm:$0xff] %v296
                  %v298 = vld [vmem:[%s288 + $0x40] sm:$0xff]
                  %299 = vst [vmem:[%s289 + $0x20] sm:$0xff] %v298
                  %v300 = vld [vmem:[%s288 + $0x50] sm:$0xff]
                  %301 = vst [vmem:[%s289 + $0x28] sm:$0xff] %v300
                  %v302 = vld [vmem:[%s288 + $0x60] sm:$0xff]
                  %303 = vst [vmem:[%s289 + $0x30] sm:$0xff] %v302
                  %v304 = vld [vmem:[%s288 + $0x70] sm:$0xff]
                  %305 = vst [vmem:[%s289 + $0x38] sm:$0xff] %v304
                  %v306 = vld [vmem:[%s288 + $0x80] sm:$0xff]
                  %307 = vst [vmem:[%s289 + $0x40] sm:$0xff] %v306
                  %v308 = vld [vmem:[%s288 + $0x90] sm:$0xff]
                  %309 = vst [vmem:[%s289 + $0x48] sm:$0xff] %v308
                  %v310 = vld [vmem:[%s288 + $0xa0] sm:$0xff]
                  %311 = vst [vmem:[%s289 + $0x50] sm:$0xff] %v310
                  %v312 = vld [vmem:[%s288 + $0xb0] sm:$0xff]
                  %313 = vst [vmem:[%s289 + $0x58] sm:$0xff] %v312
                  %v314 = vld [vmem:[%s288 + $0xc0] sm:$0xff]
                  %315 = vst [vmem:[%s289 + $0x60] sm:$0xff] %v314
                  %v316 = vld [vmem:[%s288 + $0xd0] sm:$0xff]
                  %317 = vst [vmem:[%s289 + $0x68] sm:$0xff] %v316
                  %v318 = vld [vmem:[%s288 + $0xe0] sm:$0xff]
                  %319 = vst [vmem:[%s289 + $0x70] sm:$0xff] %v318
                  %v320 = vld [vmem:[%s288 + $0xf0] sm:$0xff]
                  %321 = vst [vmem:[%s289 + $0x78] sm:$0xff] %v320
                  %v322 = vld [vmem:[%s288 + $0x100] sm:$0xff]
                  %323 = vst [vmem:[%s289 + $0x80] sm:$0xff] %v322
                  %v324 = vld [vmem:[%s288 + $0x110] sm:$0xff]
                  %325 = vst [vmem:[%s289 + $0x88] sm:$0xff] %v324
                  %v326 = vld [vmem:[%s288 + $0x120] sm:$0xff]
                  %327 = vst [vmem:[%s289 + $0x90] sm:$0xff] %v326
                  %v328 = vld [vmem:[%s288 + $0x130] sm:$0xff]
                  %329 = vst [vmem:[%s289 + $0x98] sm:$0xff] %v328
                  %v330 = vld [vmem:[%s288 + $0x140] sm:$0xff]
                  %331 = vst [vmem:[%s289 + $0xa0] sm:$0xff] %v330
                  %v332 = vld [vmem:[%s288 + $0x150] sm:$0xff]
                  %333 = vst [vmem:[%s289 + $0xa8] sm:$0xff] %v332
                  %v334 = vld [vmem:[%s288 + $0x160] sm:$0xff]
                  %335 = vst [vmem:[%s289 + $0xb0] sm:$0xff] %v334
                  %v336 = vld [vmem:[%s288 + $0x170] sm:$0xff]
                  %337 = vst [vmem:[%s289 + $0xb8] sm:$0xff] %v336
                  %v338 = vld [vmem:[%s288 + $0x180] sm:$0xff]
                  %339 = vst [vmem:[%s289 + $0xc0] sm:$0xff] %v338
                  %v340 = vld [vmem:[%s288 + $0x190] sm:$0xff]
                  %341 = vst [vmem:[%s289 + $0xc8] sm:$0xff] %v340
                  %v342 = vld [vmem:[%s288 + $0x1a0] sm:$0xff]
                  %343 = vst [vmem:[%s289 + $0xd0] sm:$0xff] %v342
                  %v344 = vld [vmem:[%s288 + $0x1b0] sm:$0xff]
                  %345 = vst [vmem:[%s289 + $0xd8] sm:$0xff] %v344
                  %v346 = vld [vmem:[%s288 + $0x1c0] sm:$0xff]
                  %347 = vst [vmem:[%s289 + $0xe0] sm:$0xff] %v346
                  %v348 = vld [vmem:[%s288 + $0x1d0] sm:$0xff]
                  %349 = vst [vmem:[%s289 + $0xe8] sm:$0xff] %v348
                  %v350 = vld [vmem:[%s288 + $0x1e0] sm:$0xff]
                  %351 = vst [vmem:[%s289 + $0xf0] sm:$0xff] %v350
                  %v352 = vld [vmem:[%s288 + $0x1f0] sm:$0xff]
                  %353 = vst [vmem:[%s289 + $0xf8] sm:$0xff] %v352
                  %v354 = vld [vmem:[%s288 + $0x200] sm:$0xff]
                  %355 = vst [vmem:[%s289 + $0x100] sm:$0xff] %v354
                  %v356 = vld [vmem:[%s288 + $0x210] sm:$0xff]
                  %357 = vst [vmem:[%s289 + $0x108] sm:$0xff] %v356
                  %v358 = vld [vmem:[%s288 + $0x220] sm:$0xff]
                  %359 = vst [vmem:[%s289 + $0x110] sm:$0xff] %v358
                  %v360 = vld [vmem:[%s288 + $0x230] sm:$0xff]
                  %361 = vst [vmem:[%s289 + $0x118] sm:$0xff] %v360
                  %v362 = vld [vmem:[%s288 + $0x240] sm:$0xff]
                  %363 = vst [vmem:[%s289 + $0x120] sm:$0xff] %v362
                  %v364 = vld [vmem:[%s288 + $0x250] sm:$0xff]
                  %365 = vst [vmem:[%s289 + $0x128] sm:$0xff] %v364
                  %v366 = vld [vmem:[%s288 + $0x260] sm:$0xff]
                  %367 = vst [vmem:[%s289 + $0x130] sm:$0xff] %v366
                  %v368 = vld [vmem:[%s288 + $0x270] sm:$0xff]
                  %369 = vst [vmem:[%s289 + $0x138] sm:$0xff] %v368
                  %v370 = vld [vmem:[%s288 + $0x280] sm:$0xff]
                  %371 = vst [vmem:[%s289 + $0x140] sm:$0xff] %v370
                  %v372 = vld [vmem:[%s288 + $0x290] sm:$0xff]
                  %373 = vst [vmem:[%s289 + $0x148] sm:$0xff] %v372
                  %v374 = vld [vmem:[%s288 + $0x2a0] sm:$0xff]
                  %375 = vst [vmem:[%s289 + $0x150] sm:$0xff] %v374
                  %v376 = vld [vmem:[%s288 + $0x2b0] sm:$0xff]
                  %377 = vst [vmem:[%s289 + $0x158] sm:$0xff] %v376
                  %v378 = vld [vmem:[%s288 + $0x2c0] sm:$0xff]
                  %379 = vst [vmem:[%s289 + $0x160] sm:$0xff] %v378
                  %v380 = vld [vmem:[%s288 + $0x2d0] sm:$0xff]
                  %381 = vst [vmem:[%s289 + $0x168] sm:$0xff] %v380
                  %v382 = vld [vmem:[%s288 + $0x2e0] sm:$0xff]
                  %383 = vst [vmem:[%s289 + $0x170] sm:$0xff] %v382
                  %v384 = vld [vmem:[%s288 + $0x2f0] sm:$0xff]
                  %385 = vst [vmem:[%s289 + $0x178] sm:$0xff] %v384
                  %v386 = vld [vmem:[%s288 + $0x300] sm:$0xff]
                  %387 = vst [vmem:[%s289 + $0x180] sm:$0xff] %v386
                  %v388 = vld [vmem:[%s288 + $0x310] sm:$0xff]
                  %389 = vst [vmem:[%s289 + $0x188] sm:$0xff] %v388
                $region56: #{resnet_generator_forward.37} parent=50 // loop_footer
                  %s287 = sadd.s32 1, %s283
                $region57: #{resnet_generator_forward.37} parent=50 // loop_footer_branch
                  %282 = sbr.rel target = $region53
                $region58: #{resnet_generator_forward.37} parent=50 // loop_exit
                  _
              $region51: #{resnet_generator_forward.37} parent=35 // pred_fallthru
                _
              // Predicated region
              $region59: #{resnet_generator_forward.37} parent=35 // pred_check
                _
              $region60: #{resnet_generator_forward.37} parent=35 // pred_check_branch
                %391 = sbr.rel target = $region62
              $region61: #{resnet_generator_forward.37} parent=35 // pred_region
                _
              $region62: #{resnet_generator_forward.37} parent=35 // pred_fallthru
                _
            $region36: #{resnet_generator_forward.37} parent=31 // pred_fallthru
              _
            // Predicated region
            $region37: #{resnet_generator_forward.37} parent=31 // pred_check
              _
            $region38: #{resnet_generator_forward.37} parent=31 // pred_check_branch
              %170 = sbr.rel target = $region40
            $region39: #{resnet_generator_forward.37} parent=31 // pred_region
              loop: start=0, step=1, limit=1
              $region41: #{resnet_generator_forward.37} parent=39 // loop_pre_header
                _
              $region42: #{resnet_generator_forward.37} parent=39 // loop_header
                %s173 = sphi 0, %s177
                %p174 = scmp.ge.s32.totalorder %s173, 1
                %s178 = sphi %s164, %s164
                %s179 = sphi %s161, %s161
              $region43: #{resnet_generator_forward.37} parent=39 // loop_header_branch
                %176 = sbr.rel (%p174) target = $region47
              $region44: #{resnet_generator_forward.37} parent=39 // loop_body
                %v180 = vld [vmem:[%s178] sm:$0xff]
                %181 = vst [vmem:[%s179] sm:$0xff] %v180
                %v182 = vld [vmem:[%s178 + $0x10] sm:$0xff]
                %183 = vst [vmem:[%s179 + $0x8] sm:$0xff] %v182
                %v184 = vld [vmem:[%s178 + $0x20] sm:$0xff]
                %185 = vst [vmem:[%s179 + $0x10] sm:$0xff] %v184
                %v186 = vld [vmem:[%s178 + $0x30] sm:$0xff]
                %187 = vst [vmem:[%s179 + $0x18] sm:$0xff] %v186
                %v188 = vld [vmem:[%s178 + $0x40] sm:$0xff]
                %189 = vst [vmem:[%s179 + $0x20] sm:$0xff] %v188
                %v190 = vld [vmem:[%s178 + $0x50] sm:$0xff]
                %191 = vst [vmem:[%s179 + $0x28] sm:$0xff] %v190
                %v192 = vld [vmem:[%s178 + $0x60] sm:$0xff]
                %193 = vst [vmem:[%s179 + $0x30] sm:$0xff] %v192
                %v194 = vld [vmem:[%s178 + $0x70] sm:$0xff]
                %195 = vst [vmem:[%s179 + $0x38] sm:$0xff] %v194
                %v196 = vld [vmem:[%s178 + $0x80] sm:$0xff]
                %197 = vst [vmem:[%s179 + $0x40] sm:$0xff] %v196
                %v198 = vld [vmem:[%s178 + $0x90] sm:$0xff]
                %199 = vst [vmem:[%s179 + $0x48] sm:$0xff] %v198
                %v200 = vld [vmem:[%s178 + $0xa0] sm:$0xff]
                %201 = vst [vmem:[%s179 + $0x50] sm:$0xff] %v200
                %v202 = vld [vmem:[%s178 + $0xb0] sm:$0xff]
                %203 = vst [vmem:[%s179 + $0x58] sm:$0xff] %v202
                %v204 = vld [vmem:[%s178 + $0xc0] sm:$0xff]
                %205 = vst [vmem:[%s179 + $0x60] sm:$0xff] %v204
                %v206 = vld [vmem:[%s178 + $0xd0] sm:$0xff]
                %207 = vst [vmem:[%s179 + $0x68] sm:$0xff] %v206
                %v208 = vld [vmem:[%s178 + $0xe0] sm:$0xff]
                %209 = vst [vmem:[%s179 + $0x70] sm:$0xff] %v208
                %v210 = vld [vmem:[%s178 + $0xf0] sm:$0xff]
                %211 = vst [vmem:[%s179 + $0x78] sm:$0xff] %v210
                %v212 = vld [vmem:[%s178 + $0x100] sm:$0xff]
                %213 = vst [vmem:[%s179 + $0x80] sm:$0xff] %v212
                %v214 = vld [vmem:[%s178 + $0x110] sm:$0xff]
                %215 = vst [vmem:[%s179 + $0x88] sm:$0xff] %v214
                %v216 = vld [vmem:[%s178 + $0x120] sm:$0xff]
                %217 = vst [vmem:[%s179 + $0x90] sm:$0xff] %v216
                %v218 = vld [vmem:[%s178 + $0x130] sm:$0xff]
                %219 = vst [vmem:[%s179 + $0x98] sm:$0xff] %v218
                %v220 = vld [vmem:[%s178 + $0x140] sm:$0xff]
                %221 = vst [vmem:[%s179 + $0xa0] sm:$0xff] %v220
                %v222 = vld [vmem:[%s178 + $0x150] sm:$0xff]
                %223 = vst [vmem:[%s179 + $0xa8] sm:$0xff] %v222
                %v224 = vld [vmem:[%s178 + $0x160] sm:$0xff]
                %225 = vst [vmem:[%s179 + $0xb0] sm:$0xff] %v224
                %v226 = vld [vmem:[%s178 + $0x170] sm:$0xff]
                %227 = vst [vmem:[%s179 + $0xb8] sm:$0xff] %v226
                %v228 = vld [vmem:[%s178 + $0x180] sm:$0xff]
                %229 = vst [vmem:[%s179 + $0xc0] sm:$0xff] %v228
                %v230 = vld [vmem:[%s178 + $0x190] sm:$0xff]
                %231 = vst [vmem:[%s179 + $0xc8] sm:$0xff] %v230
                %v232 = vld [vmem:[%s178 + $0x1a0] sm:$0xff]
                %233 = vst [vmem:[%s179 + $0xd0] sm:$0xff] %v232
                %v234 = vld [vmem:[%s178 + $0x1b0] sm:$0xff]
                %235 = vst [vmem:[%s179 + $0xd8] sm:$0xff] %v234
                %v236 = vld [vmem:[%s178 + $0x1c0] sm:$0xff]
                %237 = vst [vmem:[%s179 + $0xe0] sm:$0xff] %v236
                %v238 = vld [vmem:[%s178 + $0x1d0] sm:$0xff]
                %239 = vst [vmem:[%s179 + $0xe8] sm:$0xff] %v238
                %v240 = vld [vmem:[%s178 + $0x1e0] sm:$0xff]
                %241 = vst [vmem:[%s179 + $0xf0] sm:$0xff] %v240
                %v242 = vld [vmem:[%s178 + $0x1f0] sm:$0xff]
                %243 = vst [vmem:[%s179 + $0xf8] sm:$0xff] %v242
                %v244 = vld [vmem:[%s178 + $0x200] sm:$0xff]
                %245 = vst [vmem:[%s179 + $0x100] sm:$0xff] %v244
                %v246 = vld [vmem:[%s178 + $0x210] sm:$0xff]
                %247 = vst [vmem:[%s179 + $0x108] sm:$0xff] %v246
                %v248 = vld [vmem:[%s178 + $0x220] sm:$0xff]
                %249 = vst [vmem:[%s179 + $0x110] sm:$0xff] %v248
                %v250 = vld [vmem:[%s178 + $0x230] sm:$0xff]
                %251 = vst [vmem:[%s179 + $0x118] sm:$0xff] %v250
                %v252 = vld [vmem:[%s178 + $0x240] sm:$0xff]
                %253 = vst [vmem:[%s179 + $0x120] sm:$0xff] %v252
                %v254 = vld [vmem:[%s178 + $0x250] sm:$0xff]
                %255 = vst [vmem:[%s179 + $0x128] sm:$0xff] %v254
                %v256 = vld [vmem:[%s178 + $0x260] sm:$0xff]
                %257 = vst [vmem:[%s179 + $0x130] sm:$0xff] %v256
                %v258 = vld [vmem:[%s178 + $0x270] sm:$0xff]
                %259 = vst [vmem:[%s179 + $0x138] sm:$0xff] %v258
                %v260 = vld [vmem:[%s178 + $0x280] sm:$0xff]
                %261 = vst [vmem:[%s179 + $0x140] sm:$0xff] %v260
                %v262 = vld [vmem:[%s178 + $0x290] sm:$0xff]
                %263 = vst [vmem:[%s179 + $0x148] sm:$0xff] %v262
                %v264 = vld [vmem:[%s178 + $0x2a0] sm:$0xff]
                %265 = vst [vmem:[%s179 + $0x150] sm:$0xff] %v264
                %v266 = vld [vmem:[%s178 + $0x2b0] sm:$0xff]
                %267 = vst [vmem:[%s179 + $0x158] sm:$0xff] %v266
                %v268 = vld [vmem:[%s178 + $0x2c0] sm:$0xff]
                %269 = vst [vmem:[%s179 + $0x160] sm:$0xff] %v268
                %v270 = vld [vmem:[%s178 + $0x2d0] sm:$0xff]
                %271 = vst [vmem:[%s179 + $0x168] sm:$0xff] %v270
                %v272 = vld [vmem:[%s178 + $0x2e0] sm:$0xff]
                %273 = vst [vmem:[%s179 + $0x170] sm:$0xff] %v272
                %v274 = vld [vmem:[%s178 + $0x2f0] sm:$0xff]
                %275 = vst [vmem:[%s179 + $0x178] sm:$0xff] %v274
                %v276 = vld [vmem:[%s178 + $0x300] sm:$0xff]
                %277 = vst [vmem:[%s179 + $0x180] sm:$0xff] %v276
                %v278 = vld [vmem:[%s178 + $0x310] sm:$0xff]
                %279 = vst [vmem:[%s179 + $0x188] sm:$0xff] %v278
              $region45: #{resnet_generator_forward.37} parent=39 // loop_footer
                %s177 = sadd.s32 1, %s173
              $region46: #{resnet_generator_forward.37} parent=39 // loop_footer_branch
                %172 = sbr.rel target = $region42
              $region47: #{resnet_generator_forward.37} parent=39 // loop_exit
                _
            $region40: #{resnet_generator_forward.37} parent=31 // pred_fallthru
              _
          $region32: #{resnet_generator_forward.37} parent=27 // pred_fallthru
            _
          %392 = vnop
        $region28: #{resnet_generator_forward.37} parent=23 // pred_fallthru
          _
        // Predicated region
        $region63: #{resnet_generator_forward.37} parent=23 // pred_check
          %p393 = pneg %p98
        $region64: #{resnet_generator_forward.37} parent=23 // pred_check_branch
          %395 = sbr.rel (%p393) target = $region66
        $region65: #{resnet_generator_forward.37} parent=23 // pred_region
          %s396 = smul.u32 2, %s10
          %p397 = scmp.lt.s32.totalorder %s396, 3
          %s398 = scalar_select %p397, %s396, 3
          %s399 = smul.addr %s398, 4
          %s400 = scalar_lea.vmem %s3, %s399
          %s401 = smul.u32 2, %s10
        $region66: #{resnet_generator_forward.37} parent=23 // pred_fallthru
          _
      $region24: #{resnet_generator_forward.37} parent=5 // pred_fallthru
        _
      %p402 = scmp.le.s32.totalorder 1, %s10
      %p403 = scmp.lt.s32.totalorder %s10, 3
      %p404 = pnand %p402, %p403
      %p405 = pneg %p404
      // Predicated region
      $region67: #{resnet_generator_forward.37} parent=5 // pred_check
        _
      $region68: #{resnet_generator_forward.37} parent=5 // pred_check_branch
        %407 = sbr.rel (%p404) target = $region70
      $region69: #{resnet_generator_forward.37} parent=5 // pred_region
        %s408 = ssub.s32 %s10, 1
        %s409 = sand.u32 %s44, 1
        %s410 = sand.u32 %s44, 1
        %s411 = smul.addr %s410, 400
        %s412 = scalar_lea.vmem [#allocation2], %s411
        // Predicated region
        $region71: #{resnet_generator_forward.37} parent=69 // pred_check
          %p413 = pneg %p57
        $region72: #{resnet_generator_forward.37} parent=69 // pred_check_branch
          %415 = sbr.rel (%p413) target = $region74
        $region73: #{resnet_generator_forward.37} parent=69 // pred_region
          _
        $region74: #{resnet_generator_forward.37} parent=69 // pred_fallthru
          _
        %p416 = pneg %p31
        %p417 = pneg %p28
        %s418 = sand.u32 %s44, 1
        %s419 = sand.u32 %s44, 1
        %s420 = smul.addr %s419, 400
        %s421 = scalar_lea.vmem [#allocation2], %s420
        %p422 = pneg %p57
        %p423 = pneg %p54
        %p424 = pneg %p78
        %p425 = pneg %p75
        %s426 = smul.u32 2, %s15
        %p427 = scmp.lt.s32.totalorder %s426, 3
        %s428 = scalar_select %p427, %s426, 3
        %s429 = smul.addr %s428, 4
        %s430 = scalar_lea.vmem %s3, %s429
        %p431 = pneg %p104
        %p432 = pneg %p101
        %p433 = pneg %p130
        %p434 = pneg %p127
        %s435 = smul.u32 2, %s15
        %p436 = scmp.lt.s32.totalorder %s435, 3
        %s437 = scalar_select %p436, %s435, 3
        %s438 = smul.addr %s437, 4
        %s439 = scalar_lea.vmem %s4, %s438
        %s440 = smul.u32 2, %s15
        %s441 = smul.u32 2, %s15
        %p442 = scmp.lt.s32.totalorder %s441, 3
        %s443 = scalar_select %p442, %s441, 3
        %s444 = smul.addr %s443, 4
        %s445 = scalar_lea.vmem %s3, %s444
        %s446 = smul.u32 2, %s15
        %s447 = smul.u32 2, %s15
        %p448 = scmp.lt.s32.totalorder %s447, 3
        %s449 = scalar_select %p448, %s447, 3
        %s450 = smul.addr %s449, 4
        %s451 = scalar_lea.vmem %s4, %s450
        %s452 = smul.u32 2, %s15
        %v454 = vld [vmem:[%s0] sm:$0xff]
        %v455 = vld [vmem:[%s412] sm:$0xff]
        %v456 = vld [vmem:[%s412 + $0x8] sm:$0xff]
        %v457 = vld [vmem:[%s412 + $0x10] sm:$0xff]
        %v458 = vld [vmem:[%s412 + $0x18] sm:$0xff]
        %v459 = vld [vmem:[%s412 + $0x20] sm:$0xff]
        %v460 = vld [vmem:[%s412 + $0x28] sm:$0xff]
        %v461 = vld [vmem:[%s412 + $0x30] sm:$0xff]
        %v462 = vld [vmem:[%s412 + $0x38] sm:$0xff]
        %v463 = vld [vmem:[%s412 + $0x40] sm:$0xff]
        %v464 = vld [vmem:[%s412 + $0x48] sm:$0xff]
        %v465 = vld [vmem:[%s412 + $0x50] sm:$0xff]
        %v466 = vld [vmem:[%s412 + $0x58] sm:$0xff]
        %v467 = vld [vmem:[%s412 + $0x60] sm:$0xff]
        %v468 = vld [vmem:[%s412 + $0x68] sm:$0xff]
        %v469 = vld [vmem:[%s412 + $0x70] sm:$0xff]
        %v470 = vld [vmem:[%s412 + $0x78] sm:$0xff]
        %v471 = vld [vmem:[%s412 + $0x80] sm:$0xff]
        %v472 = vld [vmem:[%s412 + $0x88] sm:$0xff]
        %v473 = vld [vmem:[%s412 + $0x90] sm:$0xff]
        %v474 = vld [vmem:[%s412 + $0x98] sm:$0xff]
        %v475 = vld [vmem:[%s412 + $0xa0] sm:$0xff]
        %v476 = vld [vmem:[%s412 + $0xa8] sm:$0xff]
        %v477 = vld [vmem:[%s412 + $0xb0] sm:$0xff]
        %v478 = vld [vmem:[%s412 + $0xb8] sm:$0xff]
        %v479 = vld [vmem:[%s412 + $0xc0] sm:$0xff]
        %v480 = vld [vmem:[%s412 + $0xc8] sm:$0xff]
        %v481 = vld [vmem:[%s412 + $0xd0] sm:$0xff]
        %v482 = vld [vmem:[%s412 + $0xd8] sm:$0xff]
        %v483 = vld [vmem:[%s412 + $0xe0] sm:$0xff]
        %v484 = vld [vmem:[%s412 + $0xe8] sm:$0xff]
        %v485 = vld [vmem:[%s412 + $0xf0] sm:$0xff]
        %v486 = vld [vmem:[%s412 + $0xf8] sm:$0xff]
        %v487 = vld [vmem:[%s412 + $0x100] sm:$0xff]
        %v488 = vld [vmem:[%s412 + $0x108] sm:$0xff]
        %v489 = vld [vmem:[%s412 + $0x110] sm:$0xff]
        %v490 = vld [vmem:[%s412 + $0x118] sm:$0xff]
        %v491 = vld [vmem:[%s412 + $0x120] sm:$0xff]
        %v492 = vld [vmem:[%s412 + $0x128] sm:$0xff]
        %v493 = vld [vmem:[%s412 + $0x130] sm:$0xff]
        %v494 = vld [vmem:[%s412 + $0x138] sm:$0xff]
        %v495 = vld [vmem:[%s412 + $0x140] sm:$0xff]
        %v496 = vld [vmem:[%s412 + $0x148] sm:$0xff]
        %v497 = vld [vmem:[%s412 + $0x150] sm:$0xff]
        %v498 = vld [vmem:[%s412 + $0x158] sm:$0xff]
        %v499 = vld [vmem:[%s412 + $0x160] sm:$0xff]
        %v500 = vld [vmem:[%s412 + $0x168] sm:$0xff]
        %v501 = vld [vmem:[%s412 + $0x170] sm:$0xff]
        %v502 = vld [vmem:[%s412 + $0x178] sm:$0xff]
        %v503 = vld [vmem:[%s412 + $0x180] sm:$0xff]
        %v504 = vld [vmem:[%s412 + $0x188] sm:$0xff]
        %v505 = vld [vmem:[%s2] sm:$0x7]
        %507 = vset.pattern.permute.xlu0 0
        %508 = vperm.xlu0 %507, %v505
        %v509 = vpop.permute.xlu0 %508
        %v512 = vcombine.high %v454, %v454
        %v514 = vunpack.c.l.s4 1983009808
        %v515 = vunpack.c.0.s8 %v514
        %v516 = vlaneseq
        %v517 = vshrl.u32 %v516, 7
        %v518 = vsub.s32 %v515, %v517
        %v519 = vrot.slane %v454, %v518
        %v521 = vunpack.c.l.s4 1983009808
        %v522 = vunpack.c.0.s8 %v521
        %v523 = vlaneseq
        %v524 = vshrl.u32 %v523, 7
        %v525 = vsub.s32 %v522, %v524
        %v526 = vrot.slane %v512, %v525
        %v527 = vcombine.high %v519, %v519
        %v528 = vcombine.high %v526, %v526
        %v582 = vunpack.c.l.b16 %v455
        %v583 = vunpack.c.h.b16 %v455
        %v584 = vunpack.c.l.b16 %v456
        %v585 = vunpack.c.h.b16 %v456
        %v586 = vunpack.c.l.b16 %v457
        %v587 = vunpack.c.h.b16 %v457
        %v588 = vunpack.c.l.b16 %v458
        %v589 = vunpack.c.h.b16 %v458
        %v590 = vunpack.c.l.b16 %v459
        %v591 = vunpack.c.h.b16 %v459
        %v592 = vunpack.c.l.b16 %v460
        %v593 = vunpack.c.h.b16 %v460
        %v594 = vunpack.c.l.b16 %v461
        %v595 = vunpack.c.h.b16 %v461
        %v596 = vunpack.c.l.b16 %v462
        %v597 = vunpack.c.h.b16 %v462
        %v598 = vunpack.c.l.b16 %v463
        %v599 = vunpack.c.h.b16 %v463
        %v600 = vunpack.c.l.b16 %v464
        %v601 = vunpack.c.h.b16 %v464
        %v602 = vunpack.c.l.b16 %v465
        %v603 = vunpack.c.h.b16 %v465
        %v604 = vunpack.c.l.b16 %v466
        %v605 = vunpack.c.h.b16 %v466
        %v606 = vunpack.c.l.b16 %v467
        %v607 = vunpack.c.h.b16 %v467
        %v608 = vunpack.c.l.b16 %v468
        %v609 = vunpack.c.h.b16 %v468
        %v610 = vunpack.c.l.b16 %v469
        %v611 = vunpack.c.h.b16 %v469
        %v612 = vunpack.c.l.b16 %v470
        %v613 = vunpack.c.h.b16 %v470
        %v614 = vunpack.c.l.b16 %v471
        %v615 = vunpack.c.h.b16 %v471
        %v616 = vunpack.c.l.b16 %v472
        %v617 = vunpack.c.h.b16 %v472
        %v618 = vunpack.c.l.b16 %v473
        %v619 = vunpack.c.h.b16 %v473
        %v620 = vunpack.c.l.b16 %v474
        %v621 = vunpack.c.h.b16 %v474
        %v622 = vunpack.c.l.b16 %v475
        %v623 = vunpack.c.h.b16 %v475
        %v624 = vunpack.c.l.b16 %v476
        %v625 = vunpack.c.h.b16 %v476
        %v626 = vunpack.c.l.b16 %v477
        %v627 = vunpack.c.h.b16 %v477
        %v628 = vunpack.c.l.b16 %v478
        %v629 = vunpack.c.h.b16 %v478
        %v630 = vunpack.c.l.b16 %v479
        %v631 = vunpack.c.h.b16 %v479
        %v632 = vunpack.c.l.b16 %v480
        %v633 = vunpack.c.h.b16 %v480
        %v634 = vunpack.c.l.b16 %v481
        %v635 = vunpack.c.h.b16 %v481
        %v636 = vunpack.c.l.b16 %v482
        %v637 = vunpack.c.h.b16 %v482
        %v638 = vunpack.c.l.b16 %v483
        %v639 = vunpack.c.h.b16 %v483
        %v640 = vunpack.c.l.b16 %v484
        %v641 = vunpack.c.h.b16 %v484
        %v642 = vunpack.c.l.b16 %v485
        %v643 = vunpack.c.h.b16 %v485
        %v644 = vunpack.c.l.b16 %v486
        %v645 = vunpack.c.h.b16 %v486
        %v646 = vunpack.c.l.b16 %v487
        %v647 = vunpack.c.h.b16 %v487
        %v648 = vunpack.c.l.b16 %v488
        %v649 = vunpack.c.h.b16 %v488
        %v650 = vunpack.c.l.b16 %v489
        %v651 = vunpack.c.h.b16 %v489
        %v652 = vunpack.c.l.b16 %v490
        %v653 = vunpack.c.h.b16 %v490
        %v654 = vunpack.c.l.b16 %v491
        %v655 = vunpack.c.h.b16 %v491
        %v656 = vunpack.c.l.b16 %v492
        %v657 = vunpack.c.h.b16 %v492
        %v658 = vunpack.c.l.b16 %v493
        %v659 = vunpack.c.h.b16 %v493
        %v660 = vunpack.c.l.b16 %v494
        %v661 = vunpack.c.h.b16 %v494
        %v662 = vunpack.c.l.b16 %v495
        %v663 = vunpack.c.h.b16 %v495
        %v664 = vunpack.c.l.b16 %v496
        %v665 = vunpack.c.h.b16 %v496
        %v666 = vunpack.c.l.b16 %v497
        %v667 = vunpack.c.h.b16 %v497
        %v668 = vunpack.c.l.b16 %v498
        %v669 = vunpack.c.h.b16 %v498
        %v670 = vunpack.c.l.b16 %v499
        %v671 = vunpack.c.h.b16 %v499
        %v672 = vunpack.c.l.b16 %v500
        %v673 = vunpack.c.h.b16 %v500
        %v674 = vunpack.c.l.b16 %v501
        %v675 = vunpack.c.h.b16 %v501
        %v676 = vunpack.c.l.b16 %v502
        %v677 = vunpack.c.h.b16 %v502
        %v678 = vunpack.c.l.b16 %v503
        %v679 = vunpack.c.h.b16 %v503
        %v680 = vunpack.c.l.b16 %v504
        %v681 = vunpack.c.h.b16 %v504
        %v682 = vpack.c.b16 %v584, %v582
        %v683 = vpack.c.b16 %v585, %v583
        %v684 = vpack.c.b16 %v588, %v586
        %v685 = vpack.c.b16 %v589, %v587
        %v686 = vpack.c.b16 %v592, %v590
        %v687 = vpack.c.b16 %v593, %v591
        %v688 = vpack.c.b16 %v596, %v594
        %v689 = vpack.c.b16 %v597, %v595
        %v690 = vpack.c.b16 %v600, %v598
        %v691 = vpack.c.b16 %v601, %v599
        %v692 = vpack.c.b16 %v604, %v602
        %v693 = vpack.c.b16 %v605, %v603
        %v694 = vpack.c.b16 %v608, %v606
        %v695 = vpack.c.b16 %v609, %v607
        %v696 = vpack.c.b16 %v612, %v610
        %v697 = vpack.c.b16 %v613, %v611
        %v698 = vpack.c.b16 %v616, %v614
        %v699 = vpack.c.b16 %v617, %v615
        %v700 = vpack.c.b16 %v620, %v618
        %v701 = vpack.c.b16 %v621, %v619
        %v702 = vpack.c.b16 %v624, %v622
        %v703 = vpack.c.b16 %v625, %v623
        %v704 = vpack.c.b16 %v628, %v626
        %v705 = vpack.c.b16 %v629, %v627
        %v706 = vpack.c.b16 %v632, %v630
        %v707 = vpack.c.b16 %v633, %v631
        %v708 = vpack.c.b16 %v636, %v634
        %v709 = vpack.c.b16 %v637, %v635
        %v710 = vpack.c.b16 %v640, %v638
        %v711 = vpack.c.b16 %v641, %v639
        %v712 = vpack.c.b16 %v644, %v642
        %v713 = vpack.c.b16 %v645, %v643
        %v714 = vpack.c.b16 %v648, %v646
        %v715 = vpack.c.b16 %v649, %v647
        %v716 = vpack.c.b16 %v652, %v650
        %v717 = vpack.c.b16 %v653, %v651
        %v718 = vpack.c.b16 %v656, %v654
        %v719 = vpack.c.b16 %v657, %v655
        %v720 = vpack.c.b16 %v660, %v658
        %v721 = vpack.c.b16 %v661, %v659
        %v722 = vpack.c.b16 %v664, %v662
        %v723 = vpack.c.b16 %v665, %v663
        %v724 = vpack.c.b16 %v668, %v666
        %v725 = vpack.c.b16 %v669, %v667
        %v726 = vpack.c.b16 %v672, %v670
        %v727 = vpack.c.b16 %v673, %v671
        %v728 = vpack.c.b16 %v676, %v674
        %v729 = vpack.c.b16 %v677, %v675
        %v730 = vpack.c.b16 %v680, %v678
        %v731 = vpack.c.b16 %v681, %v679
        %vm782 = vcmask 130048
        %v784 = vsel %vm782, %v528, 0
        %786 = vmatprep.subr.bf16.mxu0 %v683
        %787 = vmatpush1.bf16.msra.mxu0 %v682
        %788 = vmatprep.subr.bf16.mxu0 %v685
        %789 = vmatpush1.bf16.msra.mxu0 %v684
        %790 = vmatprep.subr.bf16.mxu0 %v687
        %791 = vmatpush1.bf16.msra.mxu0 %v686
        %792 = vmatprep.subr.bf16.mxu0 %v689
        %793 = vmatpush1.bf16.msra.mxu0 %v688
        %794 = vmatprep.subr.bf16.mxu0 %v691
        %795 = vmatpush1.bf16.msra.mxu0 %v690
        %796 = vmatprep.subr.bf16.mxu0 %v693
        %797 = vmatpush1.bf16.msra.mxu0 %v692
        %798 = vmatprep.subr.bf16.mxu0 %v695
        %799 = vmatpush1.bf16.msra.mxu0 %v694
        %800 = vmatprep.subr.bf16.mxu0 %v697
        %801 = vmatpush1.bf16.msra.mxu0 %v696
        %802 = vmatprep.subr.bf16.mxu0 %v699
        %803 = vmatpush1.bf16.msra.mxu0 %v698
        %804 = vmatprep.subr.bf16.mxu0 %v701
        %805 = vmatpush1.bf16.msra.mxu0 %v700
        %806 = vmatprep.subr.bf16.mxu0 %v703
        %807 = vmatpush1.bf16.msra.mxu0 %v702
        %808 = vmatprep.subr.bf16.mxu0 %v705
        %809 = vmatpush1.bf16.msra.mxu0 %v704
        %810 = vmatprep.subr.bf16.mxu0 %v707
        %811 = vmatpush1.bf16.msra.mxu0 %v706
        %812 = vmatprep.subr.bf16.mxu0 %v709
        %813 = vmatpush1.bf16.msra.mxu0 %v708
        %814 = vmatprep.subr.bf16.mxu0 %v711
        %815 = vmatpush1.bf16.msra.mxu0 %v710
        %816 = vmatprep.subr.bf16.mxu0 %v713
        %817 = vmatpush1.bf16.msra.mxu0 %v712
        %818 = vmatprep.mubr.bf16.mxu0 %v527
        %819 = vmatmul.mubr.bf16.gmra.mrb[0].mxu0 %v519
        %v820 = vpop.f32.mrb[0].mxu0
        %v821 = vadd.f32 %v509, %v820
        %v822 = vpop.f32.mrb[0].mxu0
        %v823 = vadd.f32 %v509, %v822
        %v824 = vpop.f32.mrb[0].mxu0
        %v825 = vpop.f32.mrb[0].mxu0
        %826 = vdwg.mxu0
        %827 = vmatprep.subr.bf16.mxu0 %v715
        %828 = vmatpush1.bf16.msra.mxu0 %v714
        %829 = vmatprep.subr.bf16.mxu0 %v717
        %830 = vmatpush1.bf16.msra.mxu0 %v716
        %831 = vmatprep.subr.bf16.mxu0 %v719
        %832 = vmatpush1.bf16.msra.mxu0 %v718
        %833 = vmatprep.subr.bf16.mxu0 %v721
        %834 = vmatpush1.bf16.msra.mxu0 %v720
        %835 = vmatprep.subr.bf16.mxu0 %v723
        %836 = vmatpush1.bf16.msra.mxu0 %v722
        %837 = vmatprep.subr.bf16.mxu0 %v725
        %838 = vmatpush1.bf16.msra.mxu0 %v724
        %839 = vmatprep.subr.bf16.mxu0 %v727
        %840 = vmatpush1.bf16.msra.mxu0 %v726
        %841 = vmatprep.subr.bf16.mxu0 %v729
        %842 = vmatpush1.bf16.msra.mxu0 %v728
        %843 = vmatprep.subr.bf16.mxu0 %v731
        %844 = vmatpush1.bf16.msra.mxu0 %v730
        %845 = vmatprep.subr.bf16.mxu0 0
        %846 = vmatpush1.bf16.msra.mxu0 0
        %847 = vmatprep.subr.bf16.mxu0 0
        %848 = vmatpush1.bf16.msra.mxu0 0
        %849 = vmatprep.subr.bf16.mxu0 0
        %850 = vmatpush1.bf16.msra.mxu0 0
        %851 = vmatprep.subr.bf16.mxu0 0
        %852 = vmatpush1.bf16.msra.mxu0 0
        %853 = vmatprep.subr.bf16.mxu0 0
        %854 = vmatpush1.bf16.msra.mxu0 0
        %855 = vmatprep.subr.bf16.mxu0 0
        %856 = vmatpush1.bf16.msra.mxu0 0
        %857 = vmatprep.subr.bf16.mxu0 0
        %858 = vmatpush1.bf16.msra.mxu0 0
        %859 = vmatprep.mubr.bf16.mxu0 %v784
        %860 = vmatmul.mubr.bf16.gmra.mrb[0].mxu0 %v526
        %v861 = vpop.f32.mrb[0].mxu0
        %v862 = vadd.f32 %v821, %v861
        %v863 = vpop.f32.mrb[0].mxu0
        %v864 = vadd.f32 %v823, %v863
        %v865 = vpop.f32.mrb[0].mxu0
        %v866 = vpop.f32.mrb[0].mxu0
        %867 = vdwg.mxu0
        %v868 = vld [vmem:[%s445] sm:$0x77]
        %v870 = vcombine.high %v868, %v868
        %v872 = vadd.f32 %v862, %v868
        %v873 = vadd.f32 %v864, %v870
        %v876 = vcombine.low %v872, %v873
        %878 = vst [vmem:[%s451] sm:$0x77] %v876
        %s879 = smul.u32 2, %s15
        %p880 = scmp.lt.s32.totalorder %s879, 3
        %s881 = scalar_select %p880, %s879, 3
        %s882 = smul.addr %s881, 4
        %s883 = scalar_lea.vmem %s4, %s882
        // Predicated region
        $region75: #{resnet_generator_forward.37} parent=69 // pred_check
          %p884 = pneg %p127
        $region76: #{resnet_generator_forward.37} parent=69 // pred_check_branch
          %886 = sbr.rel (%p884) target = $region78
        $region77: #{resnet_generator_forward.37} parent=69 // pred_region
          %s887 = smul.u32 2, %s15
        $region78: #{resnet_generator_forward.37} parent=69 // pred_fallthru
          _
      $region70: #{resnet_generator_forward.37} parent=5 // pred_fallthru
        _
      %p888 = scmp.le.s32.totalorder 2, %s10
      // Predicated region
      $region79: #{resnet_generator_forward.37} parent=5 // pred_check
        %p889 = pneg %p888
      $region80: #{resnet_generator_forward.37} parent=5 // pred_check_branch
        %891 = sbr.rel (%p889) target = $region82
      $region81: #{resnet_generator_forward.37} parent=5 // pred_region
        %s892 = ssub.s32 %s10, 2
        // Predicated region
        $region83: #{resnet_generator_forward.37} parent=81 // pred_check
          %p893 = pneg %p133
        $region84: #{resnet_generator_forward.37} parent=81 // pred_check_branch
          %895 = sbr.rel (%p893) target = $region86
        $region85: #{resnet_generator_forward.37} parent=81 // pred_region
          %s896 = smul.u32 2, %s16
          %p897 = scmp.lt.s32.totalorder %s896, 3
          %s898 = scalar_select %p897, %s896, 3
          %s899 = smul.addr %s898, 4
          %s900 = scalar_lea.vmem %s4, %s899
        $region86: #{resnet_generator_forward.37} parent=81 // pred_fallthru
          _
      $region82: #{resnet_generator_forward.37} parent=5 // pred_fallthru
        _
    $region6: #{resnet_generator_forward.37} parent=1 // loop_footer
      %s14 = sadd.s32 1, %s10
    $region7: #{resnet_generator_forward.37} parent=1 // loop_footer_branch
      %9 = sbr.rel target = $region3
    $region8: #{resnet_generator_forward.37} parent=1 // loop_exit
      _

</llo_original>
